<compile_context>
chip_gen: v5e
topology: v5e:2x2
jax: 0.10.0
libtpu: 0.0.40
codegen_flags: <defaults>
</compile_context>

<pallas_src>
import numpy as np
import jax
import jax.numpy as jnp
from jax import lax
from jax.experimental import pallas as pl
from jax.experimental.pallas import tpu as pltpu

# ----------------------------- config ---------------------------------------
B = 2          # batch
S = 8          # sequence length
D = 32         # d_model
H = 4          # num heads
DK = 8         # d_kv per head
HD = H * DK    # = D
DFF = 64       # d_ff
V = 64         # vocab size
NUM_BUCKETS = 32
MAX_DISTANCE = 128
EPS = 1e-6
NEG = -1e9

_VMEM = pl.BlockSpec(memory_space=pltpu.MemorySpace.VMEM)

# transposed-RHS contraction (a @ b.T) — native on the MXU, no .T materialized
TRANS_B = (((1,), (1,)), ((), ()))


# ------------------------- fused forward kernel ------------------------------
def t5_fused_kernel(
    enc_ids_ref, dec_ids_ref, embed_ref,
    enc_bias_ref, dec_bias_ref,
    enc_sa_ln_ref, enc_sa_qkv_ref, enc_sa_o_ref,
    enc_ff_ln_ref, enc_ff_wi_ref, enc_ff_wo_ref,
    enc_final_ln_ref,
    dec_sa_ln_ref, dec_sa_qkv_ref, dec_sa_o_ref,
    dec_ca_ln_ref, dec_ca_q_ref, dec_ca_kv_ref, dec_ca_o_ref,
    dec_ff_ln_ref, dec_ff_wi_ref, dec_ff_wo_ref,
    dec_final_ln_ref,
    out_ref,
):
    f32 = jnp.float32
    embed = embed_ref[...]                                     # (V, D)

    def embed_lookup(ids_ref):
        # gather as a one-hot matmul: exact, MXU-friendly, fully in-kernel.
        ids = ids_ref[...]                                     # (B*S, 1) int32
        iota = lax.broadcasted_iota(jnp.int32, (B * S, V), 1)
        onehot = (iota == ids).astype(f32)                     # (B*S, V)
        return jnp.dot(onehot, embed, preferred_element_type=f32)

    def rmsnorm(x, w_ref):
        var = jnp.mean(x * x, axis=-1, keepdims=True)
        return x * lax.rsqrt(var + EPS) * w_ref[...]           # w: (1, D)

    def matmul(a, w_ref, relu=False):
        y = jnp.dot(a, w_ref[...], preferred_element_type=f32)
        return jnp.maximum(y, 0.0) if relu else y

    def mha(q_all, k_all, v_all, bias_ref):
        # q/k/v_all: (B*S, H*DK); bias_ref: (H, S, S) or None.
        # T5 does NOT scale scores by 1/sqrt(d_kv).
        rows = []
        for bi in range(B):
            heads = []
            for hi in range(H):
                qs = q_all[bi * S:(bi + 1) * S, hi * DK:(hi + 1) * DK]
                ks = k_all[bi * S:(bi + 1) * S, hi * DK:(hi + 1) * DK]
                vs = v_all[bi * S:(bi + 1) * S, hi * DK:(hi + 1) * DK]
                s = lax.dot_general(qs, ks, TRANS_B,
                                    preferred_element_type=f32)   # (S, S)
                if bias_ref is not None:
                    s = s + bias_ref[hi]
                s = s - jnp.max(s, axis=-1, keepdims=True)
                p = jnp.exp(s)
                p = p * pl.reciprocal(jnp.sum(p, axis=-1, keepdims=True),
                                      approx=True)
                heads.append(jnp.dot(p, vs, preferred_element_type=f32))
            rows.append(jnp.concatenate(heads, axis=1))            # (S, H*DK)
        return jnp.concatenate(rows, axis=0)                       # (B*S, H*DK)

    # ----------------------------- encoder -----------------------------------
    h = embed_lookup(enc_ids_ref)                                  # (B*S, D)
    n = rmsnorm(h, enc_sa_ln_ref)
    qkv = matmul(n, enc_sa_qkv_ref)                                # (B*S, 3*HD)
    att = mha(qkv[:, :HD], qkv[:, HD:2 * HD], qkv[:, 2 * HD:], enc_bias_ref)
    h = h + matmul(att, enc_sa_o_ref)
    n = rmsnorm(h, enc_ff_ln_ref)
    h = h + matmul(matmul(n, enc_ff_wi_ref, relu=True), enc_ff_wo_ref)
    enc_out = rmsnorm(h, enc_final_ln_ref)

    # ----------------------------- decoder -----------------------------------
    h = embed_lookup(dec_ids_ref)
    n = rmsnorm(h, dec_sa_ln_ref)
    qkv = matmul(n, dec_sa_qkv_ref)
    att = mha(qkv[:, :HD], qkv[:, HD:2 * HD], qkv[:, 2 * HD:], dec_bias_ref)
    h = h + matmul(att, dec_sa_o_ref)

    n = rmsnorm(h, dec_ca_ln_ref)
    q = matmul(n, dec_ca_q_ref)                                    # (B*S, HD)
    kv = matmul(enc_out, dec_ca_kv_ref)                            # (B*S, 2*HD)
    att = mha(q, kv[:, :HD], kv[:, HD:], None)                     # no rel bias
    h = h + matmul(att, dec_ca_o_ref)

    n = rmsnorm(h, dec_ff_ln_ref)
    h = h + matmul(matmul(n, dec_ff_wi_ref, relu=True), dec_ff_wo_ref)
    h = rmsnorm(h, dec_final_ln_ref)

    # tied LM head: (h * d_model^-0.5) @ embed^T, transpose handled by the MXU
    logits = lax.dot_general(h * (D ** -0.5), embed, TRANS_B,
                             preferred_element_type=f32)
    out_ref[...] = logits


# ------------------------- T5 relative position bias -------------------------
def _relative_position_bucket(rel_pos, bidirectional):
    num_buckets = NUM_BUCKETS
    buckets = np.zeros_like(rel_pos)
    if bidirectional:
        num_buckets //= 2
        buckets += (rel_pos > 0).astype(np.int32) * num_buckets
        rel_pos = np.abs(rel_pos)
    else:
        rel_pos = -np.minimum(rel_pos, 0)
    max_exact = num_buckets // 2
    is_small = rel_pos < max_exact
    safe = np.maximum(rel_pos, 1).astype(np.float32)
    val_if_large = max_exact + (
        np.log(safe / max_exact)
        / np.log(MAX_DISTANCE / max_exact)
        * (num_buckets - max_exact)
    ).astype(np.int32)
    val_if_large = np.minimum(val_if_large, num_buckets - 1)
    return buckets + np.where(is_small, rel_pos, val_if_large)


def relative_bias(table, seq_len, bidirectional):
    """table: (NUM_BUCKETS, H) -> bias (H, S, S). Tiny XLA gather, hoisted."""
    ctx = np.arange(seq_len)[:, None]
    mem = np.arange(seq_len)[None, :]
    buckets = _relative_position_bucket(mem - ctx, bidirectional)  # (S, S)
    bias = jnp.take(table, jnp.asarray(buckets), axis=0)           # (S, S, H)
    return jnp.transpose(bias, (2, 0, 1))                          # (H, S, S)


# ------------------------------ parameters ------------------------------------
def init_params(key):
    p = {}
    dense = {
        "embed": (V, D),
        # fused QKV / fused KV projection weights
        "enc_sa_qkv": (D, 3 * HD), "enc_sa_o": (HD, D),
        "enc_ff_wi": (D, DFF), "enc_ff_wo": (DFF, D),
        "dec_sa_qkv": (D, 3 * HD), "dec_sa_o": (HD, D),
        "dec_ca_q": (D, HD), "dec_ca_kv": (D, 2 * HD), "dec_ca_o": (HD, D),
        "dec_ff_wi": (D, DFF), "dec_ff_wo": (DFF, D),
        "enc_rel_bias": (NUM_BUCKETS, H), "dec_rel_bias": (NUM_BUCKETS, H),
    }
    keys = jax.random.split(key, len(dense))
    for k_, (name, shape) in zip(keys, sorted(dense.items())):
        p[name] = (0.02 * jax.random.normal(k_, shape)).astype(jnp.float32)
    for name in ["enc_sa_ln", "enc_ff_ln", "enc_final_ln",
                 "dec_sa_ln", "dec_ca_ln", "dec_ff_ln", "dec_final_ln"]:
        p[name] = jnp.ones((1, D), jnp.float32)
    return p


# ------------------------------ full forward -----------------------------------
def qa_classifier_forward(params, x):
    """x: (B, S) int32 token ids -> lm logits (B, S, V)."""
    p = params
    enc_ids = x.reshape(B * S, 1).astype(jnp.int32)
    dec = jnp.concatenate([jnp.zeros((B, 1), jnp.int32), x[:, :-1]], axis=1)
    dec_ids = dec.reshape(B * S, 1)

    # relative position biases, computed once per call (tiny)
    enc_bias = relative_bias(p["enc_rel_bias"], S, bidirectional=True)
    causal = np.where(np.tril(np.ones((S, S), np.float32)) > 0, 0.0, NEG)
    dec_bias = relative_bias(p["dec_rel_bias"], S, bidirectional=False) + causal

    args = [
        enc_ids, dec_ids, p["embed"],
        enc_bias, dec_bias,
        p["enc_sa_ln"], p["enc_sa_qkv"], p["enc_sa_o"],
        p["enc_ff_ln"], p["enc_ff_wi"], p["enc_ff_wo"],
        p["enc_final_ln"],
        p["dec_sa_ln"], p["dec_sa_qkv"], p["dec_sa_o"],
        p["dec_ca_ln"], p["dec_ca_q"], p["dec_ca_kv"], p["dec_ca_o"],
        p["dec_ff_ln"], p["dec_ff_wi"], p["dec_ff_wo"],
        p["dec_final_ln"],
    ]

    logits = pl.pallas_call(
        t5_fused_kernel,
        out_shape=jax.ShapeDtypeStruct((B * S, V), jnp.float32),
        in_specs=[_VMEM] * len(args),
        out_specs=_VMEM,
    )(*args)
    return logits.reshape(B, S, V)


# ------------------------- pure-JAX reference (correctness) --------------------
def reference_forward(params, x):
    p = params

    def rms(v, w):
        var = jnp.mean(v * v, axis=-1, keepdims=True)
        return v * lax.rsqrt(var + EPS) * w

    def mha(q, k, v, bias):
        qh = q.reshape(B, S, H, DK).transpose(0, 2, 1, 3)
        kh = k.reshape(B, S, H, DK).transpose(0, 2, 1, 3)
        vh = v.reshape(B, S, H, DK).transpose(0, 2, 1, 3)
        s = jnp.einsum("bhqd,bhkd->bhqk", qh, kh)
        if bias is not None:
            s = s + bias[None]
        pr = jax.nn.softmax(s, axis=-1)
        ctx = jnp.einsum("bhqk,bhkd->bhqd", pr, vh)
        return ctx.transpose(0, 2, 1, 3).reshape(B * S, H * DK)

    emb = p["embed"]
    h = emb[x.reshape(-1)]
    enc_bias = relative_bias(p["enc_rel_bias"], S, True)
    n = rms(h, p["enc_sa_ln"])
    qkv = n @ p["enc_sa_qkv"]
    att = mha(qkv[:, :HD], qkv[:, HD:2 * HD], qkv[:, 2 * HD:], enc_bias)
    h = h + att @ p["enc_sa_o"]
    n = rms(h, p["enc_ff_ln"])
    h = h + jnp.maximum(n @ p["enc_ff_wi"], 0.0) @ p["enc_ff_wo"]
    enc_out = rms(h, p["enc_final_ln"])

    dec = jnp.concatenate([jnp.zeros((B, 1), jnp.int32), x[:, :-1]], 1)
    h = emb[dec.reshape(-1)]
    causal = np.where(np.tril(np.ones((S, S), np.float32)) > 0, 0.0, NEG)
    dec_bias = relative_bias(p["dec_rel_bias"], S, False) + causal
    n = rms(h, p["dec_sa_ln"])
    qkv = n @ p["dec_sa_qkv"]
    att = mha(qkv[:, :HD], qkv[:, HD:2 * HD], qkv[:, 2 * HD:], dec_bias)
    h = h + att @ p["dec_sa_o"]
    n = rms(h, p["dec_ca_ln"])
    q = n @ p["dec_ca_q"]
    kv = enc_out @ p["dec_ca_kv"]
    att = mha(q, kv[:, :HD], kv[:, HD:], None)
    h = h + att @ p["dec_ca_o"]
    n = rms(h, p["dec_ff_ln"])
    h = h + jnp.maximum(n @ p["dec_ff_wi"], 0.0) @ p["dec_ff_wo"]
    h = rms(h, p["dec_final_ln"])
    logits = (h * (D ** -0.5)) @ emb.T
    return logits.reshape(B, S, V)


# ---------------------------------- main ---------------------------------------
if __name__ == "__main__":
    key = jax.random.PRNGKey(0)
    k_param, k_x = jax.random.split(key)
    params = init_params(k_param)
    x = jax.random.randint(k_x, (B, S), minval=0, maxval=V, dtype=jnp.int32)

    logits = jax.jit(qa_classifier_forward)(params, x)
    jax.block_until_ready(logits)
    assert logits.shape == (B, S, V)
    assert bool(jnp.all(jnp.isfinite(logits)))

    # correctness vs pure-JAX reference (scale-relative max error)
    ref = reference_forward(params, x)
    rel_err = float(jnp.max(jnp.abs(logits - ref))
                    / jnp.maximum(jnp.max(jnp.abs(ref)), 1e-6))
    assert rel_err < 0.05, f"mismatch vs reference: rel_err={rel_err}"

    print("KERNEL_OK")
</pallas_src>

<mosaic_0001>
module attributes {stable_mosaic.version = 11 : i64} {
  func.func @t5_fused_kernel(%arg0: memref<16x1xi32, #tpu.memory_space<vmem>>, %arg1: memref<16x1xi32, #tpu.memory_space<vmem>>, %arg2: memref<64x32xf32, #tpu.memory_space<vmem>>, %arg3: memref<4x8x8xf32, #tpu.memory_space<vmem>>, %arg4: memref<4x8x8xf32, #tpu.memory_space<vmem>>, %arg5: memref<1x32xf32, #tpu.memory_space<vmem>>, %arg6: memref<32x96xf32, #tpu.memory_space<vmem>>, %arg7: memref<32x32xf32, #tpu.memory_space<vmem>>, %arg8: memref<1x32xf32, #tpu.memory_space<vmem>>, %arg9: memref<32x64xf32, #tpu.memory_space<vmem>>, %arg10: memref<64x32xf32, #tpu.memory_space<vmem>>, %arg11: memref<1x32xf32, #tpu.memory_space<vmem>>, %arg12: memref<1x32xf32, #tpu.memory_space<vmem>>, %arg13: memref<32x96xf32, #tpu.memory_space<vmem>>, %arg14: memref<32x32xf32, #tpu.memory_space<vmem>>, %arg15: memref<1x32xf32, #tpu.memory_space<vmem>>, %arg16: memref<32x32xf32, #tpu.memory_space<vmem>>, %arg17: memref<32x64xf32, #tpu.memory_space<vmem>>, %arg18: memref<32x32xf32, #tpu.memory_space<vmem>>, %arg19: memref<1x32xf32, #tpu.memory_space<vmem>>, %arg20: memref<32x64xf32, #tpu.memory_space<vmem>>, %arg21: memref<64x32xf32, #tpu.memory_space<vmem>>, %arg22: memref<1x32xf32, #tpu.memory_space<vmem>>, %arg23: memref<16x64xf32, #tpu.memory_space<vmem>>) attributes {dimension_semantics = [], scalar_prefetch = 0 : i64, scratch_operands = 0 : i64, tpu.core_type = #tpu.core_type<tc>} {
    %c0 = arith.constant 0 : index
    %c0_0 = arith.constant 0 : index
    %0 = vector.load %arg2[%c0, %c0_0] : memref<64x32xf32, #tpu.memory_space<vmem>>, vector<64x32xf32>
    %c0_1 = arith.constant 0 : index
    %c0_2 = arith.constant 0 : index
    %1 = vector.load %arg0[%c0_1, %c0_2] : memref<16x1xi32, #tpu.memory_space<vmem>>, vector<16x1xi32>
    %2 = tpu.iota {dimensions = array<i32: 1>} : vector<16x64xi32>
    %3 = vector.broadcast %1 : vector<16x1xi32> to vector<16x64xi32>
    %4 = arith.cmpi eq, %2, %3 : vector<16x64xi32>
    %5 = arith.extui %4 : vector<16x64xi1> to vector<16x64xi32>
    %6 = arith.sitofp %5 : vector<16x64xi32> to vector<16x64xf32>
    %cst = arith.constant dense<0.000000e+00> : vector<16x32xf32>
    %7 = tpu.matmul %6, %0, %cst {dimension_numbers = #tpu.dot_dimension_numbers<[1], [0], [0], [1], [0, 0, 1, 1], [], []>} : vector<16x64xf32>, vector<64x32xf32>, vector<16x32xf32> -> vector<16x32xf32>
    %8 = arith.mulf %7, %7 : vector<16x32xf32>
    %cst_3 = arith.constant dense<0.000000e+00> : vector<16xf32>
    %9 = vector.multi_reduction <add>, %8, %cst_3 [1] : vector<16x32xf32> to vector<16xf32>
    %10 = vector.shape_cast %9 : vector<16xf32> to vector<16x1xf32>
    %cst_4 = arith.constant 3.200000e+01 : f32
    %11 = vector.broadcast %cst_4 : f32 to vector<16x1xf32>
    %12 = arith.divf %10, %11 : vector<16x1xf32>
    %cst_5 = arith.constant 9.99999997E-7 : f32
    %13 = vector.broadcast %cst_5 : f32 to vector<16x1xf32>
    %14 = arith.addf %12, %13 : vector<16x1xf32>
    %15 = math.rsqrt %14 : vector<16x1xf32>
    %16 = vector.broadcast %15 : vector<16x1xf32> to vector<16x32xf32>
    %17 = arith.mulf %7, %16 : vector<16x32xf32>
    %c0_6 = arith.constant 0 : index
    %c0_7 = arith.constant 0 : index
    %18 = vector.load %arg5[%c0_6, %c0_7] : memref<1x32xf32, #tpu.memory_space<vmem>>, vector<1x32xf32>
    %19 = vector.broadcast %18 : vector<1x32xf32> to vector<16x32xf32>
    %20 = arith.mulf %17, %19 : vector<16x32xf32>
    %c0_8 = arith.constant 0 : index
    %c0_9 = arith.constant 0 : index
    %21 = vector.load %arg6[%c0_8, %c0_9] : memref<32x96xf32, #tpu.memory_space<vmem>>, vector<32x96xf32>
    %cst_10 = arith.constant dense<0.000000e+00> : vector<16x96xf32>
    %22 = tpu.matmul %20, %21, %cst_10 {dimension_numbers = #tpu.dot_dimension_numbers<[1], [0], [0], [1], [0, 0, 1, 1], [], []>} : vector<16x32xf32>, vector<32x96xf32>, vector<16x96xf32> -> vector<16x96xf32>
    %23 = vector.extract_strided_slice %22 {offsets = [0, 0], sizes = [16, 32], strides = [1, 1]} : vector<16x96xf32> to vector<16x32xf32>
    %24 = vector.extract_strided_slice %22 {offsets = [0, 32], sizes = [16, 32], strides = [1, 1]} : vector<16x96xf32> to vector<16x32xf32>
    %25 = vector.extract_strided_slice %22 {offsets = [0, 64], sizes = [16, 32], strides = [1, 1]} : vector<16x96xf32> to vector<16x32xf32>
    %26 = vector.extract_strided_slice %23 {offsets = [0, 0], sizes = [8, 8], strides = [1, 1]} : vector<16x32xf32> to vector<8x8xf32>
    %27 = vector.extract_strided_slice %24 {offsets = [0, 0], sizes = [8, 8], strides = [1, 1]} : vector<16x32xf32> to vector<8x8xf32>
    %28 = vector.extract_strided_slice %25 {offsets = [0, 0], sizes = [8, 8], strides = [1, 1]} : vector<16x32xf32> to vector<8x8xf32>
    %cst_11 = arith.constant dense<0.000000e+00> : vector<8x8xf32>
    %29 = tpu.matmul %26, %27, %cst_11 {dimension_numbers = #tpu.dot_dimension_numbers<[1], [1], [0], [0], [0, 0, 1, 0], [], []>} : vector<8x8xf32>, vector<8x8xf32>, vector<8x8xf32> -> vector<8x8xf32>
    %c0_12 = arith.constant 0 : index
    %c0_13 = arith.constant 0 : index
    %c0_14 = arith.constant 0 : index
    %30 = vector.load %arg3[%c0_12, %c0_13, %c0_14] : memref<4x8x8xf32, #tpu.memory_space<vmem>>, vector<1x8x8xf32>
    %31 = vector.shape_cast %30 : vector<1x8x8xf32> to vector<8x8xf32>
    %32 = arith.addf %29, %31 : vector<8x8xf32>
    %cst_15 = arith.constant dense<0xFF800000> : vector<8xf32>
    %33 = vector.multi_reduction <maximumf>, %32, %cst_15 [1] : vector<8x8xf32> to vector<8xf32>
    %34 = vector.shape_cast %33 : vector<8xf32> to vector<8x1xf32>
    %35 = vector.broadcast %34 : vector<8x1xf32> to vector<8x8xf32>
    %36 = arith.subf %32, %35 : vector<8x8xf32>
    %37 = math.exp %36 : vector<8x8xf32>
    %cst_16 = arith.constant dense<0.000000e+00> : vector<8xf32>
    %38 = vector.multi_reduction <add>, %37, %cst_16 [1] : vector<8x8xf32> to vector<8xf32>
    %39 = vector.shape_cast %38 : vector<8xf32> to vector<8x1xf32>
    %40 = tpu.reciprocal %39 {approx = true} : vector<8x1xf32> -> vector<8x1xf32>
    %41 = vector.broadcast %40 : vector<8x1xf32> to vector<8x8xf32>
    %42 = arith.mulf %37, %41 : vector<8x8xf32>
    %cst_17 = arith.constant dense<0.000000e+00> : vector<8x8xf32>
    %43 = tpu.matmul %42, %28, %cst_17 {dimension_numbers = #tpu.dot_dimension_numbers<[1], [0], [0], [1], [0, 0, 1, 1], [], []>} : vector<8x8xf32>, vector<8x8xf32>, vector<8x8xf32> -> vector<8x8xf32>
    %44 = vector.extract_strided_slice %23 {offsets = [0, 8], sizes = [8, 8], strides = [1, 1]} : vector<16x32xf32> to vector<8x8xf32>
    %45 = vector.extract_strided_slice %24 {offsets = [0, 8], sizes = [8, 8], strides = [1, 1]} : vector<16x32xf32> to vector<8x8xf32>
    %46 = vector.extract_strided_slice %25 {offsets = [0, 8], sizes = [8, 8], strides = [1, 1]} : vector<16x32xf32> to vector<8x8xf32>
    %cst_18 = arith.constant dense<0.000000e+00> : vector<8x8xf32>
    %47 = tpu.matmul %44, %45, %cst_18 {dimension_numbers = #tpu.dot_dimension_numbers<[1], [1], [0], [0], [0, 0, 1, 0], [], []>} : vector<8x8xf32>, vector<8x8xf32>, vector<8x8xf32> -> vector<8x8xf32>
    %c1 = arith.constant 1 : index
    %c0_19 = arith.constant 0 : index
    %c0_20 = arith.constant 0 : index
    %48 = vector.load %arg3[%c1, %c0_19, %c0_20] : memref<4x8x8xf32, #tpu.memory_space<vmem>>, vector<1x8x8xf32>
    %49 = vector.shape_cast %48 : vector<1x8x8xf32> to vector<8x8xf32>
    %50 = arith.addf %47, %49 : vector<8x8xf32>
    %cst_21 = arith.constant dense<0xFF800000> : vector<8xf32>
    %51 = vector.multi_reduction <maximumf>, %50, %cst_21 [1] : vector<8x8xf32> to vector<8xf32>
    %52 = vector.shape_cast %51 : vector<8xf32> to vector<8x1xf32>
    %53 = vector.broadcast %52 : vector<8x1xf32> to vector<8x8xf32>
    %54 = arith.subf %50, %53 : vector<8x8xf32>
    %55 = math.exp %54 : vector<8x8xf32>
    %cst_22 = arith.constant dense<0.000000e+00> : vector<8xf32>
    %56 = vector.multi_reduction <add>, %55, %cst_22 [1] : vector<8x8xf32> to vector<8xf32>
    %57 = vector.shape_cast %56 : vector<8xf32> to vector<8x1xf32>
    %58 = tpu.reciprocal %57 {approx = true} : vector<8x1xf32> -> vector<8x1xf32>
    %59 = vector.broadcast %58 : vector<8x1xf32> to vector<8x8xf32>
    %60 = arith.mulf %55, %59 : vector<8x8xf32>
    %cst_23 = arith.constant dense<0.000000e+00> : vector<8x8xf32>
    %61 = tpu.matmul %60, %46, %cst_23 {dimension_numbers = #tpu.dot_dimension_numbers<[1], [0], [0], [1], [0, 0, 1, 1], [], []>} : vector<8x8xf32>, vector<8x8xf32>, vector<8x8xf32> -> vector<8x8xf32>
    %62 = vector.extract_strided_slice %23 {offsets = [0, 16], sizes = [8, 8], strides = [1, 1]} : vector<16x32xf32> to vector<8x8xf32>
    %63 = vector.extract_strided_slice %24 {offsets = [0, 16], sizes = [8, 8], strides = [1, 1]} : vector<16x32xf32> to vector<8x8xf32>
    %64 = vector.extract_strided_slice %25 {offsets = [0, 16], sizes = [8, 8], strides = [1, 1]} : vector<16x32xf32> to vector<8x8xf32>
    %cst_24 = arith.constant dense<0.000000e+00> : vector<8x8xf32>
    %65 = tpu.matmul %62, %63, %cst_24 {dimension_numbers = #tpu.dot_dimension_numbers<[1], [1], [0], [0], [0, 0, 1, 0], [], []>} : vector<8x8xf32>, vector<8x8xf32>, vector<8x8xf32> -> vector<8x8xf32>
    %c2 = arith.constant 2 : index
    %c0_25 = arith.constant 0 : index
    %c0_26 = arith.constant 0 : index
    %66 = vector.load %arg3[%c2, %c0_25, %c0_26] : memref<4x8x8xf32, #tpu.memory_space<vmem>>, vector<1x8x8xf32>
    %67 = vector.shape_cast %66 : vector<1x8x8xf32> to vector<8x8xf32>
    %68 = arith.addf %65, %67 : vector<8x8xf32>
    %cst_27 = arith.constant dense<0xFF800000> : vector<8xf32>
    %69 = vector.multi_reduction <maximumf>, %68, %cst_27 [1] : vector<8x8xf32> to vector<8xf32>
    %70 = vector.shape_cast %69 : vector<8xf32> to vector<8x1xf32>
    %71 = vector.broadcast %70 : vector<8x1xf32> to vector<8x8xf32>
    %72 = arith.subf %68, %71 : vector<8x8xf32>
    %73 = math.exp %72 : vector<8x8xf32>
    %cst_28 = arith.constant dense<0.000000e+00> : vector<8xf32>
    %74 = vector.multi_reduction <add>, %73, %cst_28 [1] : vector<8x8xf32> to vector<8xf32>
    %75 = vector.shape_cast %74 : vector<8xf32> to vector<8x1xf32>
    %76 = tpu.reciprocal %75 {approx = true} : vector<8x1xf32> -> vector<8x1xf32>
    %77 = vector.broadcast %76 : vector<8x1xf32> to vector<8x8xf32>
    %78 = arith.mulf %73, %77 : vector<8x8xf32>
    %cst_29 = arith.constant dense<0.000000e+00> : vector<8x8xf32>
    %79 = tpu.matmul %78, %64, %cst_29 {dimension_numbers = #tpu.dot_dimension_numbers<[1], [0], [0], [1], [0, 0, 1, 1], [], []>} : vector<8x8xf32>, vector<8x8xf32>, vector<8x8xf32> -> vector<8x8xf32>
    %80 = vector.extract_strided_slice %23 {offsets = [0, 24], sizes = [8, 8], strides = [1, 1]} : vector<16x32xf32> to vector<8x8xf32>
    %81 = vector.extract_strided_slice %24 {offsets = [0, 24], sizes = [8, 8], strides = [1, 1]} : vector<16x32xf32> to vector<8x8xf32>
    %82 = vector.extract_strided_slice %25 {offsets = [0, 24], sizes = [8, 8], strides = [1, 1]} : vector<16x32xf32> to vector<8x8xf32>
    %cst_30 = arith.constant dense<0.000000e+00> : vector<8x8xf32>
    %83 = tpu.matmul %80, %81, %cst_30 {dimension_numbers = #tpu.dot_dimension_numbers<[1], [1], [0], [0], [0, 0, 1, 0], [], []>} : vector<8x8xf32>, vector<8x8xf32>, vector<8x8xf32> -> vector<8x8xf32>
    %c3 = arith.constant 3 : index
    %c0_31 = arith.constant 0 : index
    %c0_32 = arith.constant 0 : index
    %84 = vector.load %arg3[%c3, %c0_31, %c0_32] : memref<4x8x8xf32, #tpu.memory_space<vmem>>, vector<1x8x8xf32>
    %85 = vector.shape_cast %84 : vector<1x8x8xf32> to vector<8x8xf32>
    %86 = arith.addf %83, %85 : vector<8x8xf32>
    %cst_33 = arith.constant dense<0xFF800000> : vector<8xf32>
    %87 = vector.multi_reduction <maximumf>, %86, %cst_33 [1] : vector<8x8xf32> to vector<8xf32>
    %88 = vector.shape_cast %87 : vector<8xf32> to vector<8x1xf32>
    %89 = vector.broadcast %88 : vector<8x1xf32> to vector<8x8xf32>
    %90 = arith.subf %86, %89 : vector<8x8xf32>
    %91 = math.exp %90 : vector<8x8xf32>
    %cst_34 = arith.constant dense<0.000000e+00> : vector<8xf32>
    %92 = vector.multi_reduction <add>, %91, %cst_34 [1] : vector<8x8xf32> to vector<8xf32>
    %93 = vector.shape_cast %92 : vector<8xf32> to vector<8x1xf32>
    %94 = tpu.reciprocal %93 {approx = true} : vector<8x1xf32> -> vector<8x1xf32>
    %95 = vector.broadcast %94 : vector<8x1xf32> to vector<8x8xf32>
    %96 = arith.mulf %91, %95 : vector<8x8xf32>
    %cst_35 = arith.constant dense<0.000000e+00> : vector<8x8xf32>
    %97 = tpu.matmul %96, %82, %cst_35 {dimension_numbers = #tpu.dot_dimension_numbers<[1], [0], [0], [1], [0, 0, 1, 1], [], []>} : vector<8x8xf32>, vector<8x8xf32>, vector<8x8xf32> -> vector<8x8xf32>
    %98 = tpu.concatenate %43, %61, %79, %97 in 1 : vector<8x8xf32>, vector<8x8xf32>, vector<8x8xf32>, vector<8x8xf32> -> vector<8x32xf32>
    %99 = vector.extract_strided_slice %23 {offsets = [8, 0], sizes = [8, 8], strides = [1, 1]} : vector<16x32xf32> to vector<8x8xf32>
    %100 = vector.extract_strided_slice %24 {offsets = [8, 0], sizes = [8, 8], strides = [1, 1]} : vector<16x32xf32> to vector<8x8xf32>
    %101 = vector.extract_strided_slice %25 {offsets = [8, 0], sizes = [8, 8], strides = [1, 1]} : vector<16x32xf32> to vector<8x8xf32>
    %cst_36 = arith.constant dense<0.000000e+00> : vector<8x8xf32>
    %102 = tpu.matmul %99, %100, %cst_36 {dimension_numbers = #tpu.dot_dimension_numbers<[1], [1], [0], [0], [0, 0, 1, 0], [], []>} : vector<8x8xf32>, vector<8x8xf32>, vector<8x8xf32> -> vector<8x8xf32>
    %c0_37 = arith.constant 0 : index
    %c0_38 = arith.constant 0 : index
    %c0_39 = arith.constant 0 : index
    %103 = vector.load %arg3[%c0_37, %c0_38, %c0_39] : memref<4x8x8xf32, #tpu.memory_space<vmem>>, vector<1x8x8xf32>
    %104 = vector.shape_cast %103 : vector<1x8x8xf32> to vector<8x8xf32>
    %105 = arith.addf %102, %104 : vector<8x8xf32>
    %cst_40 = arith.constant dense<0xFF800000> : vector<8xf32>
    %106 = vector.multi_reduction <maximumf>, %105, %cst_40 [1] : vector<8x8xf32> to vector<8xf32>
    %107 = vector.shape_cast %106 : vector<8xf32> to vector<8x1xf32>
    %108 = vector.broadcast %107 : vector<8x1xf32> to vector<8x8xf32>
    %109 = arith.subf %105, %108 : vector<8x8xf32>
    %110 = math.exp %109 : vector<8x8xf32>
    %cst_41 = arith.constant dense<0.000000e+00> : vector<8xf32>
    %111 = vector.multi_reduction <add>, %110, %cst_41 [1] : vector<8x8xf32> to vector<8xf32>
    %112 = vector.shape_cast %111 : vector<8xf32> to vector<8x1xf32>
    %113 = tpu.reciprocal %112 {approx = true} : vector<8x1xf32> -> vector<8x1xf32>
    %114 = vector.broadcast %113 : vector<8x1xf32> to vector<8x8xf32>
    %115 = arith.mulf %110, %114 : vector<8x8xf32>
    %cst_42 = arith.constant dense<0.000000e+00> : vector<8x8xf32>
    %116 = tpu.matmul %115, %101, %cst_42 {dimension_numbers = #tpu.dot_dimension_numbers<[1], [0], [0], [1], [0, 0, 1, 1], [], []>} : vector<8x8xf32>, vector<8x8xf32>, vector<8x8xf32> -> vector<8x8xf32>
    %117 = vector.extract_strided_slice %23 {offsets = [8, 8], sizes = [8, 8], strides = [1, 1]} : vector<16x32xf32> to vector<8x8xf32>
    %118 = vector.extract_strided_slice %24 {offsets = [8, 8], sizes = [8, 8], strides = [1, 1]} : vector<16x32xf32> to vector<8x8xf32>
    %119 = vector.extract_strided_slice %25 {offsets = [8, 8], sizes = [8, 8], strides = [1, 1]} : vector<16x32xf32> to vector<8x8xf32>
    %cst_43 = arith.constant dense<0.000000e+00> : vector<8x8xf32>
    %120 = tpu.matmul %117, %118, %cst_43 {dimension_numbers = #tpu.dot_dimension_numbers<[1], [1], [0], [0], [0, 0, 1, 0], [], []>} : vector<8x8xf32>, vector<8x8xf32>, vector<8x8xf32> -> vector<8x8xf32>
    %c1_44 = arith.constant 1 : index
    %c0_45 = arith.constant 0 : index
    %c0_46 = arith.constant 0 : index
    %121 = vector.load %arg3[%c1_44, %c0_45, %c0_46] : memref<4x8x8xf32, #tpu.memory_space<vmem>>, vector<1x8x8xf32>
    %122 = vector.shape_cast %121 : vector<1x8x8xf32> to vector<8x8xf32>
    %123 = arith.addf %120, %122 : vector<8x8xf32>
    %cst_47 = arith.constant dense<0xFF800000> : vector<8xf32>
    %124 = vector.multi_reduction <maximumf>, %123, %cst_47 [1] : vector<8x8xf32> to vector<8xf32>
    %125 = vector.shape_cast %124 : vector<8xf32> to vector<8x1xf32>
    %126 = vector.broadcast %125 : vector<8x1xf32> to vector<8x8xf32>
    %127 = arith.subf %123, %126 : vector<8x8xf32>
    %128 = math.exp %127 : vector<8x8xf32>
    %cst_48 = arith.constant dense<0.000000e+00> : vector<8xf32>
    %129 = vector.multi_reduction <add>, %128, %cst_48 [1] : vector<8x8xf32> to vector<8xf32>
    %130 = vector.shape_cast %129 : vector<8xf32> to vector<8x1xf32>
    %131 = tpu.reciprocal %130 {approx = true} : vector<8x1xf32> -> vector<8x1xf32>
    %132 = vector.broadcast %131 : vector<8x1xf32> to vector<8x8xf32>
    %133 = arith.mulf %128, %132 : vector<8x8xf32>
    %cst_49 = arith.constant dense<0.000000e+00> : vector<8x8xf32>
    %134 = tpu.matmul %133, %119, %cst_49 {dimension_numbers = #tpu.dot_dimension_numbers<[1], [0], [0], [1], [0, 0, 1, 1], [], []>} : vector<8x8xf32>, vector<8x8xf32>, vector<8x8xf32> -> vector<8x8xf32>
    %135 = vector.extract_strided_slice %23 {offsets = [8, 16], sizes = [8, 8], strides = [1, 1]} : vector<16x32xf32> to vector<8x8xf32>
    %136 = vector.extract_strided_slice %24 {offsets = [8, 16], sizes = [8, 8], strides = [1, 1]} : vector<16x32xf32> to vector<8x8xf32>
    %137 = vector.extract_strided_slice %25 {offsets = [8, 16], sizes = [8, 8], strides = [1, 1]} : vector<16x32xf32> to vector<8x8xf32>
    %cst_50 = arith.constant dense<0.000000e+00> : vector<8x8xf32>
    %138 = tpu.matmul %135, %136, %cst_50 {dimension_numbers = #tpu.dot_dimension_numbers<[1], [1], [0], [0], [0, 0, 1, 0], [], []>} : vector<8x8xf32>, vector<8x8xf32>, vector<8x8xf32> -> vector<8x8xf32>
    %c2_51 = arith.constant 2 : index
    %c0_52 = arith.constant 0 : index
    %c0_53 = arith.constant 0 : index
    %139 = vector.load %arg3[%c2_51, %c0_52, %c0_53] : memref<4x8x8xf32, #tpu.memory_space<vmem>>, vector<1x8x8xf32>
    %140 = vector.shape_cast %139 : vector<1x8x8xf32> to vector<8x8xf32>
    %141 = arith.addf %138, %140 : vector<8x8xf32>
    %cst_54 = arith.constant dense<0xFF800000> : vector<8xf32>
    %142 = vector.multi_reduction <maximumf>, %141, %cst_54 [1] : vector<8x8xf32> to vector<8xf32>
    %143 = vector.shape_cast %142 : vector<8xf32> to vector<8x1xf32>
    %144 = vector.broadcast %143 : vector<8x1xf32> to vector<8x8xf32>
    %145 = arith.subf %141, %144 : vector<8x8xf32>
    %146 = math.exp %145 : vector<8x8xf32>
    %cst_55 = arith.constant dense<0.000000e+00> : vector<8xf32>
    %147 = vector.multi_reduction <add>, %146, %cst_55 [1] : vector<8x8xf32> to vector<8xf32>
    %148 = vector.shape_cast %147 : vector<8xf32> to vector<8x1xf32>
    %149 = tpu.reciprocal %148 {approx = true} : vector<8x1xf32> -> vector<8x1xf32>
    %150 = vector.broadcast %149 : vector<8x1xf32> to vector<8x8xf32>
    %151 = arith.mulf %146, %150 : vector<8x8xf32>
    %cst_56 = arith.constant dense<0.000000e+00> : vector<8x8xf32>
    %152 = tpu.matmul %151, %137, %cst_56 {dimension_numbers = #tpu.dot_dimension_numbers<[1], [0], [0], [1], [0, 0, 1, 1], [], []>} : vector<8x8xf32>, vector<8x8xf32>, vector<8x8xf32> -> vector<8x8xf32>
    %153 = vector.extract_strided_slice %23 {offsets = [8, 24], sizes = [8, 8], strides = [1, 1]} : vector<16x32xf32> to vector<8x8xf32>
    %154 = vector.extract_strided_slice %24 {offsets = [8, 24], sizes = [8, 8], strides = [1, 1]} : vector<16x32xf32> to vector<8x8xf32>
    %155 = vector.extract_strided_slice %25 {offsets = [8, 24], sizes = [8, 8], strides = [1, 1]} : vector<16x32xf32> to vector<8x8xf32>
    %cst_57 = arith.constant dense<0.000000e+00> : vector<8x8xf32>
    %156 = tpu.matmul %153, %154, %cst_57 {dimension_numbers = #tpu.dot_dimension_numbers<[1], [1], [0], [0], [0, 0, 1, 0], [], []>} : vector<8x8xf32>, vector<8x8xf32>, vector<8x8xf32> -> vector<8x8xf32>
    %c3_58 = arith.constant 3 : index
    %c0_59 = arith.constant 0 : index
    %c0_60 = arith.constant 0 : index
    %157 = vector.load %arg3[%c3_58, %c0_59, %c0_60] : memref<4x8x8xf32, #tpu.memory_space<vmem>>, vector<1x8x8xf32>
    %158 = vector.shape_cast %157 : vector<1x8x8xf32> to vector<8x8xf32>
    %159 = arith.addf %156, %158 : vector<8x8xf32>
    %cst_61 = arith.constant dense<0xFF800000> : vector<8xf32>
    %160 = vector.multi_reduction <maximumf>, %159, %cst_61 [1] : vector<8x8xf32> to vector<8xf32>
    %161 = vector.shape_cast %160 : vector<8xf32> to vector<8x1xf32>
    %162 = vector.broadcast %161 : vector<8x1xf32> to vector<8x8xf32>
    %163 = arith.subf %159, %162 : vector<8x8xf32>
    %164 = math.exp %163 : vector<8x8xf32>
    %cst_62 = arith.constant dense<0.000000e+00> : vector<8xf32>
    %165 = vector.multi_reduction <add>, %164, %cst_62 [1] : vector<8x8xf32> to vector<8xf32>
    %166 = vector.shape_cast %165 : vector<8xf32> to vector<8x1xf32>
    %167 = tpu.reciprocal %166 {approx = true} : vector<8x1xf32> -> vector<8x1xf32>
    %168 = vector.broadcast %167 : vector<8x1xf32> to vector<8x8xf32>
    %169 = arith.mulf %164, %168 : vector<8x8xf32>
    %cst_63 = arith.constant dense<0.000000e+00> : vector<8x8xf32>
    %170 = tpu.matmul %169, %155, %cst_63 {dimension_numbers = #tpu.dot_dimension_numbers<[1], [0], [0], [1], [0, 0, 1, 1], [], []>} : vector<8x8xf32>, vector<8x8xf32>, vector<8x8xf32> -> vector<8x8xf32>
    %171 = tpu.concatenate %116, %134, %152, %170 in 1 : vector<8x8xf32>, vector<8x8xf32>, vector<8x8xf32>, vector<8x8xf32> -> vector<8x32xf32>
    %172 = tpu.concatenate %98, %171 in 0 : vector<8x32xf32>, vector<8x32xf32> -> vector<16x32xf32>
    %c0_64 = arith.constant 0 : index
    %c0_65 = arith.constant 0 : index
    %173 = vector.load %arg7[%c0_64, %c0_65] : memref<32x32xf32, #tpu.memory_space<vmem>>, vector<32x32xf32>
    %cst_66 = arith.constant dense<0.000000e+00> : vector<16x32xf32>
    %174 = tpu.matmul %172, %173, %cst_66 {dimension_numbers = #tpu.dot_dimension_numbers<[1], [0], [0], [1], [0, 0, 1, 1], [], []>} : vector<16x32xf32>, vector<32x32xf32>, vector<16x32xf32> -> vector<16x32xf32>
    %175 = arith.addf %7, %174 : vector<16x32xf32>
    %176 = arith.mulf %175, %175 : vector<16x32xf32>
    %cst_67 = arith.constant dense<0.000000e+00> : vector<16xf32>
    %177 = vector.multi_reduction <add>, %176, %cst_67 [1] : vector<16x32xf32> to vector<16xf32>
    %178 = vector.shape_cast %177 : vector<16xf32> to vector<16x1xf32>
    %cst_68 = arith.constant 3.200000e+01 : f32
    %179 = vector.broadcast %cst_68 : f32 to vector<16x1xf32>
    %180 = arith.divf %178, %179 : vector<16x1xf32>
    %cst_69 = arith.constant 9.99999997E-7 : f32
    %181 = vector.broadcast %cst_69 : f32 to vector<16x1xf32>
    %182 = arith.addf %180, %181 : vector<16x1xf32>
    %183 = math.rsqrt %182 : vector<16x1xf32>
    %184 = vector.broadcast %183 : vector<16x1xf32> to vector<16x32xf32>
    %185 = arith.mulf %175, %184 : vector<16x32xf32>
    %c0_70 = arith.constant 0 : index
    %c0_71 = arith.constant 0 : index
    %186 = vector.load %arg8[%c0_70, %c0_71] : memref<1x32xf32, #tpu.memory_space<vmem>>, vector<1x32xf32>
    %187 = vector.broadcast %186 : vector<1x32xf32> to vector<16x32xf32>
    %188 = arith.mulf %185, %187 : vector<16x32xf32>
    %c0_72 = arith.constant 0 : index
    %c0_73 = arith.constant 0 : index
    %189 = vector.load %arg9[%c0_72, %c0_73] : memref<32x64xf32, #tpu.memory_space<vmem>>, vector<32x64xf32>
    %cst_74 = arith.constant dense<0.000000e+00> : vector<16x64xf32>
    %190 = tpu.matmul %188, %189, %cst_74 {dimension_numbers = #tpu.dot_dimension_numbers<[1], [0], [0], [1], [0, 0, 1, 1], [], []>} : vector<16x32xf32>, vector<32x64xf32>, vector<16x64xf32> -> vector<16x64xf32>
    %cst_75 = arith.constant 0.000000e+00 : f32
    %191 = vector.broadcast %cst_75 : f32 to vector<16x64xf32>
    %192 = arith.maximumf %190, %191 : vector<16x64xf32>
    %c0_76 = arith.constant 0 : index
    %c0_77 = arith.constant 0 : index
    %193 = vector.load %arg10[%c0_76, %c0_77] : memref<64x32xf32, #tpu.memory_space<vmem>>, vector<64x32xf32>
    %cst_78 = arith.constant dense<0.000000e+00> : vector<16x32xf32>
    %194 = tpu.matmul %192, %193, %cst_78 {dimension_numbers = #tpu.dot_dimension_numbers<[1], [0], [0], [1], [0, 0, 1, 1], [], []>} : vector<16x64xf32>, vector<64x32xf32>, vector<16x32xf32> -> vector<16x32xf32>
    %195 = arith.addf %175, %194 : vector<16x32xf32>
    %196 = arith.mulf %195, %195 : vector<16x32xf32>
    %cst_79 = arith.constant dense<0.000000e+00> : vector<16xf32>
    %197 = vector.multi_reduction <add>, %196, %cst_79 [1] : vector<16x32xf32> to vector<16xf32>
    %198 = vector.shape_cast %197 : vector<16xf32> to vector<16x1xf32>
    %cst_80 = arith.constant 3.200000e+01 : f32
    %199 = vector.broadcast %cst_80 : f32 to vector<16x1xf32>
    %200 = arith.divf %198, %199 : vector<16x1xf32>
    %cst_81 = arith.constant 9.99999997E-7 : f32
    %201 = vector.broadcast %cst_81 : f32 to vector<16x1xf32>
    %202 = arith.addf %200, %201 : vector<16x1xf32>
    %203 = math.rsqrt %202 : vector<16x1xf32>
    %204 = vector.broadcast %203 : vector<16x1xf32> to vector<16x32xf32>
    %205 = arith.mulf %195, %204 : vector<16x32xf32>
    %c0_82 = arith.constant 0 : index
    %c0_83 = arith.constant 0 : index
    %206 = vector.load %arg11[%c0_82, %c0_83] : memref<1x32xf32, #tpu.memory_space<vmem>>, vector<1x32xf32>
    %207 = vector.broadcast %206 : vector<1x32xf32> to vector<16x32xf32>
    %208 = arith.mulf %205, %207 : vector<16x32xf32>
    %c0_84 = arith.constant 0 : index
    %c0_85 = arith.constant 0 : index
    %209 = vector.load %arg1[%c0_84, %c0_85] : memref<16x1xi32, #tpu.memory_space<vmem>>, vector<16x1xi32>
    %210 = tpu.iota {dimensions = array<i32: 1>} : vector<16x64xi32>
    %211 = vector.broadcast %209 : vector<16x1xi32> to vector<16x64xi32>
    %212 = arith.cmpi eq, %210, %211 : vector<16x64xi32>
    %213 = arith.extui %212 : vector<16x64xi1> to vector<16x64xi32>
    %214 = arith.sitofp %213 : vector<16x64xi32> to vector<16x64xf32>
    %cst_86 = arith.constant dense<0.000000e+00> : vector<16x32xf32>
    %215 = tpu.matmul %214, %0, %cst_86 {dimension_numbers = #tpu.dot_dimension_numbers<[1], [0], [0], [1], [0, 0, 1, 1], [], []>} : vector<16x64xf32>, vector<64x32xf32>, vector<16x32xf32> -> vector<16x32xf32>
    %216 = arith.mulf %215, %215 : vector<16x32xf32>
    %cst_87 = arith.constant dense<0.000000e+00> : vector<16xf32>
    %217 = vector.multi_reduction <add>, %216, %cst_87 [1] : vector<16x32xf32> to vector<16xf32>
    %218 = vector.shape_cast %217 : vector<16xf32> to vector<16x1xf32>
    %cst_88 = arith.constant 3.200000e+01 : f32
    %219 = vector.broadcast %cst_88 : f32 to vector<16x1xf32>
    %220 = arith.divf %218, %219 : vector<16x1xf32>
    %cst_89 = arith.constant 9.99999997E-7 : f32
    %221 = vector.broadcast %cst_89 : f32 to vector<16x1xf32>
    %222 = arith.addf %220, %221 : vector<16x1xf32>
    %223 = math.rsqrt %222 : vector<16x1xf32>
    %224 = vector.broadcast %223 : vector<16x1xf32> to vector<16x32xf32>
    %225 = arith.mulf %215, %224 : vector<16x32xf32>
    %c0_90 = arith.constant 0 : index
    %c0_91 = arith.constant 0 : index
    %226 = vector.load %arg12[%c0_90, %c0_91] : memref<1x32xf32, #tpu.memory_space<vmem>>, vector<1x32xf32>
    %227 = vector.broadcast %226 : vector<1x32xf32> to vector<16x32xf32>
    %228 = arith.mulf %225, %227 : vector<16x32xf32>
    %c0_92 = arith.constant 0 : index
    %c0_93 = arith.constant 0 : index
    %229 = vector.load %arg13[%c0_92, %c0_93] : memref<32x96xf32, #tpu.memory_space<vmem>>, vector<32x96xf32>
    %cst_94 = arith.constant dense<0.000000e+00> : vector<16x96xf32>
    %230 = tpu.matmul %228, %229, %cst_94 {dimension_numbers = #tpu.dot_dimension_numbers<[1], [0], [0], [1], [0, 0, 1, 1], [], []>} : vector<16x32xf32>, vector<32x96xf32>, vector<16x96xf32> -> vector<16x96xf32>
    %231 = vector.extract_strided_slice %230 {offsets = [0, 0], sizes = [16, 32], strides = [1, 1]} : vector<16x96xf32> to vector<16x32xf32>
    %232 = vector.extract_strided_slice %230 {offsets = [0, 32], sizes = [16, 32], strides = [1, 1]} : vector<16x96xf32> to vector<16x32xf32>
    %233 = vector.extract_strided_slice %230 {offsets = [0, 64], sizes = [16, 32], strides = [1, 1]} : vector<16x96xf32> to vector<16x32xf32>
    %234 = vector.extract_strided_slice %231 {offsets = [0, 0], sizes = [8, 8], strides = [1, 1]} : vector<16x32xf32> to vector<8x8xf32>
    %235 = vector.extract_strided_slice %232 {offsets = [0, 0], sizes = [8, 8], strides = [1, 1]} : vector<16x32xf32> to vector<8x8xf32>
    %236 = vector.extract_strided_slice %233 {offsets = [0, 0], sizes = [8, 8], strides = [1, 1]} : vector<16x32xf32> to vector<8x8xf32>
    %cst_95 = arith.constant dense<0.000000e+00> : vector<8x8xf32>
    %237 = tpu.matmul %234, %235, %cst_95 {dimension_numbers = #tpu.dot_dimension_numbers<[1], [1], [0], [0], [0, 0, 1, 0], [], []>} : vector<8x8xf32>, vector<8x8xf32>, vector<8x8xf32> -> vector<8x8xf32>
    %c0_96 = arith.constant 0 : index
    %c0_97 = arith.constant 0 : index
    %c0_98 = arith.constant 0 : index
    %238 = vector.load %arg4[%c0_96, %c0_97, %c0_98] : memref<4x8x8xf32, #tpu.memory_space<vmem>>, vector<1x8x8xf32>
    %239 = vector.shape_cast %238 : vector<1x8x8xf32> to vector<8x8xf32>
    %240 = arith.addf %237, %239 : vector<8x8xf32>
    %cst_99 = arith.constant dense<0xFF800000> : vector<8xf32>
    %241 = vector.multi_reduction <maximumf>, %240, %cst_99 [1] : vector<8x8xf32> to vector<8xf32>
    %242 = vector.shape_cast %241 : vector<8xf32> to vector<8x1xf32>
    %243 = vector.broadcast %242 : vector<8x1xf32> to vector<8x8xf32>
    %244 = arith.subf %240, %243 : vector<8x8xf32>
    %245 = math.exp %244 : vector<8x8xf32>
    %cst_100 = arith.constant dense<0.000000e+00> : vector<8xf32>
    %246 = vector.multi_reduction <add>, %245, %cst_100 [1] : vector<8x8xf32> to vector<8xf32>
    %247 = vector.shape_cast %246 : vector<8xf32> to vector<8x1xf32>
    %248 = tpu.reciprocal %247 {approx = true} : vector<8x1xf32> -> vector<8x1xf32>
    %249 = vector.broadcast %248 : vector<8x1xf32> to vector<8x8xf32>
    %250 = arith.mulf %245, %249 : vector<8x8xf32>
    %cst_101 = arith.constant dense<0.000000e+00> : vector<8x8xf32>
    %251 = tpu.matmul %250, %236, %cst_101 {dimension_numbers = #tpu.dot_dimension_numbers<[1], [0], [0], [1], [0, 0, 1, 1], [], []>} : vector<8x8xf32>, vector<8x8xf32>, vector<8x8xf32> -> vector<8x8xf32>
    %252 = vector.extract_strided_slice %231 {offsets = [0, 8], sizes = [8, 8], strides = [1, 1]} : vector<16x32xf32> to vector<8x8xf32>
    %253 = vector.extract_strided_slice %232 {offsets = [0, 8], sizes = [8, 8], strides = [1, 1]} : vector<16x32xf32> to vector<8x8xf32>
    %254 = vector.extract_strided_slice %233 {offsets = [0, 8], sizes = [8, 8], strides = [1, 1]} : vector<16x32xf32> to vector<8x8xf32>
    %cst_102 = arith.constant dense<0.000000e+00> : vector<8x8xf32>
    %255 = tpu.matmul %252, %253, %cst_102 {dimension_numbers = #tpu.dot_dimension_numbers<[1], [1], [0], [0], [0, 0, 1, 0], [], []>} : vector<8x8xf32>, vector<8x8xf32>, vector<8x8xf32> -> vector<8x8xf32>
    %c1_103 = arith.constant 1 : index
    %c0_104 = arith.constant 0 : index
    %c0_105 = arith.constant 0 : index
    %256 = vector.load %arg4[%c1_103, %c0_104, %c0_105] : memref<4x8x8xf32, #tpu.memory_space<vmem>>, vector<1x8x8xf32>
    %257 = vector.shape_cast %256 : vector<1x8x8xf32> to vector<8x8xf32>
    %258 = arith.addf %255, %257 : vector<8x8xf32>
    %cst_106 = arith.constant dense<0xFF800000> : vector<8xf32>
    %259 = vector.multi_reduction <maximumf>, %258, %cst_106 [1] : vector<8x8xf32> to vector<8xf32>
    %260 = vector.shape_cast %259 : vector<8xf32> to vector<8x1xf32>
    %261 = vector.broadcast %260 : vector<8x1xf32> to vector<8x8xf32>
    %262 = arith.subf %258, %261 : vector<8x8xf32>
    %263 = math.exp %262 : vector<8x8xf32>
    %cst_107 = arith.constant dense<0.000000e+00> : vector<8xf32>
    %264 = vector.multi_reduction <add>, %263, %cst_107 [1] : vector<8x8xf32> to vector<8xf32>
    %265 = vector.shape_cast %264 : vector<8xf32> to vector<8x1xf32>
    %266 = tpu.reciprocal %265 {approx = true} : vector<8x1xf32> -> vector<8x1xf32>
    %267 = vector.broadcast %266 : vector<8x1xf32> to vector<8x8xf32>
    %268 = arith.mulf %263, %267 : vector<8x8xf32>
    %cst_108 = arith.constant dense<0.000000e+00> : vector<8x8xf32>
    %269 = tpu.matmul %268, %254, %cst_108 {dimension_numbers = #tpu.dot_dimension_numbers<[1], [0], [0], [1], [0, 0, 1, 1], [], []>} : vector<8x8xf32>, vector<8x8xf32>, vector<8x8xf32> -> vector<8x8xf32>
    %270 = vector.extract_strided_slice %231 {offsets = [0, 16], sizes = [8, 8], strides = [1, 1]} : vector<16x32xf32> to vector<8x8xf32>
    %271 = vector.extract_strided_slice %232 {offsets = [0, 16], sizes = [8, 8], strides = [1, 1]} : vector<16x32xf32> to vector<8x8xf32>
    %272 = vector.extract_strided_slice %233 {offsets = [0, 16], sizes = [8, 8], strides = [1, 1]} : vector<16x32xf32> to vector<8x8xf32>
    %cst_109 = arith.constant dense<0.000000e+00> : vector<8x8xf32>
    %273 = tpu.matmul %270, %271, %cst_109 {dimension_numbers = #tpu.dot_dimension_numbers<[1], [1], [0], [0], [0, 0, 1, 0], [], []>} : vector<8x8xf32>, vector<8x8xf32>, vector<8x8xf32> -> vector<8x8xf32>
    %c2_110 = arith.constant 2 : index
    %c0_111 = arith.constant 0 : index
    %c0_112 = arith.constant 0 : index
    %274 = vector.load %arg4[%c2_110, %c0_111, %c0_112] : memref<4x8x8xf32, #tpu.memory_space<vmem>>, vector<1x8x8xf32>
    %275 = vector.shape_cast %274 : vector<1x8x8xf32> to vector<8x8xf32>
    %276 = arith.addf %273, %275 : vector<8x8xf32>
    %cst_113 = arith.constant dense<0xFF800000> : vector<8xf32>
    %277 = vector.multi_reduction <maximumf>, %276, %cst_113 [1] : vector<8x8xf32> to vector<8xf32>
    %278 = vector.shape_cast %277 : vector<8xf32> to vector<8x1xf32>
    %279 = vector.broadcast %278 : vector<8x1xf32> to vector<8x8xf32>
    %280 = arith.subf %276, %279 : vector<8x8xf32>
    %281 = math.exp %280 : vector<8x8xf32>
    %cst_114 = arith.constant dense<0.000000e+00> : vector<8xf32>
    %282 = vector.multi_reduction <add>, %281, %cst_114 [1] : vector<8x8xf32> to vector<8xf32>
    %283 = vector.shape_cast %282 : vector<8xf32> to vector<8x1xf32>
    %284 = tpu.reciprocal %283 {approx = true} : vector<8x1xf32> -> vector<8x1xf32>
    %285 = vector.broadcast %284 : vector<8x1xf32> to vector<8x8xf32>
    %286 = arith.mulf %281, %285 : vector<8x8xf32>
    %cst_115 = arith.constant dense<0.000000e+00> : vector<8x8xf32>
    %287 = tpu.matmul %286, %272, %cst_115 {dimension_numbers = #tpu.dot_dimension_numbers<[1], [0], [0], [1], [0, 0, 1, 1], [], []>} : vector<8x8xf32>, vector<8x8xf32>, vector<8x8xf32> -> vector<8x8xf32>
    %288 = vector.extract_strided_slice %231 {offsets = [0, 24], sizes = [8, 8], strides = [1, 1]} : vector<16x32xf32> to vector<8x8xf32>
    %289 = vector.extract_strided_slice %232 {offsets = [0, 24], sizes = [8, 8], strides = [1, 1]} : vector<16x32xf32> to vector<8x8xf32>
    %290 = vector.extract_strided_slice %233 {offsets = [0, 24], sizes = [8, 8], strides = [1, 1]} : vector<16x32xf32> to vector<8x8xf32>
    %cst_116 = arith.constant dense<0.000000e+00> : vector<8x8xf32>
    %291 = tpu.matmul %288, %289, %cst_116 {dimension_numbers = #tpu.dot_dimension_numbers<[1], [1], [0], [0], [0, 0, 1, 0], [], []>} : vector<8x8xf32>, vector<8x8xf32>, vector<8x8xf32> -> vector<8x8xf32>
    %c3_117 = arith.constant 3 : index
    %c0_118 = arith.constant 0 : index
    %c0_119 = arith.constant 0 : index
    %292 = vector.load %arg4[%c3_117, %c0_118, %c0_119] : memref<4x8x8xf32, #tpu.memory_space<vmem>>, vector<1x8x8xf32>
    %293 = vector.shape_cast %292 : vector<1x8x8xf32> to vector<8x8xf32>
    %294 = arith.addf %291, %293 : vector<8x8xf32>
    %cst_120 = arith.constant dense<0xFF800000> : vector<8xf32>
    %295 = vector.multi_reduction <maximumf>, %294, %cst_120 [1] : vector<8x8xf32> to vector<8xf32>
    %296 = vector.shape_cast %295 : vector<8xf32> to vector<8x1xf32>
    %297 = vector.broadcast %296 : vector<8x1xf32> to vector<8x8xf32>
    %298 = arith.subf %294, %297 : vector<8x8xf32>
    %299 = math.exp %298 : vector<8x8xf32>
    %cst_121 = arith.constant dense<0.000000e+00> : vector<8xf32>
    %300 = vector.multi_reduction <add>, %299, %cst_121 [1] : vector<8x8xf32> to vector<8xf32>
    %301 = vector.shape_cast %300 : vector<8xf32> to vector<8x1xf32>
    %302 = tpu.reciprocal %301 {approx = true} : vector<8x1xf32> -> vector<8x1xf32>
    %303 = vector.broadcast %302 : vector<8x1xf32> to vector<8x8xf32>
    %304 = arith.mulf %299, %303 : vector<8x8xf32>
    %cst_122 = arith.constant dense<0.000000e+00> : vector<8x8xf32>
    %305 = tpu.matmul %304, %290, %cst_122 {dimension_numbers = #tpu.dot_dimension_numbers<[1], [0], [0], [1], [0, 0, 1, 1], [], []>} : vector<8x8xf32>, vector<8x8xf32>, vector<8x8xf32> -> vector<8x8xf32>
    %306 = tpu.concatenate %251, %269, %287, %305 in 1 : vector<8x8xf32>, vector<8x8xf32>, vector<8x8xf32>, vector<8x8xf32> -> vector<8x32xf32>
    %307 = vector.extract_strided_slice %231 {offsets = [8, 0], sizes = [8, 8], strides = [1, 1]} : vector<16x32xf32> to vector<8x8xf32>
    %308 = vector.extract_strided_slice %232 {offsets = [8, 0], sizes = [8, 8], strides = [1, 1]} : vector<16x32xf32> to vector<8x8xf32>
    %309 = vector.extract_strided_slice %233 {offsets = [8, 0], sizes = [8, 8], strides = [1, 1]} : vector<16x32xf32> to vector<8x8xf32>
    %cst_123 = arith.constant dense<0.000000e+00> : vector<8x8xf32>
    %310 = tpu.matmul %307, %308, %cst_123 {dimension_numbers = #tpu.dot_dimension_numbers<[1], [1], [0], [0], [0, 0, 1, 0], [], []>} : vector<8x8xf32>, vector<8x8xf32>, vector<8x8xf32> -> vector<8x8xf32>
    %c0_124 = arith.constant 0 : index
    %c0_125 = arith.constant 0 : index
    %c0_126 = arith.constant 0 : index
    %311 = vector.load %arg4[%c0_124, %c0_125, %c0_126] : memref<4x8x8xf32, #tpu.memory_space<vmem>>, vector<1x8x8xf32>
    %312 = vector.shape_cast %311 : vector<1x8x8xf32> to vector<8x8xf32>
    %313 = arith.addf %310, %312 : vector<8x8xf32>
    %cst_127 = arith.constant dense<0xFF800000> : vector<8xf32>
    %314 = vector.multi_reduction <maximumf>, %313, %cst_127 [1] : vector<8x8xf32> to vector<8xf32>
    %315 = vector.shape_cast %314 : vector<8xf32> to vector<8x1xf32>
    %316 = vector.broadcast %315 : vector<8x1xf32> to vector<8x8xf32>
    %317 = arith.subf %313, %316 : vector<8x8xf32>
    %318 = math.exp %317 : vector<8x8xf32>
    %cst_128 = arith.constant dense<0.000000e+00> : vector<8xf32>
    %319 = vector.multi_reduction <add>, %318, %cst_128 [1] : vector<8x8xf32> to vector<8xf32>
    %320 = vector.shape_cast %319 : vector<8xf32> to vector<8x1xf32>
    %321 = tpu.reciprocal %320 {approx = true} : vector<8x1xf32> -> vector<8x1xf32>
    %322 = vector.broadcast %321 : vector<8x1xf32> to vector<8x8xf32>
    %323 = arith.mulf %318, %322 : vector<8x8xf32>
    %cst_129 = arith.constant dense<0.000000e+00> : vector<8x8xf32>
    %324 = tpu.matmul %323, %309, %cst_129 {dimension_numbers = #tpu.dot_dimension_numbers<[1], [0], [0], [1], [0, 0, 1, 1], [], []>} : vector<8x8xf32>, vector<8x8xf32>, vector<8x8xf32> -> vector<8x8xf32>
    %325 = vector.extract_strided_slice %231 {offsets = [8, 8], sizes = [8, 8], strides = [1, 1]} : vector<16x32xf32> to vector<8x8xf32>
    %326 = vector.extract_strided_slice %232 {offsets = [8, 8], sizes = [8, 8], strides = [1, 1]} : vector<16x32xf32> to vector<8x8xf32>
    %327 = vector.extract_strided_slice %233 {offsets = [8, 8], sizes = [8, 8], strides = [1, 1]} : vector<16x32xf32> to vector<8x8xf32>
    %cst_130 = arith.constant dense<0.000000e+00> : vector<8x8xf32>
    %328 = tpu.matmul %325, %326, %cst_130 {dimension_numbers = #tpu.dot_dimension_numbers<[1], [1], [0], [0], [0, 0, 1, 0], [], []>} : vector<8x8xf32>, vector<8x8xf32>, vector<8x8xf32> -> vector<8x8xf32>
    %c1_131 = arith.constant 1 : index
    %c0_132 = arith.constant 0 : index
    %c0_133 = arith.constant 0 : index
    %329 = vector.load %arg4[%c1_131, %c0_132, %c0_133] : memref<4x8x8xf32, #tpu.memory_space<vmem>>, vector<1x8x8xf32>
    %330 = vector.shape_cast %329 : vector<1x8x8xf32> to vector<8x8xf32>
    %331 = arith.addf %328, %330 : vector<8x8xf32>
    %cst_134 = arith.constant dense<0xFF800000> : vector<8xf32>
    %332 = vector.multi_reduction <maximumf>, %331, %cst_134 [1] : vector<8x8xf32> to vector<8xf32>
    %333 = vector.shape_cast %332 : vector<8xf32> to vector<8x1xf32>
    %334 = vector.broadcast %333 : vector<8x1xf32> to vector<8x8xf32>
    %335 = arith.subf %331, %334 : vector<8x8xf32>
    %336 = math.exp %335 : vector<8x8xf32>
    %cst_135 = arith.constant dense<0.000000e+00> : vector<8xf32>
    %337 = vector.multi_reduction <add>, %336, %cst_135 [1] : vector<8x8xf32> to vector<8xf32>
    %338 = vector.shape_cast %337 : vector<8xf32> to vector<8x1xf32>
    %339 = tpu.reciprocal %338 {approx = true} : vector<8x1xf32> -> vector<8x1xf32>
    %340 = vector.broadcast %339 : vector<8x1xf32> to vector<8x8xf32>
    %341 = arith.mulf %336, %340 : vector<8x8xf32>
    %cst_136 = arith.constant dense<0.000000e+00> : vector<8x8xf32>
    %342 = tpu.matmul %341, %327, %cst_136 {dimension_numbers = #tpu.dot_dimension_numbers<[1], [0], [0], [1], [0, 0, 1, 1], [], []>} : vector<8x8xf32>, vector<8x8xf32>, vector<8x8xf32> -> vector<8x8xf32>
    %343 = vector.extract_strided_slice %231 {offsets = [8, 16], sizes = [8, 8], strides = [1, 1]} : vector<16x32xf32> to vector<8x8xf32>
    %344 = vector.extract_strided_slice %232 {offsets = [8, 16], sizes = [8, 8], strides = [1, 1]} : vector<16x32xf32> to vector<8x8xf32>
    %345 = vector.extract_strided_slice %233 {offsets = [8, 16], sizes = [8, 8], strides = [1, 1]} : vector<16x32xf32> to vector<8x8xf32>
    %cst_137 = arith.constant dense<0.000000e+00> : vector<8x8xf32>
    %346 = tpu.matmul %343, %344, %cst_137 {dimension_numbers = #tpu.dot_dimension_numbers<[1], [1], [0], [0], [0, 0, 1, 0], [], []>} : vector<8x8xf32>, vector<8x8xf32>, vector<8x8xf32> -> vector<8x8xf32>
    %c2_138 = arith.constant 2 : index
    %c0_139 = arith.constant 0 : index
    %c0_140 = arith.constant 0 : index
    %347 = vector.load %arg4[%c2_138, %c0_139, %c0_140] : memref<4x8x8xf32, #tpu.memory_space<vmem>>, vector<1x8x8xf32>
    %348 = vector.shape_cast %347 : vector<1x8x8xf32> to vector<8x8xf32>
    %349 = arith.addf %346, %348 : vector<8x8xf32>
    %cst_141 = arith.constant dense<0xFF800000> : vector<8xf32>
    %350 = vector.multi_reduction <maximumf>, %349, %cst_141 [1] : vector<8x8xf32> to vector<8xf32>
    %351 = vector.shape_cast %350 : vector<8xf32> to vector<8x1xf32>
    %352 = vector.broadcast %351 : vector<8x1xf32> to vector<8x8xf32>
    %353 = arith.subf %349, %352 : vector<8x8xf32>
    %354 = math.exp %353 : vector<8x8xf32>
    %cst_142 = arith.constant dense<0.000000e+00> : vector<8xf32>
    %355 = vector.multi_reduction <add>, %354, %cst_142 [1] : vector<8x8xf32> to vector<8xf32>
    %356 = vector.shape_cast %355 : vector<8xf32> to vector<8x1xf32>
    %357 = tpu.reciprocal %356 {approx = true} : vector<8x1xf32> -> vector<8x1xf32>
    %358 = vector.broadcast %357 : vector<8x1xf32> to vector<8x8xf32>
    %359 = arith.mulf %354, %358 : vector<8x8xf32>
    %cst_143 = arith.constant dense<0.000000e+00> : vector<8x8xf32>
    %360 = tpu.matmul %359, %345, %cst_143 {dimension_numbers = #tpu.dot_dimension_numbers<[1], [0], [0], [1], [0, 0, 1, 1], [], []>} : vector<8x8xf32>, vector<8x8xf32>, vector<8x8xf32> -> vector<8x8xf32>
    %361 = vector.extract_strided_slice %231 {offsets = [8, 24], sizes = [8, 8], strides = [1, 1]} : vector<16x32xf32> to vector<8x8xf32>
    %362 = vector.extract_strided_slice %232 {offsets = [8, 24], sizes = [8, 8], strides = [1, 1]} : vector<16x32xf32> to vector<8x8xf32>
    %363 = vector.extract_strided_slice %233 {offsets = [8, 24], sizes = [8, 8], strides = [1, 1]} : vector<16x32xf32> to vector<8x8xf32>
    %cst_144 = arith.constant dense<0.000000e+00> : vector<8x8xf32>
    %364 = tpu.matmul %361, %362, %cst_144 {dimension_numbers = #tpu.dot_dimension_numbers<[1], [1], [0], [0], [0, 0, 1, 0], [], []>} : vector<8x8xf32>, vector<8x8xf32>, vector<8x8xf32> -> vector<8x8xf32>
    %c3_145 = arith.constant 3 : index
    %c0_146 = arith.constant 0 : index
    %c0_147 = arith.constant 0 : index
    %365 = vector.load %arg4[%c3_145, %c0_146, %c0_147] : memref<4x8x8xf32, #tpu.memory_space<vmem>>, vector<1x8x8xf32>
    %366 = vector.shape_cast %365 : vector<1x8x8xf32> to vector<8x8xf32>
    %367 = arith.addf %364, %366 : vector<8x8xf32>
    %cst_148 = arith.constant dense<0xFF800000> : vector<8xf32>
    %368 = vector.multi_reduction <maximumf>, %367, %cst_148 [1] : vector<8x8xf32> to vector<8xf32>
    %369 = vector.shape_cast %368 : vector<8xf32> to vector<8x1xf32>
    %370 = vector.broadcast %369 : vector<8x1xf32> to vector<8x8xf32>
    %371 = arith.subf %367, %370 : vector<8x8xf32>
    %372 = math.exp %371 : vector<8x8xf32>
    %cst_149 = arith.constant dense<0.000000e+00> : vector<8xf32>
    %373 = vector.multi_reduction <add>, %372, %cst_149 [1] : vector<8x8xf32> to vector<8xf32>
    %374 = vector.shape_cast %373 : vector<8xf32> to vector<8x1xf32>
    %375 = tpu.reciprocal %374 {approx = true} : vector<8x1xf32> -> vector<8x1xf32>
    %376 = vector.broadcast %375 : vector<8x1xf32> to vector<8x8xf32>
    %377 = arith.mulf %372, %376 : vector<8x8xf32>
    %cst_150 = arith.constant dense<0.000000e+00> : vector<8x8xf32>
    %378 = tpu.matmul %377, %363, %cst_150 {dimension_numbers = #tpu.dot_dimension_numbers<[1], [0], [0], [1], [0, 0, 1, 1], [], []>} : vector<8x8xf32>, vector<8x8xf32>, vector<8x8xf32> -> vector<8x8xf32>
    %379 = tpu.concatenate %324, %342, %360, %378 in 1 : vector<8x8xf32>, vector<8x8xf32>, vector<8x8xf32>, vector<8x8xf32> -> vector<8x32xf32>
    %380 = tpu.concatenate %306, %379 in 0 : vector<8x32xf32>, vector<8x32xf32> -> vector<16x32xf32>
    %c0_151 = arith.constant 0 : index
    %c0_152 = arith.constant 0 : index
    %381 = vector.load %arg14[%c0_151, %c0_152] : memref<32x32xf32, #tpu.memory_space<vmem>>, vector<32x32xf32>
    %cst_153 = arith.constant dense<0.000000e+00> : vector<16x32xf32>
    %382 = tpu.matmul %380, %381, %cst_153 {dimension_numbers = #tpu.dot_dimension_numbers<[1], [0], [0], [1], [0, 0, 1, 1], [], []>} : vector<16x32xf32>, vector<32x32xf32>, vector<16x32xf32> -> vector<16x32xf32>
    %383 = arith.addf %215, %382 : vector<16x32xf32>
    %384 = arith.mulf %383, %383 : vector<16x32xf32>
    %cst_154 = arith.constant dense<0.000000e+00> : vector<16xf32>
    %385 = vector.multi_reduction <add>, %384, %cst_154 [1] : vector<16x32xf32> to vector<16xf32>
    %386 = vector.shape_cast %385 : vector<16xf32> to vector<16x1xf32>
    %cst_155 = arith.constant 3.200000e+01 : f32
    %387 = vector.broadcast %cst_155 : f32 to vector<16x1xf32>
    %388 = arith.divf %386, %387 : vector<16x1xf32>
    %cst_156 = arith.constant 9.99999997E-7 : f32
    %389 = vector.broadcast %cst_156 : f32 to vector<16x1xf32>
    %390 = arith.addf %388, %389 : vector<16x1xf32>
    %391 = math.rsqrt %390 : vector<16x1xf32>
    %392 = vector.broadcast %391 : vector<16x1xf32> to vector<16x32xf32>
    %393 = arith.mulf %383, %392 : vector<16x32xf32>
    %c0_157 = arith.constant 0 : index
    %c0_158 = arith.constant 0 : index
    %394 = vector.load %arg15[%c0_157, %c0_158] : memref<1x32xf32, #tpu.memory_space<vmem>>, vector<1x32xf32>
    %395 = vector.broadcast %394 : vector<1x32xf32> to vector<16x32xf32>
    %396 = arith.mulf %393, %395 : vector<16x32xf32>
    %c0_159 = arith.constant 0 : index
    %c0_160 = arith.constant 0 : index
    %397 = vector.load %arg16[%c0_159, %c0_160] : memref<32x32xf32, #tpu.memory_space<vmem>>, vector<32x32xf32>
    %cst_161 = arith.constant dense<0.000000e+00> : vector<16x32xf32>
    %398 = tpu.matmul %396, %397, %cst_161 {dimension_numbers = #tpu.dot_dimension_numbers<[1], [0], [0], [1], [0, 0, 1, 1], [], []>} : vector<16x32xf32>, vector<32x32xf32>, vector<16x32xf32> -> vector<16x32xf32>
    %c0_162 = arith.constant 0 : index
    %c0_163 = arith.constant 0 : index
    %399 = vector.load %arg17[%c0_162, %c0_163] : memref<32x64xf32, #tpu.memory_space<vmem>>, vector<32x64xf32>
    %cst_164 = arith.constant dense<0.000000e+00> : vector<16x64xf32>
    %400 = tpu.matmul %208, %399, %cst_164 {dimension_numbers = #tpu.dot_dimension_numbers<[1], [0], [0], [1], [0, 0, 1, 1], [], []>} : vector<16x32xf32>, vector<32x64xf32>, vector<16x64xf32> -> vector<16x64xf32>
    %401 = vector.extract_strided_slice %400 {offsets = [0, 0], sizes = [16, 32], strides = [1, 1]} : vector<16x64xf32> to vector<16x32xf32>
    %402 = vector.extract_strided_slice %400 {offsets = [0, 32], sizes = [16, 32], strides = [1, 1]} : vector<16x64xf32> to vector<16x32xf32>
    %403 = vector.extract_strided_slice %398 {offsets = [0, 0], sizes = [8, 8], strides = [1, 1]} : vector<16x32xf32> to vector<8x8xf32>
    %404 = vector.extract_strided_slice %401 {offsets = [0, 0], sizes = [8, 8], strides = [1, 1]} : vector<16x32xf32> to vector<8x8xf32>
    %405 = vector.extract_strided_slice %402 {offsets = [0, 0], sizes = [8, 8], strides = [1, 1]} : vector<16x32xf32> to vector<8x8xf32>
    %cst_165 = arith.constant dense<0.000000e+00> : vector<8x8xf32>
    %406 = tpu.matmul %403, %404, %cst_165 {dimension_numbers = #tpu.dot_dimension_numbers<[1], [1], [0], [0], [0, 0, 1, 0], [], []>} : vector<8x8xf32>, vector<8x8xf32>, vector<8x8xf32> -> vector<8x8xf32>
    %cst_166 = arith.constant dense<0xFF800000> : vector<8xf32>
    %407 = vector.multi_reduction <maximumf>, %406, %cst_166 [1] : vector<8x8xf32> to vector<8xf32>
    %408 = vector.shape_cast %407 : vector<8xf32> to vector<8x1xf32>
    %409 = vector.broadcast %408 : vector<8x1xf32> to vector<8x8xf32>
    %410 = arith.subf %406, %409 : vector<8x8xf32>
    %411 = math.exp %410 : vector<8x8xf32>
    %cst_167 = arith.constant dense<0.000000e+00> : vector<8xf32>
    %412 = vector.multi_reduction <add>, %411, %cst_167 [1] : vector<8x8xf32> to vector<8xf32>
    %413 = vector.shape_cast %412 : vector<8xf32> to vector<8x1xf32>
    %414 = tpu.reciprocal %413 {approx = true} : vector<8x1xf32> -> vector<8x1xf32>
    %415 = vector.broadcast %414 : vector<8x1xf32> to vector<8x8xf32>
    %416 = arith.mulf %411, %415 : vector<8x8xf32>
    %cst_168 = arith.constant dense<0.000000e+00> : vector<8x8xf32>
    %417 = tpu.matmul %416, %405, %cst_168 {dimension_numbers = #tpu.dot_dimension_numbers<[1], [0], [0], [1], [0, 0, 1, 1], [], []>} : vector<8x8xf32>, vector<8x8xf32>, vector<8x8xf32> -> vector<8x8xf32>
    %418 = vector.extract_strided_slice %398 {offsets = [0, 8], sizes = [8, 8], strides = [1, 1]} : vector<16x32xf32> to vector<8x8xf32>
    %419 = vector.extract_strided_slice %401 {offsets = [0, 8], sizes = [8, 8], strides = [1, 1]} : vector<16x32xf32> to vector<8x8xf32>
    %420 = vector.extract_strided_slice %402 {offsets = [0, 8], sizes = [8, 8], strides = [1, 1]} : vector<16x32xf32> to vector<8x8xf32>
    %cst_169 = arith.constant dense<0.000000e+00> : vector<8x8xf32>
    %421 = tpu.matmul %418, %419, %cst_169 {dimension_numbers = #tpu.dot_dimension_numbers<[1], [1], [0], [0], [0, 0, 1, 0], [], []>} : vector<8x8xf32>, vector<8x8xf32>, vector<8x8xf32> -> vector<8x8xf32>
    %cst_170 = arith.constant dense<0xFF800000> : vector<8xf32>
    %422 = vector.multi_reduction <maximumf>, %421, %cst_170 [1] : vector<8x8xf32> to vector<8xf32>
    %423 = vector.shape_cast %422 : vector<8xf32> to vector<8x1xf32>
    %424 = vector.broadcast %423 : vector<8x1xf32> to vector<8x8xf32>
    %425 = arith.subf %421, %424 : vector<8x8xf32>
    %426 = math.exp %425 : vector<8x8xf32>
    %cst_171 = arith.constant dense<0.000000e+00> : vector<8xf32>
    %427 = vector.multi_reduction <add>, %426, %cst_171 [1] : vector<8x8xf32> to vector<8xf32>
    %428 = vector.shape_cast %427 : vector<8xf32> to vector<8x1xf32>
    %429 = tpu.reciprocal %428 {approx = true} : vector<8x1xf32> -> vector<8x1xf32>
    %430 = vector.broadcast %429 : vector<8x1xf32> to vector<8x8xf32>
    %431 = arith.mulf %426, %430 : vector<8x8xf32>
    %cst_172 = arith.constant dense<0.000000e+00> : vector<8x8xf32>
    %432 = tpu.matmul %431, %420, %cst_172 {dimension_numbers = #tpu.dot_dimension_numbers<[1], [0], [0], [1], [0, 0, 1, 1], [], []>} : vector<8x8xf32>, vector<8x8xf32>, vector<8x8xf32> -> vector<8x8xf32>
    %433 = vector.extract_strided_slice %398 {offsets = [0, 16], sizes = [8, 8], strides = [1, 1]} : vector<16x32xf32> to vector<8x8xf32>
    %434 = vector.extract_strided_slice %401 {offsets = [0, 16], sizes = [8, 8], strides = [1, 1]} : vector<16x32xf32> to vector<8x8xf32>
    %435 = vector.extract_strided_slice %402 {offsets = [0, 16], sizes = [8, 8], strides = [1, 1]} : vector<16x32xf32> to vector<8x8xf32>
    %cst_173 = arith.constant dense<0.000000e+00> : vector<8x8xf32>
    %436 = tpu.matmul %433, %434, %cst_173 {dimension_numbers = #tpu.dot_dimension_numbers<[1], [1], [0], [0], [0, 0, 1, 0], [], []>} : vector<8x8xf32>, vector<8x8xf32>, vector<8x8xf32> -> vector<8x8xf32>
    %cst_174 = arith.constant dense<0xFF800000> : vector<8xf32>
    %437 = vector.multi_reduction <maximumf>, %436, %cst_174 [1] : vector<8x8xf32> to vector<8xf32>
    %438 = vector.shape_cast %437 : vector<8xf32> to vector<8x1xf32>
    %439 = vector.broadcast %438 : vector<8x1xf32> to vector<8x8xf32>
    %440 = arith.subf %436, %439 : vector<8x8xf32>
    %441 = math.exp %440 : vector<8x8xf32>
    %cst_175 = arith.constant dense<0.000000e+00> : vector<8xf32>
    %442 = vector.multi_reduction <add>, %441, %cst_175 [1] : vector<8x8xf32> to vector<8xf32>
    %443 = vector.shape_cast %442 : vector<8xf32> to vector<8x1xf32>
    %444 = tpu.reciprocal %443 {approx = true} : vector<8x1xf32> -> vector<8x1xf32>
    %445 = vector.broadcast %444 : vector<8x1xf32> to vector<8x8xf32>
    %446 = arith.mulf %441, %445 : vector<8x8xf32>
    %cst_176 = arith.constant dense<0.000000e+00> : vector<8x8xf32>
    %447 = tpu.matmul %446, %435, %cst_176 {dimension_numbers = #tpu.dot_dimension_numbers<[1], [0], [0], [1], [0, 0, 1, 1], [], []>} : vector<8x8xf32>, vector<8x8xf32>, vector<8x8xf32> -> vector<8x8xf32>
    %448 = vector.extract_strided_slice %398 {offsets = [0, 24], sizes = [8, 8], strides = [1, 1]} : vector<16x32xf32> to vector<8x8xf32>
    %449 = vector.extract_strided_slice %401 {offsets = [0, 24], sizes = [8, 8], strides = [1, 1]} : vector<16x32xf32> to vector<8x8xf32>
    %450 = vector.extract_strided_slice %402 {offsets = [0, 24], sizes = [8, 8], strides = [1, 1]} : vector<16x32xf32> to vector<8x8xf32>
    %cst_177 = arith.constant dense<0.000000e+00> : vector<8x8xf32>
    %451 = tpu.matmul %448, %449, %cst_177 {dimension_numbers = #tpu.dot_dimension_numbers<[1], [1], [0], [0], [0, 0, 1, 0], [], []>} : vector<8x8xf32>, vector<8x8xf32>, vector<8x8xf32> -> vector<8x8xf32>
    %cst_178 = arith.constant dense<0xFF800000> : vector<8xf32>
    %452 = vector.multi_reduction <maximumf>, %451, %cst_178 [1] : vector<8x8xf32> to vector<8xf32>
    %453 = vector.shape_cast %452 : vector<8xf32> to vector<8x1xf32>
    %454 = vector.broadcast %453 : vector<8x1xf32> to vector<8x8xf32>
    %455 = arith.subf %451, %454 : vector<8x8xf32>
    %456 = math.exp %455 : vector<8x8xf32>
    %cst_179 = arith.constant dense<0.000000e+00> : vector<8xf32>
    %457 = vector.multi_reduction <add>, %456, %cst_179 [1] : vector<8x8xf32> to vector<8xf32>
    %458 = vector.shape_cast %457 : vector<8xf32> to vector<8x1xf32>
    %459 = tpu.reciprocal %458 {approx = true} : vector<8x1xf32> -> vector<8x1xf32>
    %460 = vector.broadcast %459 : vector<8x1xf32> to vector<8x8xf32>
    %461 = arith.mulf %456, %460 : vector<8x8xf32>
    %cst_180 = arith.constant dense<0.000000e+00> : vector<8x8xf32>
    %462 = tpu.matmul %461, %450, %cst_180 {dimension_numbers = #tpu.dot_dimension_numbers<[1], [0], [0], [1], [0, 0, 1, 1], [], []>} : vector<8x8xf32>, vector<8x8xf32>, vector<8x8xf32> -> vector<8x8xf32>
    %463 = tpu.concatenate %417, %432, %447, %462 in 1 : vector<8x8xf32>, vector<8x8xf32>, vector<8x8xf32>, vector<8x8xf32> -> vector<8x32xf32>
    %464 = vector.extract_strided_slice %398 {offsets = [8, 0], sizes = [8, 8], strides = [1, 1]} : vector<16x32xf32> to vector<8x8xf32>
    %465 = vector.extract_strided_slice %401 {offsets = [8, 0], sizes = [8, 8], strides = [1, 1]} : vector<16x32xf32> to vector<8x8xf32>
    %466 = vector.extract_strided_slice %402 {offsets = [8, 0], sizes = [8, 8], strides = [1, 1]} : vector<16x32xf32> to vector<8x8xf32>
    %cst_181 = arith.constant dense<0.000000e+00> : vector<8x8xf32>
    %467 = tpu.matmul %464, %465, %cst_181 {dimension_numbers = #tpu.dot_dimension_numbers<[1], [1], [0], [0], [0, 0, 1, 0], [], []>} : vector<8x8xf32>, vector<8x8xf32>, vector<8x8xf32> -> vector<8x8xf32>
    %cst_182 = arith.constant dense<0xFF800000> : vector<8xf32>
    %468 = vector.multi_reduction <maximumf>, %467, %cst_182 [1] : vector<8x8xf32> to vector<8xf32>
    %469 = vector.shape_cast %468 : vector<8xf32> to vector<8x1xf32>
    %470 = vector.broadcast %469 : vector<8x1xf32> to vector<8x8xf32>
    %471 = arith.subf %467, %470 : vector<8x8xf32>
    %472 = math.exp %471 : vector<8x8xf32>
    %cst_183 = arith.constant dense<0.000000e+00> : vector<8xf32>
    %473 = vector.multi_reduction <add>, %472, %cst_183 [1] : vector<8x8xf32> to vector<8xf32>
    %474 = vector.shape_cast %473 : vector<8xf32> to vector<8x1xf32>
    %475 = tpu.reciprocal %474 {approx = true} : vector<8x1xf32> -> vector<8x1xf32>
    %476 = vector.broadcast %475 : vector<8x1xf32> to vector<8x8xf32>
    %477 = arith.mulf %472, %476 : vector<8x8xf32>
    %cst_184 = arith.constant dense<0.000000e+00> : vector<8x8xf32>
    %478 = tpu.matmul %477, %466, %cst_184 {dimension_numbers = #tpu.dot_dimension_numbers<[1], [0], [0], [1], [0, 0, 1, 1], [], []>} : vector<8x8xf32>, vector<8x8xf32>, vector<8x8xf32> -> vector<8x8xf32>
    %479 = vector.extract_strided_slice %398 {offsets = [8, 8], sizes = [8, 8], strides = [1, 1]} : vector<16x32xf32> to vector<8x8xf32>
    %480 = vector.extract_strided_slice %401 {offsets = [8, 8], sizes = [8, 8], strides = [1, 1]} : vector<16x32xf32> to vector<8x8xf32>
    %481 = vector.extract_strided_slice %402 {offsets = [8, 8], sizes = [8, 8], strides = [1, 1]} : vector<16x32xf32> to vector<8x8xf32>
    %cst_185 = arith.constant dense<0.000000e+00> : vector<8x8xf32>
    %482 = tpu.matmul %479, %480, %cst_185 {dimension_numbers = #tpu.dot_dimension_numbers<[1], [1], [0], [0], [0, 0, 1, 0], [], []>} : vector<8x8xf32>, vector<8x8xf32>, vector<8x8xf32> -> vector<8x8xf32>
    %cst_186 = arith.constant dense<0xFF800000> : vector<8xf32>
    %483 = vector.multi_reduction <maximumf>, %482, %cst_186 [1] : vector<8x8xf32> to vector<8xf32>
    %484 = vector.shape_cast %483 : vector<8xf32> to vector<8x1xf32>
    %485 = vector.broadcast %484 : vector<8x1xf32> to vector<8x8xf32>
    %486 = arith.subf %482, %485 : vector<8x8xf32>
    %487 = math.exp %486 : vector<8x8xf32>
    %cst_187 = arith.constant dense<0.000000e+00> : vector<8xf32>
    %488 = vector.multi_reduction <add>, %487, %cst_187 [1] : vector<8x8xf32> to vector<8xf32>
    %489 = vector.shape_cast %488 : vector<8xf32> to vector<8x1xf32>
    %490 = tpu.reciprocal %489 {approx = true} : vector<8x1xf32> -> vector<8x1xf32>
    %491 = vector.broadcast %490 : vector<8x1xf32> to vector<8x8xf32>
    %492 = arith.mulf %487, %491 : vector<8x8xf32>
    %cst_188 = arith.constant dense<0.000000e+00> : vector<8x8xf32>
    %493 = tpu.matmul %492, %481, %cst_188 {dimension_numbers = #tpu.dot_dimension_numbers<[1], [0], [0], [1], [0, 0, 1, 1], [], []>} : vector<8x8xf32>, vector<8x8xf32>, vector<8x8xf32> -> vector<8x8xf32>
    %494 = vector.extract_strided_slice %398 {offsets = [8, 16], sizes = [8, 8], strides = [1, 1]} : vector<16x32xf32> to vector<8x8xf32>
    %495 = vector.extract_strided_slice %401 {offsets = [8, 16], sizes = [8, 8], strides = [1, 1]} : vector<16x32xf32> to vector<8x8xf32>
    %496 = vector.extract_strided_slice %402 {offsets = [8, 16], sizes = [8, 8], strides = [1, 1]} : vector<16x32xf32> to vector<8x8xf32>
    %cst_189 = arith.constant dense<0.000000e+00> : vector<8x8xf32>
    %497 = tpu.matmul %494, %495, %cst_189 {dimension_numbers = #tpu.dot_dimension_numbers<[1], [1], [0], [0], [0, 0, 1, 0], [], []>} : vector<8x8xf32>, vector<8x8xf32>, vector<8x8xf32> -> vector<8x8xf32>
    %cst_190 = arith.constant dense<0xFF800000> : vector<8xf32>
    %498 = vector.multi_reduction <maximumf>, %497, %cst_190 [1] : vector<8x8xf32> to vector<8xf32>
    %499 = vector.shape_cast %498 : vector<8xf32> to vector<8x1xf32>
    %500 = vector.broadcast %499 : vector<8x1xf32> to vector<8x8xf32>
    %501 = arith.subf %497, %500 : vector<8x8xf32>
    %502 = math.exp %501 : vector<8x8xf32>
    %cst_191 = arith.constant dense<0.000000e+00> : vector<8xf32>
    %503 = vector.multi_reduction <add>, %502, %cst_191 [1] : vector<8x8xf32> to vector<8xf32>
    %504 = vector.shape_cast %503 : vector<8xf32> to vector<8x1xf32>
    %505 = tpu.reciprocal %504 {approx = true} : vector<8x1xf32> -> vector<8x1xf32>
    %506 = vector.broadcast %505 : vector<8x1xf32> to vector<8x8xf32>
    %507 = arith.mulf %502, %506 : vector<8x8xf32>
    %cst_192 = arith.constant dense<0.000000e+00> : vector<8x8xf32>
    %508 = tpu.matmul %507, %496, %cst_192 {dimension_numbers = #tpu.dot_dimension_numbers<[1], [0], [0], [1], [0, 0, 1, 1], [], []>} : vector<8x8xf32>, vector<8x8xf32>, vector<8x8xf32> -> vector<8x8xf32>
    %509 = vector.extract_strided_slice %398 {offsets = [8, 24], sizes = [8, 8], strides = [1, 1]} : vector<16x32xf32> to vector<8x8xf32>
    %510 = vector.extract_strided_slice %401 {offsets = [8, 24], sizes = [8, 8], strides = [1, 1]} : vector<16x32xf32> to vector<8x8xf32>
    %511 = vector.extract_strided_slice %402 {offsets = [8, 24], sizes = [8, 8], strides = [1, 1]} : vector<16x32xf32> to vector<8x8xf32>
    %cst_193 = arith.constant dense<0.000000e+00> : vector<8x8xf32>
    %512 = tpu.matmul %509, %510, %cst_193 {dimension_numbers = #tpu.dot_dimension_numbers<[1], [1], [0], [0], [0, 0, 1, 0], [], []>} : vector<8x8xf32>, vector<8x8xf32>, vector<8x8xf32> -> vector<8x8xf32>
    %cst_194 = arith.constant dense<0xFF800000> : vector<8xf32>
    %513 = vector.multi_reduction <maximumf>, %512, %cst_194 [1] : vector<8x8xf32> to vector<8xf32>
    %514 = vector.shape_cast %513 : vector<8xf32> to vector<8x1xf32>
    %515 = vector.broadcast %514 : vector<8x1xf32> to vector<8x8xf32>
    %516 = arith.subf %512, %515 : vector<8x8xf32>
    %517 = math.exp %516 : vector<8x8xf32>
    %cst_195 = arith.constant dense<0.000000e+00> : vector<8xf32>
    %518 = vector.multi_reduction <add>, %517, %cst_195 [1] : vector<8x8xf32> to vector<8xf32>
    %519 = vector.shape_cast %518 : vector<8xf32> to vector<8x1xf32>
    %520 = tpu.reciprocal %519 {approx = true} : vector<8x1xf32> -> vector<8x1xf32>
    %521 = vector.broadcast %520 : vector<8x1xf32> to vector<8x8xf32>
    %522 = arith.mulf %517, %521 : vector<8x8xf32>
    %cst_196 = arith.constant dense<0.000000e+00> : vector<8x8xf32>
    %523 = tpu.matmul %522, %511, %cst_196 {dimension_numbers = #tpu.dot_dimension_numbers<[1], [0], [0], [1], [0, 0, 1, 1], [], []>} : vector<8x8xf32>, vector<8x8xf32>, vector<8x8xf32> -> vector<8x8xf32>
    %524 = tpu.concatenate %478, %493, %508, %523 in 1 : vector<8x8xf32>, vector<8x8xf32>, vector<8x8xf32>, vector<8x8xf32> -> vector<8x32xf32>
    %525 = tpu.concatenate %463, %524 in 0 : vector<8x32xf32>, vector<8x32xf32> -> vector<16x32xf32>
    %c0_197 = arith.constant 0 : index
    %c0_198 = arith.constant 0 : index
    %526 = vector.load %arg18[%c0_197, %c0_198] : memref<32x32xf32, #tpu.memory_space<vmem>>, vector<32x32xf32>
    %cst_199 = arith.constant dense<0.000000e+00> : vector<16x32xf32>
    %527 = tpu.matmul %525, %526, %cst_199 {dimension_numbers = #tpu.dot_dimension_numbers<[1], [0], [0], [1], [0, 0, 1, 1], [], []>} : vector<16x32xf32>, vector<32x32xf32>, vector<16x32xf32> -> vector<16x32xf32>
    %528 = arith.addf %383, %527 : vector<16x32xf32>
    %529 = arith.mulf %528, %528 : vector<16x32xf32>
    %cst_200 = arith.constant dense<0.000000e+00> : vector<16xf32>
    %530 = vector.multi_reduction <add>, %529, %cst_200 [1] : vector<16x32xf32> to vector<16xf32>
    %531 = vector.shape_cast %530 : vector<16xf32> to vector<16x1xf32>
    %cst_201 = arith.constant 3.200000e+01 : f32
    %532 = vector.broadcast %cst_201 : f32 to vector<16x1xf32>
    %533 = arith.divf %531, %532 : vector<16x1xf32>
    %cst_202 = arith.constant 9.99999997E-7 : f32
    %534 = vector.broadcast %cst_202 : f32 to vector<16x1xf32>
    %535 = arith.addf %533, %534 : vector<16x1xf32>
    %536 = math.rsqrt %535 : vector<16x1xf32>
    %537 = vector.broadcast %536 : vector<16x1xf32> to vector<16x32xf32>
    %538 = arith.mulf %528, %537 : vector<16x32xf32>
    %c0_203 = arith.constant 0 : index
    %c0_204 = arith.constant 0 : index
    %539 = vector.load %arg19[%c0_203, %c0_204] : memref<1x32xf32, #tpu.memory_space<vmem>>, vector<1x32xf32>
    %540 = vector.broadcast %539 : vector<1x32xf32> to vector<16x32xf32>
    %541 = arith.mulf %538, %540 : vector<16x32xf32>
    %c0_205 = arith.constant 0 : index
    %c0_206 = arith.constant 0 : index
    %542 = vector.load %arg20[%c0_205, %c0_206] : memref<32x64xf32, #tpu.memory_space<vmem>>, vector<32x64xf32>
    %cst_207 = arith.constant dense<0.000000e+00> : vector<16x64xf32>
    %543 = tpu.matmul %541, %542, %cst_207 {dimension_numbers = #tpu.dot_dimension_numbers<[1], [0], [0], [1], [0, 0, 1, 1], [], []>} : vector<16x32xf32>, vector<32x64xf32>, vector<16x64xf32> -> vector<16x64xf32>
    %cst_208 = arith.constant 0.000000e+00 : f32
    %544 = vector.broadcast %cst_208 : f32 to vector<16x64xf32>
    %545 = arith.maximumf %543, %544 : vector<16x64xf32>
    %c0_209 = arith.constant 0 : index
    %c0_210 = arith.constant 0 : index
    %546 = vector.load %arg21[%c0_209, %c0_210] : memref<64x32xf32, #tpu.memory_space<vmem>>, vector<64x32xf32>
    %cst_211 = arith.constant dense<0.000000e+00> : vector<16x32xf32>
    %547 = tpu.matmul %545, %546, %cst_211 {dimension_numbers = #tpu.dot_dimension_numbers<[1], [0], [0], [1], [0, 0, 1, 1], [], []>} : vector<16x64xf32>, vector<64x32xf32>, vector<16x32xf32> -> vector<16x32xf32>
    %548 = arith.addf %528, %547 : vector<16x32xf32>
    %549 = arith.mulf %548, %548 : vector<16x32xf32>
    %cst_212 = arith.constant dense<0.000000e+00> : vector<16xf32>
    %550 = vector.multi_reduction <add>, %549, %cst_212 [1] : vector<16x32xf32> to vector<16xf32>
    %551 = vector.shape_cast %550 : vector<16xf32> to vector<16x1xf32>
    %cst_213 = arith.constant 3.200000e+01 : f32
    %552 = vector.broadcast %cst_213 : f32 to vector<16x1xf32>
    %553 = arith.divf %551, %552 : vector<16x1xf32>
    %cst_214 = arith.constant 9.99999997E-7 : f32
    %554 = vector.broadcast %cst_214 : f32 to vector<16x1xf32>
    %555 = arith.addf %553, %554 : vector<16x1xf32>
    %556 = math.rsqrt %555 : vector<16x1xf32>
    %557 = vector.broadcast %556 : vector<16x1xf32> to vector<16x32xf32>
    %558 = arith.mulf %548, %557 : vector<16x32xf32>
    %c0_215 = arith.constant 0 : index
    %c0_216 = arith.constant 0 : index
    %559 = vector.load %arg22[%c0_215, %c0_216] : memref<1x32xf32, #tpu.memory_space<vmem>>, vector<1x32xf32>
    %560 = vector.broadcast %559 : vector<1x32xf32> to vector<16x32xf32>
    %561 = arith.mulf %558, %560 : vector<16x32xf32>
    %cst_217 = arith.constant 0.176776692 : f32
    %562 = vector.broadcast %cst_217 : f32 to vector<16x32xf32>
    %563 = arith.mulf %561, %562 : vector<16x32xf32>
    %cst_218 = arith.constant dense<0.000000e+00> : vector<16x64xf32>
    %564 = tpu.matmul %563, %0, %cst_218 {dimension_numbers = #tpu.dot_dimension_numbers<[1], [1], [0], [0], [0, 0, 1, 0], [], []>} : vector<16x32xf32>, vector<64x32xf32>, vector<16x64xf32> -> vector<16x64xf32>
    %c0_219 = arith.constant 0 : index
    %c0_220 = arith.constant 0 : index
    %565 = vector.load %arg23[%c0_219, %c0_220] : memref<16x64xf32, #tpu.memory_space<vmem>>, vector<16x64xf32>
    tpu.vector_store %arg23[%c0_219, %c0_220], %564 {strides = array<i32>} : memref<16x64xf32, #tpu.memory_space<vmem>>, vector<16x64xf32>,
    return
  }
}

</mosaic_0001>

<llo_original>
// kernel: qa_classifier_forward.1
$region0: #{qa_classifier_forward.1}
  #allocation0 [shape = 'u32[]', space=smem, size = 0x4, offset = 0x4, fixed_abs, tag = 'smem constant byte address 0x4 - core index']
  #allocation1 [shape = 'u32[72,128]{1,0:T(1,128)}', space=vmem, size = 0x9000, scoped, tag = 'internal scratch']
  %s0 = inlined_call_operand.vmem [shape: s32[16,1], index: 0, kind: input, shape index: {}]
  %s1 = inlined_call_operand.vmem [shape: s32[16,1], index: 1, kind: input, shape index: {}]
  %s2 = inlined_call_operand.vmem [shape: f32[64,32], index: 2, kind: input, shape index: {}]
  %s3 = inlined_call_operand.vmem [shape: f32[4,8,8], index: 3, kind: input, shape index: {}]
  %s4 = inlined_call_operand.vmem [shape: f32[4,8,8], index: 4, kind: input, shape index: {}]
  %s5 = inlined_call_operand.vmem [shape: f32[1,32], index: 5, kind: input, shape index: {}]
  %s6 = inlined_call_operand.vmem [shape: f32[32,96], index: 6, kind: input, shape index: {}]
  %s7 = inlined_call_operand.vmem [shape: f32[32,32], index: 7, kind: input, shape index: {}]
  %s8 = inlined_call_operand.vmem [shape: f32[1,32], index: 8, kind: input, shape index: {}]
  %s9 = inlined_call_operand.vmem [shape: f32[32,64], index: 9, kind: input, shape index: {}]
  %s10 = inlined_call_operand.vmem [shape: f32[64,32], index: 10, kind: input, shape index: {}]
  %s11 = inlined_call_operand.vmem [shape: f32[1,32], index: 11, kind: input, shape index: {}]
  %s12 = inlined_call_operand.vmem [shape: f32[1,32], index: 12, kind: input, shape index: {}]
  %s13 = inlined_call_operand.vmem [shape: f32[32,96], index: 13, kind: input, shape index: {}]
  %s14 = inlined_call_operand.vmem [shape: f32[32,32], index: 14, kind: input, shape index: {}]
  %s15 = inlined_call_operand.vmem [shape: f32[1,32], index: 15, kind: input, shape index: {}]
  %s16 = inlined_call_operand.vmem [shape: f32[32,32], index: 16, kind: input, shape index: {}]
  %s17 = inlined_call_operand.vmem [shape: f32[32,64], index: 17, kind: input, shape index: {}]
  %s18 = inlined_call_operand.vmem [shape: f32[32,32], index: 18, kind: input, shape index: {}]
  %s19 = inlined_call_operand.vmem [shape: f32[1,32], index: 19, kind: input, shape index: {}]
  %s20 = inlined_call_operand.vmem [shape: f32[32,64], index: 20, kind: input, shape index: {}]
  %s21 = inlined_call_operand.vmem [shape: f32[64,32], index: 21, kind: input, shape index: {}]
  %s22 = inlined_call_operand.vmem [shape: f32[1,32], index: 22, kind: input, shape index: {}]
  %s23 = inlined_call_operand.hbm [shape: f32[16,64], index: 23, kind: output, shape index: {}]
  %s24 = sld [smem:[#allocation0]]
  $region102: #{qa_classifier_forward.1} parent=0
    _
  %s26 = ssub.s32 1, %s24
  %s27 = scalar_select 0, %s26, %s24
  $region1: #{qa_classifier_forward.1} parent=0
    #allocation2 [shape = 'u8[8192]{0}', space=vmem, size = 0x2000, scoped, tag = 'output window, operand 0, single buffered']
    #allocation3 [shape = 's32[1]{0}', space=sflag, size = 0x4, scoped, tag = 'scoped memory for qa_classifier_forward.1']
    %28 = vsyncpa [#allocation3], 0
    // Predicated region
    $region2: #{qa_classifier_forward.1} parent=1 // pred_check
      _
    $region3: #{qa_classifier_forward.1} parent=1 // pred_check_branch
      %30 = sbr.rel (0) target = $region5
    $region4: #{qa_classifier_forward.1} parent=1 // pred_region
      _
    $region5: #{qa_classifier_forward.1} parent=1 // pred_fallthru
      _
    // Predicated region
    $region6: #{qa_classifier_forward.1} parent=1 // pred_check
      _
    $region7: #{qa_classifier_forward.1} parent=1 // pred_check_branch
      %32 = sbr.rel (0) target = $region9
    $region8: #{qa_classifier_forward.1} parent=1 // pred_region
      _
    $region9: #{qa_classifier_forward.1} parent=1 // pred_fallthru
      _
    // Predicated region
    $region10: #{qa_classifier_forward.1} parent=1 // pred_check
      _
    $region11: #{qa_classifier_forward.1} parent=1 // pred_check_branch
      %34 = sbr.rel (0) target = $region13
    $region12: #{qa_classifier_forward.1} parent=1 // pred_region
      _
    $region13: #{qa_classifier_forward.1} parent=1 // pred_fallthru
      _
    // Predicated region
    $region14: #{qa_classifier_forward.1} parent=1 // pred_check
      _
    $region15: #{qa_classifier_forward.1} parent=1 // pred_check_branch
      %36 = sbr.rel (0) target = $region17
    $region16: #{qa_classifier_forward.1} parent=1 // pred_region
      _
    $region17: #{qa_classifier_forward.1} parent=1 // pred_fallthru
      _
    // Predicated region
    $region18: #{qa_classifier_forward.1} parent=1 // pred_check
      _
    $region19: #{qa_classifier_forward.1} parent=1 // pred_check_branch
      %38 = sbr.rel (0) target = $region21
    $region20: #{qa_classifier_forward.1} parent=1 // pred_region
      _
    $region21: #{qa_classifier_forward.1} parent=1 // pred_fallthru
      _
    // Predicated region
    $region22: #{qa_classifier_forward.1} parent=1 // pred_check
      _
    $region23: #{qa_classifier_forward.1} parent=1 // pred_check_branch
      %40 = sbr.rel (0) target = $region25
    $region24: #{qa_classifier_forward.1} parent=1 // pred_region
      _
    $region25: #{qa_classifier_forward.1} parent=1 // pred_fallthru
      _
    // Predicated region
    $region26: #{qa_classifier_forward.1} parent=1 // pred_check
      _
    $region27: #{qa_classifier_forward.1} parent=1 // pred_check_branch
      %42 = sbr.rel (0) target = $region29
    $region28: #{qa_classifier_forward.1} parent=1 // pred_region
      _
    $region29: #{qa_classifier_forward.1} parent=1 // pred_fallthru
      _
    // Predicated region
    $region30: #{qa_classifier_forward.1} parent=1 // pred_check
      _
    $region31: #{qa_classifier_forward.1} parent=1 // pred_check_branch
      %44 = sbr.rel (0) target = $region33
    $region32: #{qa_classifier_forward.1} parent=1 // pred_region
      _
    $region33: #{qa_classifier_forward.1} parent=1 // pred_fallthru
      _
    // Predicated region
    $region34: #{qa_classifier_forward.1} parent=1 // pred_check
      _
    $region35: #{qa_classifier_forward.1} parent=1 // pred_check_branch
      %46 = sbr.rel (0) target = $region37
    $region36: #{qa_classifier_forward.1} parent=1 // pred_region
      _
    $region37: #{qa_classifier_forward.1} parent=1 // pred_fallthru
      _
    // Predicated region
    $region38: #{qa_classifier_forward.1} parent=1 // pred_check
      _
    $region39: #{qa_classifier_forward.1} parent=1 // pred_check_branch
      %48 = sbr.rel (0) target = $region41
    $region40: #{qa_classifier_forward.1} parent=1 // pred_region
      _
    $region41: #{qa_classifier_forward.1} parent=1 // pred_fallthru
      _
    // Predicated region
    $region42: #{qa_classifier_forward.1} parent=1 // pred_check
      _
    $region43: #{qa_classifier_forward.1} parent=1 // pred_check_branch
      %50 = sbr.rel (0) target = $region45
    $region44: #{qa_classifier_forward.1} parent=1 // pred_region
      _
    $region45: #{qa_classifier_forward.1} parent=1 // pred_fallthru
      _
    // Predicated region
    $region46: #{qa_classifier_forward.1} parent=1 // pred_check
      _
    $region47: #{qa_classifier_forward.1} parent=1 // pred_check_branch
      %52 = sbr.rel (0) target = $region49
    $region48: #{qa_classifier_forward.1} parent=1 // pred_region
      _
    $region49: #{qa_classifier_forward.1} parent=1 // pred_fallthru
      _
    // Predicated region
    $region50: #{qa_classifier_forward.1} parent=1 // pred_check
      _
    $region51: #{qa_classifier_forward.1} parent=1 // pred_check_branch
      %54 = sbr.rel (0) target = $region53
    $region52: #{qa_classifier_forward.1} parent=1 // pred_region
      _
    $region53: #{qa_classifier_forward.1} parent=1 // pred_fallthru
      _
    // Predicated region
    $region54: #{qa_classifier_forward.1} parent=1 // pred_check
      _
    $region55: #{qa_classifier_forward.1} parent=1 // pred_check_branch
      %56 = sbr.rel (0) target = $region57
    $region56: #{qa_classifier_forward.1} parent=1 // pred_region
      _
    $region57: #{qa_classifier_forward.1} parent=1 // pred_fallthru
      _
    // Predicated region
    $region58: #{qa_classifier_forward.1} parent=1 // pred_check
      _
    $region59: #{qa_classifier_forward.1} parent=1 // pred_check_branch
      %58 = sbr.rel (0) target = $region61
    $region60: #{qa_classifier_forward.1} parent=1 // pred_region
      _
    $region61: #{qa_classifier_forward.1} parent=1 // pred_fallthru
      _
    // Predicated region
    $region62: #{qa_classifier_forward.1} parent=1 // pred_check
      _
    $region63: #{qa_classifier_forward.1} parent=1 // pred_check_branch
      %60 = sbr.rel (0) target = $region65
    $region64: #{qa_classifier_forward.1} parent=1 // pred_region
      _
    $region65: #{qa_classifier_forward.1} parent=1 // pred_fallthru
      _
    // Predicated region
    $region66: #{qa_classifier_forward.1} parent=1 // pred_check
      _
    $region67: #{qa_classifier_forward.1} parent=1 // pred_check_branch
      %62 = sbr.rel (0) target = $region69
    $region68: #{qa_classifier_forward.1} parent=1 // pred_region
      _
    $region69: #{qa_classifier_forward.1} parent=1 // pred_fallthru
      _
    // Predicated region
    $region70: #{qa_classifier_forward.1} parent=1 // pred_check
      _
    $region71: #{qa_classifier_forward.1} parent=1 // pred_check_branch
      %64 = sbr.rel (0) target = $region73
    $region72: #{qa_classifier_forward.1} parent=1 // pred_region
      _
    $region73: #{qa_classifier_forward.1} parent=1 // pred_fallthru
      _
    // Predicated region
    $region74: #{qa_classifier_forward.1} parent=1 // pred_check
      _
    $region75: #{qa_classifier_forward.1} parent=1 // pred_check_branch
      %66 = sbr.rel (0) target = $region77
    $region76: #{qa_classifier_forward.1} parent=1 // pred_region
      _
    $region77: #{qa_classifier_forward.1} parent=1 // pred_fallthru
      _
    // Predicated region
    $region78: #{qa_classifier_forward.1} parent=1 // pred_check
      _
    $region79: #{qa_classifier_forward.1} parent=1 // pred_check_branch
      %68 = sbr.rel (0) target = $region81
    $region80: #{qa_classifier_forward.1} parent=1 // pred_region
      _
    $region81: #{qa_classifier_forward.1} parent=1 // pred_fallthru
      _
    // Predicated region
    $region82: #{qa_classifier_forward.1} parent=1 // pred_check
      _
    $region83: #{qa_classifier_forward.1} parent=1 // pred_check_branch
      %70 = sbr.rel (0) target = $region85
    $region84: #{qa_classifier_forward.1} parent=1 // pred_region
      _
    $region85: #{qa_classifier_forward.1} parent=1 // pred_fallthru
      _
    // Predicated region
    $region86: #{qa_classifier_forward.1} parent=1 // pred_check
      _
    $region87: #{qa_classifier_forward.1} parent=1 // pred_check_branch
      %72 = sbr.rel (0) target = $region89
    $region88: #{qa_classifier_forward.1} parent=1 // pred_region
      _
    $region89: #{qa_classifier_forward.1} parent=1 // pred_fallthru
      _
    // Predicated region
    $region90: #{qa_classifier_forward.1} parent=1 // pred_check
      _
    $region91: #{qa_classifier_forward.1} parent=1 // pred_check_branch
      %74 = sbr.rel (0) target = $region93
    $region92: #{qa_classifier_forward.1} parent=1 // pred_region
      _
    $region93: #{qa_classifier_forward.1} parent=1 // pred_fallthru
      _
    %v75 = vld [vmem:[%s2] sm:$0xff]
    %v76 = vld [vmem:[%s2 + $0x8] sm:$0xff]
    %v77 = vld [vmem:[%s2 + $0x10] sm:$0xff]
    %v78 = vld [vmem:[%s2 + $0x18] sm:$0xff]
    %v79 = vld [vmem:[%s2 + $0x20] sm:$0xff]
    %v80 = vld [vmem:[%s2 + $0x28] sm:$0xff]
    %v81 = vld [vmem:[%s2 + $0x30] sm:$0xff]
    %v82 = vld [vmem:[%s2 + $0x38] sm:$0xff]
    %v83 = vld [vmem:[%s0] sm:$0xff]
    %v84 = vld [vmem:[%s0 + $0x8] sm:$0xff]
    %v85 = vlaneseq
    %v86 = vand.u32 %v85, 127
    %87 = vset.pattern.permute.xlu0 0
    %88 = vperm.xlu0 %87, %v83
    %v89 = vpop.permute.xlu0 %88
    %90 = vset.pattern.permute.xlu0 0
    %91 = vperm.xlu0 %90, %v84
    %v92 = vpop.permute.xlu0 %91
    %vm93 = vcmp.eq.s32.totalorder %v86, %v89
    %vm94 = vcmp.eq.s32.totalorder %v86, %v92
    %v95 = vsel %vm93, 1, 0
    %v96 = vsel %vm94, 1, 0
    %v97 = vcvt.s32.f32 %v95
    %v98 = vcvt.s32.f32 %v96
    %vm99 = vcmask 523264
    %v101 = vsel %vm99, %v97, 0
    %v104 = vsel %vm99, %v98, 0
    %106 = vmatpush.msra.mxu0 0.0
    %107 = vmatpush.msra.mxu0 0.0
    %108 = vmatpush.msra.mxu0 0.0
    %109 = vmatpush.msra.mxu0 0.0
    %110 = vmatpush.msra.mxu0 0.0
    %111 = vmatpush.msra.mxu0 0.0
    %112 = vmatpush.msra.mxu0 0.0
    %113 = vmatpush.msra.mxu0 0.0
    %114 = vmatpush.msra.mxu0 %v82
    %115 = vmatpush.msra.mxu0 %v81
    %116 = vmatpush.msra.mxu0 %v80
    %117 = vmatpush.msra.mxu0 %v79
    %118 = vmatpush.msra.mxu0 %v78
    %119 = vmatpush.msra.mxu0 %v77
    %120 = vmatpush.msra.mxu0 %v76
    %121 = vmatpush.msra.mxu0 %v75
    %122 = vmatmul.f32.gmra.mxu0 %v101
    %v123 = vpop.f32.mrf.mxu0
    %v124 = vadd.f32 0.0, %v123
    %125 = vmatmul.f32.gmra.mxu0 %v104
    %v126 = vpop.f32.mrf.mxu0
    %v127 = vadd.f32 0.0, %v126
    %128 = vdwg.mxu0
    %v129 = vmul.f32 %v124, %v124
    %v130 = vmul.f32 %v127, %v127
    %vm131 = vcmask 261120
    %v132 = vsel %vm131, %v129, 0.0
    %133 = vadd.xlane.f32.xlu0 %v132
    %v134 = vpop.xlane.xlu0 %133
    %v135 = vsel %vm131, %v130, 0.0
    %136 = vadd.xlane.f32.xlu0 %v135
    %v137 = vpop.xlane.xlu0 %136
    %v138 = vrcp.pop 32.0
    %v139 = vmul.f32 32.0, %v138
    %v140 = vsub.f32 1.0, %v139
    %v141 = vmul.f32 %v138, %v140
    %v142 = vadd.f32 %v138, %v141
    %vm143 = vweird.f32 %v138
    %v144 = vsel %vm143, %v138, %v142
    %v145 = vmul.f32 %v134, %v144
    %v146 = vmul.f32 %v137, %v144
    %v147 = vadd.f32 %v145, 1e-06
    %v148 = vadd.f32 %v146, 1e-06
    %v149 = vrsqrt.pop %v147
    %v150 = vmul.f32 %v149, %v147
    %v151 = vmul.f32 %v150, %v149
    %v152 = vmul.f32 0.5, %v151
    %v153 = vsub.f32 1.5, %v152
    %v154 = vmul.f32 %v149, %v153
    %vm155 = vweird.f32 %v147
    %vm156 = vweird.f32 %v149
    %vm157 = vmor %vm155, %vm156
    %v158 = vsel %vm157, %v149, %v154
    %v159 = vrsqrt.pop %v148
    %v160 = vmul.f32 %v159, %v148
    %v161 = vmul.f32 %v160, %v159
    %v162 = vmul.f32 0.5, %v161
    %v163 = vsub.f32 1.5, %v162
    %v164 = vmul.f32 %v159, %v163
    %vm165 = vweird.f32 %v148
    %vm166 = vweird.f32 %v159
    %vm167 = vmor %vm165, %vm166
    %v168 = vsel %vm167, %v159, %v164
    %v169 = vmul.f32 %v124, %v158
    %v170 = vmul.f32 %v127, %v168
    %v171 = vld [vmem:[%s5] sm:$0x1]
    %v173 = vperm.slane %v171, 0
    %v175 = vmul.f32 %v169, %v173
    %v176 = vmul.f32 %v170, %v173
    %v177 = vld [vmem:[%s6] sm:$0xff]
    %v178 = vld [vmem:[%s6 + $0x8] sm:$0xff]
    %v179 = vld [vmem:[%s6 + $0x10] sm:$0xff]
    %v180 = vld [vmem:[%s6 + $0x18] sm:$0xff]
    %v182 = vsel %vm131, %v175, 0
    %v185 = vsel %vm131, %v176, 0
    %187 = vmatpush.msra.mxu0 0.0
    %188 = vmatpush.msra.mxu0 0.0
    %189 = vmatpush.msra.mxu0 0.0
    %190 = vmatpush.msra.mxu0 0.0
    %191 = vmatpush.msra.mxu0 0.0
    %192 = vmatpush.msra.mxu0 0.0
    %193 = vmatpush.msra.mxu0 0.0
    %194 = vmatpush.msra.mxu0 0.0
    %195 = vmatpush.msra.mxu0 0.0
    %196 = vmatpush.msra.mxu0 0.0
    %197 = vmatpush.msra.mxu0 0.0
    %198 = vmatpush.msra.mxu0 0.0
    %199 = vmatpush.msra.mxu0 %v180
    %200 = vmatpush.msra.mxu0 %v179
    %201 = vmatpush.msra.mxu0 %v178
    %202 = vmatpush.msra.mxu0 %v177
    %203 = vmatmul.f32.gmra.mxu0 %v182
    %v204 = vpop.f32.mrf.mxu0
    %v205 = vadd.f32 0.0, %v204
    %206 = vmatmul.f32.gmra.mxu0 %v185
    %v207 = vpop.f32.mrf.mxu0
    %v208 = vadd.f32 0.0, %v207
    %209 = vdwg.mxu0
    %v210 = vld [vmem:[%s3] sm:$0xff]
    %212 = vrot.lane.b32.xlu0 %v205, 96
    %v213 = vpop.permute.xlu0 %212
    %vm214 = vcmask 64512
    %v215 = vsel %vm214, %v205, 0
    %v217 = vsel %vm214, %v213, 0
    %219 = vmatpush.xpose.msra.mxu0 0.0
    %220 = vmatpush.xpose.msra.mxu0 0.0
    %221 = vmatpush.xpose.msra.mxu0 0.0
    %222 = vmatpush.xpose.msra.mxu0 0.0
    %223 = vmatpush.xpose.msra.mxu0 0.0
    %224 = vmatpush.xpose.msra.mxu0 0.0
    %225 = vmatpush.xpose.msra.mxu0 0.0
    %226 = vmatpush.xpose.msra.mxu0 0.0
    %227 = vmatpush.xpose.msra.mxu0 0.0
    %228 = vmatpush.xpose.msra.mxu0 0.0
    %229 = vmatpush.xpose.msra.mxu0 0.0
    %230 = vmatpush.xpose.msra.mxu0 0.0
    %231 = vmatpush.xpose.msra.mxu0 0.0
    %232 = vmatpush.xpose.msra.mxu0 0.0
    %233 = vmatpush.xpose.msra.mxu0 0.0
    %234 = vmatpush.xpose.msra.mxu0 %v217
    %235 = vmatmul.f32.gmra.mxu0 %v215
    %v236 = vpop.f32.mrf.mxu0
    %v237 = vadd.f32 %v210, %v236
    %238 = vdwg.mxu0
    %v239 = vsel %vm214, %v237, -inf
    %240 = vmax.xlane.f32.xlu0 %v239
    %v241 = vpop.xlane.xlu0 %240
    %v242 = vsub.f32 %v237, %v241
    %v243 = vmul.f32 %v242, 1.442695
    %v244 = vpow.pop %v243
    %v245 = vsel %vm214, %v244, 0.0
    %246 = vadd.xlane.f32.xlu0 %v245
    %v247 = vpop.xlane.xlu0 %246
    %v248 = vrcp.pop %v247
    %v249 = vmul.f32 %v244, %v248
    %250 = vrot.lane.b32.xlu0 %v205, 64
    %v251 = vpop.permute.xlu0 %250
    %v254 = vsel %vm214, %v249, 0
    %256 = vmatpush.msra.mxu0 0.0
    %257 = vmatpush.msra.mxu0 0.0
    %258 = vmatpush.msra.mxu0 0.0
    %259 = vmatpush.msra.mxu0 0.0
    %260 = vmatpush.msra.mxu0 0.0
    %261 = vmatpush.msra.mxu0 0.0
    %262 = vmatpush.msra.mxu0 0.0
    %263 = vmatpush.msra.mxu0 0.0
    %264 = vmatpush.msra.mxu0 0.0
    %265 = vmatpush.msra.mxu0 0.0
    %266 = vmatpush.msra.mxu0 0.0
    %267 = vmatpush.msra.mxu0 0.0
    %268 = vmatpush.msra.mxu0 0.0
    %269 = vmatpush.msra.mxu0 0.0
    %270 = vmatpush.msra.mxu0 0.0
    %271 = vmatpush.msra.mxu0 %v251
    %272 = vmatmul.f32.gmra.mxu0 %v254
    %v273 = vpop.f32.mrf.mxu0
    %v274 = vadd.f32 0.0, %v273
    %275 = vdwg.mxu0
    %s276 = scalar_lea.vmem %s3, 8
    %v277 = vld [vmem:[%s276] sm:$0xff]
    %278 = vrot.lane.b32.xlu0 %v205, 120
    %v279 = vpop.permute.xlu0 %278
    %280 = vrot.lane.b32.xlu0 %v205, 88
    %v281 = vpop.permute.xlu0 %280
    %v282 = vsel %vm214, %v279, 0
    %v284 = vsel %vm214, %v281, 0
    %286 = vmatpush.xpose.msra.mxu0 0.0
    %287 = vmatpush.xpose.msra.mxu0 0.0
    %288 = vmatpush.xpose.msra.mxu0 0.0
    %289 = vmatpush.xpose.msra.mxu0 0.0
    %290 = vmatpush.xpose.msra.mxu0 0.0
    %291 = vmatpush.xpose.msra.mxu0 0.0
    %292 = vmatpush.xpose.msra.mxu0 0.0
    %293 = vmatpush.xpose.msra.mxu0 0.0
    %294 = vmatpush.xpose.msra.mxu0 0.0
    %295 = vmatpush.xpose.msra.mxu0 0.0
    %296 = vmatpush.xpose.msra.mxu0 0.0
    %297 = vmatpush.xpose.msra.mxu0 0.0
    %298 = vmatpush.xpose.msra.mxu0 0.0
    %299 = vmatpush.xpose.msra.mxu0 0.0
    %300 = vmatpush.xpose.msra.mxu0 0.0
    %301 = vmatpush.xpose.msra.mxu0 %v284
    %302 = vmatmul.f32.gmra.mxu0 %v282
    %v303 = vpop.f32.mrf.mxu0
    %v304 = vadd.f32 %v277, %v303
    %305 = vdwg.mxu0
    %v306 = vsel %vm214, %v304, -inf
    %307 = vmax.xlane.f32.xlu0 %v306
    %v308 = vpop.xlane.xlu0 %307
    %v309 = vsub.f32 %v304, %v308
    %v310 = vmul.f32 %v309, 1.442695
    %v311 = vpow.pop %v310
    %v312 = vsel %vm214, %v311, 0.0
    %313 = vadd.xlane.f32.xlu0 %v312
    %v314 = vpop.xlane.xlu0 %313
    %v315 = vrcp.pop %v314
    %v316 = vmul.f32 %v311, %v315
    %317 = vrot.lane.b32.xlu0 %v205, 56
    %v318 = vpop.permute.xlu0 %317
    %v321 = vsel %vm214, %v316, 0
    %323 = vmatpush.msra.mxu0 0.0
    %324 = vmatpush.msra.mxu0 0.0
    %325 = vmatpush.msra.mxu0 0.0
    %326 = vmatpush.msra.mxu0 0.0
    %327 = vmatpush.msra.mxu0 0.0
    %328 = vmatpush.msra.mxu0 0.0
    %329 = vmatpush.msra.mxu0 0.0
    %330 = vmatpush.msra.mxu0 0.0
    %331 = vmatpush.msra.mxu0 0.0
    %332 = vmatpush.msra.mxu0 0.0
    %333 = vmatpush.msra.mxu0 0.0
    %334 = vmatpush.msra.mxu0 0.0
    %335 = vmatpush.msra.mxu0 0.0
    %336 = vmatpush.msra.mxu0 0.0
    %337 = vmatpush.msra.mxu0 0.0
    %338 = vmatpush.msra.mxu0 %v318
    %339 = vmatmul.f32.gmra.mxu0 %v321
    %v340 = vpop.f32.mrf.mxu0
    %v341 = vadd.f32 0.0, %v340
    %342 = vdwg.mxu0
    %s343 = scalar_lea.vmem %s3, 16
    %v344 = vld [vmem:[%s343] sm:$0xff]
    %345 = vrot.lane.b32.xlu0 %v205, 112
    %v346 = vpop.permute.xlu0 %345
    %347 = vrot.lane.b32.xlu0 %v205, 80
    %v348 = vpop.permute.xlu0 %347
    %v349 = vsel %vm214, %v346, 0
    %v351 = vsel %vm214, %v348, 0
    %353 = vmatpush.xpose.msra.mxu0 0.0
    %354 = vmatpush.xpose.msra.mxu0 0.0
    %355 = vmatpush.xpose.msra.mxu0 0.0
    %356 = vmatpush.xpose.msra.mxu0 0.0
    %357 = vmatpush.xpose.msra.mxu0 0.0
    %358 = vmatpush.xpose.msra.mxu0 0.0
    %359 = vmatpush.xpose.msra.mxu0 0.0
    %360 = vmatpush.xpose.msra.mxu0 0.0
    %361 = vmatpush.xpose.msra.mxu0 0.0
    %362 = vmatpush.xpose.msra.mxu0 0.0
    %363 = vmatpush.xpose.msra.mxu0 0.0
    %364 = vmatpush.xpose.msra.mxu0 0.0
    %365 = vmatpush.xpose.msra.mxu0 0.0
    %366 = vmatpush.xpose.msra.mxu0 0.0
    %367 = vmatpush.xpose.msra.mxu0 0.0
    %368 = vmatpush.xpose.msra.mxu0 %v351
    %369 = vmatmul.f32.gmra.mxu0 %v349
    %v370 = vpop.f32.mrf.mxu0
    %v371 = vadd.f32 %v344, %v370
    %372 = vdwg.mxu0
    %v373 = vsel %vm214, %v371, -inf
    %374 = vmax.xlane.f32.xlu0 %v373
    %v375 = vpop.xlane.xlu0 %374
    %v376 = vsub.f32 %v371, %v375
    %v377 = vmul.f32 %v376, 1.442695
    %v378 = vpow.pop %v377
    %v379 = vsel %vm214, %v378, 0.0
    %380 = vadd.xlane.f32.xlu0 %v379
    %v381 = vpop.xlane.xlu0 %380
    %v382 = vrcp.pop %v381
    %v383 = vmul.f32 %v378, %v382
    %384 = vrot.lane.b32.xlu0 %v205, 48
    %v385 = vpop.permute.xlu0 %384
    %v388 = vsel %vm214, %v383, 0
    %390 = vmatpush.msra.mxu0 0.0
    %391 = vmatpush.msra.mxu0 0.0
    %392 = vmatpush.msra.mxu0 0.0
    %393 = vmatpush.msra.mxu0 0.0
    %394 = vmatpush.msra.mxu0 0.0
    %395 = vmatpush.msra.mxu0 0.0
    %396 = vmatpush.msra.mxu0 0.0
    %397 = vmatpush.msra.mxu0 0.0
    %398 = vmatpush.msra.mxu0 0.0
    %399 = vmatpush.msra.mxu0 0.0
    %400 = vmatpush.msra.mxu0 0.0
    %401 = vmatpush.msra.mxu0 0.0
    %402 = vmatpush.msra.mxu0 0.0
    %403 = vmatpush.msra.mxu0 0.0
    %404 = vmatpush.msra.mxu0 0.0
    %405 = vmatpush.msra.mxu0 %v385
    %406 = vmatmul.f32.gmra.mxu0 %v388
    %v407 = vpop.f32.mrf.mxu0
    %v408 = vadd.f32 0.0, %v407
    %409 = vdwg.mxu0
    %s410 = scalar_lea.vmem %s3, 24
    %v411 = vld [vmem:[%s410] sm:$0xff]
    %412 = vrot.lane.b32.xlu0 %v205, 104
    %v413 = vpop.permute.xlu0 %412
    %414 = vrot.lane.b32.xlu0 %v205, 72
    %v415 = vpop.permute.xlu0 %414
    %v416 = vsel %vm214, %v413, 0
    %v418 = vsel %vm214, %v415, 0
    %420 = vmatpush.xpose.msra.mxu0 0.0
    %421 = vmatpush.xpose.msra.mxu0 0.0
    %422 = vmatpush.xpose.msra.mxu0 0.0
    %423 = vmatpush.xpose.msra.mxu0 0.0
    %424 = vmatpush.xpose.msra.mxu0 0.0
    %425 = vmatpush.xpose.msra.mxu0 0.0
    %426 = vmatpush.xpose.msra.mxu0 0.0
    %427 = vmatpush.xpose.msra.mxu0 0.0
    %428 = vmatpush.xpose.msra.mxu0 0.0
    %429 = vmatpush.xpose.msra.mxu0 0.0
    %430 = vmatpush.xpose.msra.mxu0 0.0
    %431 = vmatpush.xpose.msra.mxu0 0.0
    %432 = vmatpush.xpose.msra.mxu0 0.0
    %433 = vmatpush.xpose.msra.mxu0 0.0
    %434 = vmatpush.xpose.msra.mxu0 0.0
    %435 = vmatpush.xpose.msra.mxu0 %v418
    %436 = vmatmul.f32.gmra.mxu0 %v416
    %v437 = vpop.f32.mrf.mxu0
    %v438 = vadd.f32 %v411, %v437
    %439 = vdwg.mxu0
    %v440 = vsel %vm214, %v438, -inf
    %441 = vmax.xlane.f32.xlu0 %v440
    %v442 = vpop.xlane.xlu0 %441
    %v443 = vsub.f32 %v438, %v442
    %v444 = vmul.f32 %v443, 1.442695
    %v445 = vpow.pop %v444
    %v446 = vsel %vm214, %v445, 0.0
    %447 = vadd.xlane.f32.xlu0 %v446
    %v448 = vpop.xlane.xlu0 %447
    %v449 = vrcp.pop %v448
    %v450 = vmul.f32 %v445, %v449
    %451 = vrot.lane.b32.xlu0 %v205, 40
    %v452 = vpop.permute.xlu0 %451
    %v455 = vsel %vm214, %v450, 0
    %457 = vmatpush.msra.mxu0 0.0
    %458 = vmatpush.msra.mxu0 0.0
    %459 = vmatpush.msra.mxu0 0.0
    %460 = vmatpush.msra.mxu0 0.0
    %461 = vmatpush.msra.mxu0 0.0
    %462 = vmatpush.msra.mxu0 0.0
    %463 = vmatpush.msra.mxu0 0.0
    %464 = vmatpush.msra.mxu0 0.0
    %465 = vmatpush.msra.mxu0 0.0
    %466 = vmatpush.msra.mxu0 0.0
    %467 = vmatpush.msra.mxu0 0.0
    %468 = vmatpush.msra.mxu0 0.0
    %469 = vmatpush.msra.mxu0 0.0
    %470 = vmatpush.msra.mxu0 0.0
    %471 = vmatpush.msra.mxu0 0.0
    %472 = vmatpush.msra.mxu0 %v452
    %473 = vmatmul.f32.gmra.mxu0 %v455
    %v474 = vpop.f32.mrf.mxu0
    %v475 = vadd.f32 0.0, %v474
    %476 = vdwg.mxu0
    %478 = vrot.lane.b32.xlu0 %v341, 8
    %v479 = vpop.permute.xlu0 %478
    %482 = vrot.lane.b32.xlu0 %v408, 16
    %v483 = vpop.permute.xlu0 %482
    %486 = vrot.lane.b32.xlu0 %v475, 24
    %v487 = vpop.permute.xlu0 %486
    %v489 = vsel %vm214, %v274, %v479
    %vm490 = vcmask 130048
    %v491 = vsel %vm490, %v489, %v483
    %vm492 = vcmask 195584
    %v493 = vsel %vm492, %v491, %v487
    %495 = vrot.lane.b32.xlu0 %v208, 96
    %v496 = vpop.permute.xlu0 %495
    %v497 = vsel %vm214, %v208, 0
    %v499 = vsel %vm214, %v496, 0
    %501 = vmatpush.xpose.msra.mxu0 0.0
    %502 = vmatpush.xpose.msra.mxu0 0.0
    %503 = vmatpush.xpose.msra.mxu0 0.0
    %504 = vmatpush.xpose.msra.mxu0 0.0
    %505 = vmatpush.xpose.msra.mxu0 0.0
    %506 = vmatpush.xpose.msra.mxu0 0.0
    %507 = vmatpush.xpose.msra.mxu0 0.0
    %508 = vmatpush.xpose.msra.mxu0 0.0
    %509 = vmatpush.xpose.msra.mxu0 0.0
    %510 = vmatpush.xpose.msra.mxu0 0.0
    %511 = vmatpush.xpose.msra.mxu0 0.0
    %512 = vmatpush.xpose.msra.mxu0 0.0
    %513 = vmatpush.xpose.msra.mxu0 0.0
    %514 = vmatpush.xpose.msra.mxu0 0.0
    %515 = vmatpush.xpose.msra.mxu0 0.0
    %516 = vmatpush.xpose.msra.mxu0 %v499
    %517 = vmatmul.f32.gmra.mxu0 %v497
    %v518 = vpop.f32.mrf.mxu0
    %v519 = vadd.f32 %v210, %v518
    %520 = vdwg.mxu0
    %v521 = vsel %vm214, %v519, -inf
    %522 = vmax.xlane.f32.xlu0 %v521
    %v523 = vpop.xlane.xlu0 %522
    %v524 = vsub.f32 %v519, %v523
    %v525 = vmul.f32 %v524, 1.442695
    %v526 = vpow.pop %v525
    %v527 = vsel %vm214, %v526, 0.0
    %528 = vadd.xlane.f32.xlu0 %v527
    %v529 = vpop.xlane.xlu0 %528
    %v530 = vrcp.pop %v529
    %v531 = vmul.f32 %v526, %v530
    %532 = vrot.lane.b32.xlu0 %v208, 64
    %v533 = vpop.permute.xlu0 %532
    %v536 = vsel %vm214, %v531, 0
    %538 = vmatpush.msra.mxu0 0.0
    %539 = vmatpush.msra.mxu0 0.0
    %540 = vmatpush.msra.mxu0 0.0
    %541 = vmatpush.msra.mxu0 0.0
    %542 = vmatpush.msra.mxu0 0.0
    %543 = vmatpush.msra.mxu0 0.0
    %544 = vmatpush.msra.mxu0 0.0
    %545 = vmatpush.msra.mxu0 0.0
    %546 = vmatpush.msra.mxu0 0.0
    %547 = vmatpush.msra.mxu0 0.0
    %548 = vmatpush.msra.mxu0 0.0
    %549 = vmatpush.msra.mxu0 0.0
    %550 = vmatpush.msra.mxu0 0.0
    %551 = vmatpush.msra.mxu0 0.0
    %552 = vmatpush.msra.mxu0 0.0
    %553 = vmatpush.msra.mxu0 %v533
    %554 = vmatmul.f32.gmra.mxu0 %v536
    %v555 = vpop.f32.mrf.mxu0
    %v556 = vadd.f32 0.0, %v555
    %557 = vdwg.mxu0
    %558 = vrot.lane.b32.xlu0 %v208, 120
    %v559 = vpop.permute.xlu0 %558
    %560 = vrot.lane.b32.xlu0 %v208, 88
    %v561 = vpop.permute.xlu0 %560
    %v562 = vsel %vm214, %v559, 0
    %v564 = vsel %vm214, %v561, 0
    %566 = vmatpush.xpose.msra.mxu0 0.0
    %567 = vmatpush.xpose.msra.mxu0 0.0
    %568 = vmatpush.xpose.msra.mxu0 0.0
    %569 = vmatpush.xpose.msra.mxu0 0.0
    %570 = vmatpush.xpose.msra.mxu0 0.0
    %571 = vmatpush.xpose.msra.mxu0 0.0
    %572 = vmatpush.xpose.msra.mxu0 0.0
    %573 = vmatpush.xpose.msra.mxu0 0.0
    %574 = vmatpush.xpose.msra.mxu0 0.0
    %575 = vmatpush.xpose.msra.mxu0 0.0
    %576 = vmatpush.xpose.msra.mxu0 0.0
    %577 = vmatpush.xpose.msra.mxu0 0.0
    %578 = vmatpush.xpose.msra.mxu0 0.0
    %579 = vmatpush.xpose.msra.mxu0 0.0
    %580 = vmatpush.xpose.msra.mxu0 0.0
    %581 = vmatpush.xpose.msra.mxu0 %v564
    %582 = vmatmul.f32.gmra.mxu0 %v562
    %v583 = vpop.f32.mrf.mxu0
    %v584 = vadd.f32 %v277, %v583
    %585 = vdwg.mxu0
    %v586 = vsel %vm214, %v584, -inf
    %587 = vmax.xlane.f32.xlu0 %v586
    %v588 = vpop.xlane.xlu0 %587
    %v589 = vsub.f32 %v584, %v588
    %v590 = vmul.f32 %v589, 1.442695
    %v591 = vpow.pop %v590
    %v592 = vsel %vm214, %v591, 0.0
    %593 = vadd.xlane.f32.xlu0 %v592
    %v594 = vpop.xlane.xlu0 %593
    %v595 = vrcp.pop %v594
    %v596 = vmul.f32 %v591, %v595
    %597 = vrot.lane.b32.xlu0 %v208, 56
    %v598 = vpop.permute.xlu0 %597
    %v601 = vsel %vm214, %v596, 0
    %603 = vmatpush.msra.mxu0 0.0
    %604 = vmatpush.msra.mxu0 0.0
    %605 = vmatpush.msra.mxu0 0.0
    %606 = vmatpush.msra.mxu0 0.0
    %607 = vmatpush.msra.mxu0 0.0
    %608 = vmatpush.msra.mxu0 0.0
    %609 = vmatpush.msra.mxu0 0.0
    %610 = vmatpush.msra.mxu0 0.0
    %611 = vmatpush.msra.mxu0 0.0
    %612 = vmatpush.msra.mxu0 0.0
    %613 = vmatpush.msra.mxu0 0.0
    %614 = vmatpush.msra.mxu0 0.0
    %615 = vmatpush.msra.mxu0 0.0
    %616 = vmatpush.msra.mxu0 0.0
    %617 = vmatpush.msra.mxu0 0.0
    %618 = vmatpush.msra.mxu0 %v598
    %619 = vmatmul.f32.gmra.mxu0 %v601
    %v620 = vpop.f32.mrf.mxu0
    %v621 = vadd.f32 0.0, %v620
    %622 = vdwg.mxu0
    %623 = vrot.lane.b32.xlu0 %v208, 112
    %v624 = vpop.permute.xlu0 %623
    %625 = vrot.lane.b32.xlu0 %v208, 80
    %v626 = vpop.permute.xlu0 %625
    %v627 = vsel %vm214, %v624, 0
    %v629 = vsel %vm214, %v626, 0
    %631 = vmatpush.xpose.msra.mxu0 0.0
    %632 = vmatpush.xpose.msra.mxu0 0.0
    %633 = vmatpush.xpose.msra.mxu0 0.0
    %634 = vmatpush.xpose.msra.mxu0 0.0
    %635 = vmatpush.xpose.msra.mxu0 0.0
    %636 = vmatpush.xpose.msra.mxu0 0.0
    %637 = vmatpush.xpose.msra.mxu0 0.0
    %638 = vmatpush.xpose.msra.mxu0 0.0
    %639 = vmatpush.xpose.msra.mxu0 0.0
    %640 = vmatpush.xpose.msra.mxu0 0.0
    %641 = vmatpush.xpose.msra.mxu0 0.0
    %642 = vmatpush.xpose.msra.mxu0 0.0
    %643 = vmatpush.xpose.msra.mxu0 0.0
    %644 = vmatpush.xpose.msra.mxu0 0.0
    %645 = vmatpush.xpose.msra.mxu0 0.0
    %646 = vmatpush.xpose.msra.mxu0 %v629
    %647 = vmatmul.f32.gmra.mxu0 %v627
    %v648 = vpop.f32.mrf.mxu0
    %v649 = vadd.f32 %v344, %v648
    %650 = vdwg.mxu0
    %v651 = vsel %vm214, %v649, -inf
    %652 = vmax.xlane.f32.xlu0 %v651
    %v653 = vpop.xlane.xlu0 %652
    %v654 = vsub.f32 %v649, %v653
    %v655 = vmul.f32 %v654, 1.442695
    %v656 = vpow.pop %v655
    %v657 = vsel %vm214, %v656, 0.0
    %658 = vadd.xlane.f32.xlu0 %v657
    %v659 = vpop.xlane.xlu0 %658
    %v660 = vrcp.pop %v659
    %v661 = vmul.f32 %v656, %v660
    %662 = vrot.lane.b32.xlu0 %v208, 48
    %v663 = vpop.permute.xlu0 %662
    %v666 = vsel %vm214, %v661, 0
    %668 = vmatpush.msra.mxu0 0.0
    %669 = vmatpush.msra.mxu0 0.0
    %670 = vmatpush.msra.mxu0 0.0
    %671 = vmatpush.msra.mxu0 0.0
    %672 = vmatpush.msra.mxu0 0.0
    %673 = vmatpush.msra.mxu0 0.0
    %674 = vmatpush.msra.mxu0 0.0
    %675 = vmatpush.msra.mxu0 0.0
    %676 = vmatpush.msra.mxu0 0.0
    %677 = vmatpush.msra.mxu0 0.0
    %678 = vmatpush.msra.mxu0 0.0
    %679 = vmatpush.msra.mxu0 0.0
    %680 = vmatpush.msra.mxu0 0.0
    %681 = vmatpush.msra.mxu0 0.0
    %682 = vmatpush.msra.mxu0 0.0
    %683 = vmatpush.msra.mxu0 %v663
    %684 = vmatmul.f32.gmra.mxu0 %v666
    %v685 = vpop.f32.mrf.mxu0
    %v686 = vadd.f32 0.0, %v685
    %687 = vdwg.mxu0
    %688 = vrot.lane.b32.xlu0 %v208, 104
    %v689 = vpop.permute.xlu0 %688
    %690 = vrot.lane.b32.xlu0 %v208, 72
    %v691 = vpop.permute.xlu0 %690
    %v692 = vsel %vm214, %v689, 0
    %v694 = vsel %vm214, %v691, 0
    %696 = vmatpush.xpose.msra.mxu0 0.0
    %697 = vmatpush.xpose.msra.mxu0 0.0
    %698 = vmatpush.xpose.msra.mxu0 0.0
    %699 = vmatpush.xpose.msra.mxu0 0.0
    %700 = vmatpush.xpose.msra.mxu0 0.0
    %701 = vmatpush.xpose.msra.mxu0 0.0
    %702 = vmatpush.xpose.msra.mxu0 0.0
    %703 = vmatpush.xpose.msra.mxu0 0.0
    %704 = vmatpush.xpose.msra.mxu0 0.0
    %705 = vmatpush.xpose.msra.mxu0 0.0
    %706 = vmatpush.xpose.msra.mxu0 0.0
    %707 = vmatpush.xpose.msra.mxu0 0.0
    %708 = vmatpush.xpose.msra.mxu0 0.0
    %709 = vmatpush.xpose.msra.mxu0 0.0
    %710 = vmatpush.xpose.msra.mxu0 0.0
    %711 = vmatpush.xpose.msra.mxu0 %v694
    %712 = vmatmul.f32.gmra.mxu0 %v692
    %v713 = vpop.f32.mrf.mxu0
    %v714 = vadd.f32 %v411, %v713
    %715 = vdwg.mxu0
    %v716 = vsel %vm214, %v714, -inf
    %717 = vmax.xlane.f32.xlu0 %v716
    %v718 = vpop.xlane.xlu0 %717
    %v719 = vsub.f32 %v714, %v718
    %v720 = vmul.f32 %v719, 1.442695
    %v721 = vpow.pop %v720
    %v722 = vsel %vm214, %v721, 0.0
    %723 = vadd.xlane.f32.xlu0 %v722
    %v724 = vpop.xlane.xlu0 %723
    %v725 = vrcp.pop %v724
    %v726 = vmul.f32 %v721, %v725
    %727 = vrot.lane.b32.xlu0 %v208, 40
    %v728 = vpop.permute.xlu0 %727
    %v731 = vsel %vm214, %v726, 0
    %733 = vmatpush.msra.mxu0 0.0
    %734 = vmatpush.msra.mxu0 0.0
    %735 = vmatpush.msra.mxu0 0.0
    %736 = vmatpush.msra.mxu0 0.0
    %737 = vmatpush.msra.mxu0 0.0
    %738 = vmatpush.msra.mxu0 0.0
    %739 = vmatpush.msra.mxu0 0.0
    %740 = vmatpush.msra.mxu0 0.0
    %741 = vmatpush.msra.mxu0 0.0
    %742 = vmatpush.msra.mxu0 0.0
    %743 = vmatpush.msra.mxu0 0.0
    %744 = vmatpush.msra.mxu0 0.0
    %745 = vmatpush.msra.mxu0 0.0
    %746 = vmatpush.msra.mxu0 0.0
    %747 = vmatpush.msra.mxu0 0.0
    %748 = vmatpush.msra.mxu0 %v728
    %749 = vmatmul.f32.gmra.mxu0 %v731
    %v750 = vpop.f32.mrf.mxu0
    %v751 = vadd.f32 0.0, %v750
    %752 = vdwg.mxu0
    %754 = vrot.lane.b32.xlu0 %v621, 8
    %v755 = vpop.permute.xlu0 %754
    %758 = vrot.lane.b32.xlu0 %v686, 16
    %v759 = vpop.permute.xlu0 %758
    %762 = vrot.lane.b32.xlu0 %v751, 24
    %v763 = vpop.permute.xlu0 %762
    %v765 = vsel %vm214, %v556, %v755
    %v766 = vsel %vm490, %v765, %v759
    %v767 = vsel %vm492, %v766, %v763
    %v768 = vld [vmem:[%s7] sm:$0xff]
    %v769 = vld [vmem:[%s7 + $0x8] sm:$0xff]
    %v770 = vld [vmem:[%s7 + $0x10] sm:$0xff]
    %v771 = vld [vmem:[%s7 + $0x18] sm:$0xff]
    %v773 = vsel %vm131, %v493, 0
    %v776 = vsel %vm131, %v767, 0
    %778 = vmatpush.msra.mxu0 0.0
    %779 = vmatpush.msra.mxu0 0.0
    %780 = vmatpush.msra.mxu0 0.0
    %781 = vmatpush.msra.mxu0 0.0
    %782 = vmatpush.msra.mxu0 0.0
    %783 = vmatpush.msra.mxu0 0.0
    %784 = vmatpush.msra.mxu0 0.0
    %785 = vmatpush.msra.mxu0 0.0
    %786 = vmatpush.msra.mxu0 0.0
    %787 = vmatpush.msra.mxu0 0.0
    %788 = vmatpush.msra.mxu0 0.0
    %789 = vmatpush.msra.mxu0 0.0
    %790 = vmatpush.msra.mxu0 %v771
    %791 = vmatpush.msra.mxu0 %v770
    %792 = vmatpush.msra.mxu0 %v769
    %793 = vmatpush.msra.mxu0 %v768
    %794 = vmatmul.f32.gmra.mxu0 %v773
    %v795 = vpop.f32.mrf.mxu0
    %v796 = vadd.f32 0.0, %v795
    %797 = vmatmul.f32.gmra.mxu0 %v776
    %v798 = vpop.f32.mrf.mxu0
    %v799 = vadd.f32 0.0, %v798
    %800 = vdwg.mxu0
    %v801 = vadd.f32 %v124, %v796
    %v802 = vadd.f32 %v127, %v799
    %v803 = vmul.f32 %v801, %v801
    %v804 = vmul.f32 %v802, %v802
    %v805 = vsel %vm131, %v803, 0.0
    %806 = vadd.xlane.f32.xlu0 %v805
    %v807 = vpop.xlane.xlu0 %806
    %v808 = vsel %vm131, %v804, 0.0
    %809 = vadd.xlane.f32.xlu0 %v808
    %v810 = vpop.xlane.xlu0 %809
    %v811 = vmul.f32 %v807, %v144
    %v812 = vmul.f32 %v810, %v144
    %v813 = vadd.f32 %v811, 1e-06
    %v814 = vadd.f32 %v812, 1e-06
    %v815 = vrsqrt.pop %v813
    %v816 = vmul.f32 %v815, %v813
    %v817 = vmul.f32 %v816, %v815
    %v818 = vmul.f32 0.5, %v817
    %v819 = vsub.f32 1.5, %v818
    %v820 = vmul.f32 %v815, %v819
    %vm821 = vweird.f32 %v813
    %vm822 = vweird.f32 %v815
    %vm823 = vmor %vm821, %vm822
    %v824 = vsel %vm823, %v815, %v820
    %v825 = vrsqrt.pop %v814
    %v826 = vmul.f32 %v825, %v814
    %v827 = vmul.f32 %v826, %v825
    %v828 = vmul.f32 0.5, %v827
    %v829 = vsub.f32 1.5, %v828
    %v830 = vmul.f32 %v825, %v829
    %vm831 = vweird.f32 %v814
    %vm832 = vweird.f32 %v825
    %vm833 = vmor %vm831, %vm832
    %v834 = vsel %vm833, %v825, %v830
    %v835 = vmul.f32 %v801, %v824
    %v836 = vmul.f32 %v802, %v834
    %v837 = vld [vmem:[%s8] sm:$0x1]
    %v839 = vperm.slane %v837, 0
    %v841 = vmul.f32 %v835, %v839
    %v842 = vmul.f32 %v836, %v839
    %v843 = vld [vmem:[%s9] sm:$0xff]
    %v844 = vld [vmem:[%s9 + $0x8] sm:$0xff]
    %v845 = vld [vmem:[%s9 + $0x10] sm:$0xff]
    %v846 = vld [vmem:[%s9 + $0x18] sm:$0xff]
    %v848 = vsel %vm131, %v841, 0
    %v851 = vsel %vm131, %v842, 0
    %853 = vmatpush.msra.mxu0 0.0
    %854 = vmatpush.msra.mxu0 0.0
    %855 = vmatpush.msra.mxu0 0.0
    %856 = vmatpush.msra.mxu0 0.0
    %857 = vmatpush.msra.mxu0 0.0
    %858 = vmatpush.msra.mxu0 0.0
    %859 = vmatpush.msra.mxu0 0.0
    %860 = vmatpush.msra.mxu0 0.0
    %861 = vmatpush.msra.mxu0 0.0
    %862 = vmatpush.msra.mxu0 0.0
    %863 = vmatpush.msra.mxu0 0.0
    %864 = vmatpush.msra.mxu0 0.0
    %865 = vmatpush.msra.mxu0 %v846
    %866 = vmatpush.msra.mxu0 %v845
    %867 = vmatpush.msra.mxu0 %v844
    %868 = vmatpush.msra.mxu0 %v843
    %869 = vmatmul.f32.gmra.mxu0 %v848
    %v870 = vpop.f32.mrf.mxu0
    %v871 = vadd.f32 0.0, %v870
    %872 = vmatmul.f32.gmra.mxu0 %v851
    %v873 = vpop.f32.mrf.mxu0
    %v874 = vadd.f32 0.0, %v873
    %875 = vdwg.mxu0
    %v876 = vmax.f32 %v871, 0.0
    %v877 = vmax.f32 %v874, 0.0
    %v878 = vld [vmem:[%s10] sm:$0xff]
    %v879 = vld [vmem:[%s10 + $0x8] sm:$0xff]
    %v880 = vld [vmem:[%s10 + $0x10] sm:$0xff]
    %v881 = vld [vmem:[%s10 + $0x18] sm:$0xff]
    %v882 = vld [vmem:[%s10 + $0x20] sm:$0xff]
    %v883 = vld [vmem:[%s10 + $0x28] sm:$0xff]
    %v884 = vld [vmem:[%s10 + $0x30] sm:$0xff]
    %v885 = vld [vmem:[%s10 + $0x38] sm:$0xff]
    %v887 = vsel %vm99, %v876, 0
    %v890 = vsel %vm99, %v877, 0
    %892 = vmatpush.msra.mxu0 0.0
    %893 = vmatpush.msra.mxu0 0.0
    %894 = vmatpush.msra.mxu0 0.0
    %895 = vmatpush.msra.mxu0 0.0
    %896 = vmatpush.msra.mxu0 0.0
    %897 = vmatpush.msra.mxu0 0.0
    %898 = vmatpush.msra.mxu0 0.0
    %899 = vmatpush.msra.mxu0 0.0
    %900 = vmatpush.msra.mxu0 %v885
    %901 = vmatpush.msra.mxu0 %v884
    %902 = vmatpush.msra.mxu0 %v883
    %903 = vmatpush.msra.mxu0 %v882
    %904 = vmatpush.msra.mxu0 %v881
    %905 = vmatpush.msra.mxu0 %v880
    %906 = vmatpush.msra.mxu0 %v879
    %907 = vmatpush.msra.mxu0 %v878
    %908 = vmatmul.f32.gmra.mxu0 %v887
    %v909 = vpop.f32.mrf.mxu0
    %v910 = vadd.f32 0.0, %v909
    %911 = vmatmul.f32.gmra.mxu0 %v890
    %v912 = vpop.f32.mrf.mxu0
    %v913 = vadd.f32 0.0, %v912
    %914 = vdwg.mxu0
    %v915 = vadd.f32 %v801, %v910
    %v916 = vadd.f32 %v802, %v913
    %v917 = vmul.f32 %v915, %v915
    %v918 = vmul.f32 %v916, %v916
    %v919 = vsel %vm131, %v917, 0.0
    %920 = vadd.xlane.f32.xlu0 %v919
    %v921 = vpop.xlane.xlu0 %920
    %v922 = vsel %vm131, %v918, 0.0
    %923 = vadd.xlane.f32.xlu0 %v922
    %v924 = vpop.xlane.xlu0 %923
    %v925 = vmul.f32 %v921, %v144
    %v926 = vmul.f32 %v924, %v144
    %v927 = vadd.f32 %v925, 1e-06
    %v928 = vadd.f32 %v926, 1e-06
    %v929 = vrsqrt.pop %v927
    %v930 = vmul.f32 %v929, %v927
    %v931 = vmul.f32 %v930, %v929
    %v932 = vmul.f32 0.5, %v931
    %v933 = vsub.f32 1.5, %v932
    %v934 = vmul.f32 %v929, %v933
    %vm935 = vweird.f32 %v927
    %vm936 = vweird.f32 %v929
    %vm937 = vmor %vm935, %vm936
    %v938 = vsel %vm937, %v929, %v934
    %v939 = vrsqrt.pop %v928
    %v940 = vmul.f32 %v939, %v928
    %v941 = vmul.f32 %v940, %v939
    %v942 = vmul.f32 0.5, %v941
    %v943 = vsub.f32 1.5, %v942
    %v944 = vmul.f32 %v939, %v943
    %vm945 = vweird.f32 %v928
    %vm946 = vweird.f32 %v939
    %vm947 = vmor %vm945, %vm946
    %v948 = vsel %vm947, %v939, %v944
    %v949 = vmul.f32 %v915, %v938
    %v950 = vmul.f32 %v916, %v948
    %v951 = vld [vmem:[%s11] sm:$0x1]
    %v953 = vperm.slane %v951, 0
    %v955 = vmul.f32 %v949, %v953
    %v956 = vmul.f32 %v950, %v953
    %v957 = vld [vmem:[%s1] sm:$0xff]
    %v958 = vld [vmem:[%s1 + $0x8] sm:$0xff]
    %959 = vset.pattern.permute.xlu0 0
    %960 = vperm.xlu0 %959, %v957
    %v961 = vpop.permute.xlu0 %960
    %962 = vset.pattern.permute.xlu0 0
    %963 = vperm.xlu0 %962, %v958
    %v964 = vpop.permute.xlu0 %963
    %vm965 = vcmp.eq.s32.totalorder %v86, %v961
    %vm966 = vcmp.eq.s32.totalorder %v86, %v964
    %v967 = vsel %vm965, 1, 0
    %v968 = vsel %vm966, 1, 0
    %v969 = vcvt.s32.f32 %v967
    %v970 = vcvt.s32.f32 %v968
    %v972 = vsel %vm99, %v969, 0
    %v975 = vsel %vm99, %v970, 0
    %977 = vmatpush.msra.mxu0 0.0
    %978 = vmatpush.msra.mxu0 0.0
    %979 = vmatpush.msra.mxu0 0.0
    %980 = vmatpush.msra.mxu0 0.0
    %981 = vmatpush.msra.mxu0 0.0
    %982 = vmatpush.msra.mxu0 0.0
    %983 = vmatpush.msra.mxu0 0.0
    %984 = vmatpush.msra.mxu0 0.0
    %985 = vmatpush.msra.mxu0 %v82
    %986 = vmatpush.msra.mxu0 %v81
    %987 = vmatpush.msra.mxu0 %v80
    %988 = vmatpush.msra.mxu0 %v79
    %989 = vmatpush.msra.mxu0 %v78
    %990 = vmatpush.msra.mxu0 %v77
    %991 = vmatpush.msra.mxu0 %v76
    %992 = vmatpush.msra.mxu0 %v75
    %993 = vmatmul.f32.gmra.mxu0 %v972
    %v994 = vpop.f32.mrf.mxu0
    %v995 = vadd.f32 0.0, %v994
    %996 = vmatmul.f32.gmra.mxu0 %v975
    %v997 = vpop.f32.mrf.mxu0
    %v998 = vadd.f32 0.0, %v997
    %999 = vdwg.mxu0
    %v1000 = vmul.f32 %v995, %v995
    %v1001 = vmul.f32 %v998, %v998
    %v1002 = vsel %vm131, %v1000, 0.0
    %1003 = vadd.xlane.f32.xlu0 %v1002
    %v1004 = vpop.xlane.xlu0 %1003
    %v1005 = vsel %vm131, %v1001, 0.0
    %1006 = vadd.xlane.f32.xlu0 %v1005
    %v1007 = vpop.xlane.xlu0 %1006
    %v1008 = vmul.f32 %v1004, %v144
    %v1009 = vmul.f32 %v1007, %v144
    %v1010 = vadd.f32 %v1008, 1e-06
    %v1011 = vadd.f32 %v1009, 1e-06
    %v1012 = vrsqrt.pop %v1010
    %v1013 = vmul.f32 %v1012, %v1010
    %v1014 = vmul.f32 %v1013, %v1012
    %v1015 = vmul.f32 0.5, %v1014
    %v1016 = vsub.f32 1.5, %v1015
    %v1017 = vmul.f32 %v1012, %v1016
    %vm1018 = vweird.f32 %v1010
    %vm1019 = vweird.f32 %v1012
    %vm1020 = vmor %vm1018, %vm1019
    %v1021 = vsel %vm1020, %v1012, %v1017
    %v1022 = vrsqrt.pop %v1011
    %v1023 = vmul.f32 %v1022, %v1011
    %v1024 = vmul.f32 %v1023, %v1022
    %v1025 = vmul.f32 0.5, %v1024
    %v1026 = vsub.f32 1.5, %v1025
    %v1027 = vmul.f32 %v1022, %v1026
    %vm1028 = vweird.f32 %v1011
    %vm1029 = vweird.f32 %v1022
    %vm1030 = vmor %vm1028, %vm1029
    %v1031 = vsel %vm1030, %v1022, %v1027
    %v1032 = vmul.f32 %v995, %v1021
    %v1033 = vmul.f32 %v998, %v1031
    %v1034 = vld [vmem:[%s12] sm:$0x1]
    %v1036 = vperm.slane %v1034, 0
    %v1038 = vmul.f32 %v1032, %v1036
    %v1039 = vmul.f32 %v1033, %v1036
    %v1040 = vld [vmem:[%s13] sm:$0xff]
    %v1041 = vld [vmem:[%s13 + $0x8] sm:$0xff]
    %v1042 = vld [vmem:[%s13 + $0x10] sm:$0xff]
    %v1043 = vld [vmem:[%s13 + $0x18] sm:$0xff]
    %v1045 = vsel %vm131, %v1038, 0
    %v1048 = vsel %vm131, %v1039, 0
    %1050 = vmatpush.msra.mxu0 0.0
    %1051 = vmatpush.msra.mxu0 0.0
    %1052 = vmatpush.msra.mxu0 0.0
    %1053 = vmatpush.msra.mxu0 0.0
    %1054 = vmatpush.msra.mxu0 0.0
    %1055 = vmatpush.msra.mxu0 0.0
    %1056 = vmatpush.msra.mxu0 0.0
    %1057 = vmatpush.msra.mxu0 0.0
    %1058 = vmatpush.msra.mxu0 0.0
    %1059 = vmatpush.msra.mxu0 0.0
    %1060 = vmatpush.msra.mxu0 0.0
    %1061 = vmatpush.msra.mxu0 0.0
    %1062 = vmatpush.msra.mxu0 %v1043
    %1063 = vmatpush.msra.mxu0 %v1042
    %1064 = vmatpush.msra.mxu0 %v1041
    %1065 = vmatpush.msra.mxu0 %v1040
    %1066 = vmatmul.f32.gmra.mxu0 %v1045
    %v1067 = vpop.f32.mrf.mxu0
    %v1068 = vadd.f32 0.0, %v1067
    %1069 = vmatmul.f32.gmra.mxu0 %v1048
    %v1070 = vpop.f32.mrf.mxu0
    %v1071 = vadd.f32 0.0, %v1070
    %1072 = vdwg.mxu0
    %v1073 = vld [vmem:[%s4] sm:$0xff]
    %1075 = vrot.lane.b32.xlu0 %v1068, 96
    %v1076 = vpop.permute.xlu0 %1075
    %v1077 = vsel %vm214, %v1068, 0
    %v1079 = vsel %vm214, %v1076, 0
    %1081 = vmatpush.xpose.msra.mxu0 0.0
    %1082 = vmatpush.xpose.msra.mxu0 0.0
    %1083 = vmatpush.xpose.msra.mxu0 0.0
    %1084 = vmatpush.xpose.msra.mxu0 0.0
    %1085 = vmatpush.xpose.msra.mxu0 0.0
    %1086 = vmatpush.xpose.msra.mxu0 0.0
    %1087 = vmatpush.xpose.msra.mxu0 0.0
    %1088 = vmatpush.xpose.msra.mxu0 0.0
    %1089 = vmatpush.xpose.msra.mxu0 0.0
    %1090 = vmatpush.xpose.msra.mxu0 0.0
    %1091 = vmatpush.xpose.msra.mxu0 0.0
    %1092 = vmatpush.xpose.msra.mxu0 0.0
    %1093 = vmatpush.xpose.msra.mxu0 0.0
    %1094 = vmatpush.xpose.msra.mxu0 0.0
    %1095 = vmatpush.xpose.msra.mxu0 0.0
    %1096 = vmatpush.xpose.msra.mxu0 %v1079
    %1097 = vmatmul.f32.gmra.mxu0 %v1077
    %v1098 = vpop.f32.mrf.mxu0
    %v1099 = vadd.f32 %v1073, %v1098
    %1100 = vdwg.mxu0
    %v1101 = vsel %vm214, %v1099, -inf
    %1102 = vmax.xlane.f32.xlu0 %v1101
    %v1103 = vpop.xlane.xlu0 %1102
    %v1104 = vsub.f32 %v1099, %v1103
    %v1105 = vmul.f32 %v1104, 1.442695
    %v1106 = vpow.pop %v1105
    %v1107 = vsel %vm214, %v1106, 0.0
    %1108 = vadd.xlane.f32.xlu0 %v1107
    %v1109 = vpop.xlane.xlu0 %1108
    %v1110 = vrcp.pop %v1109
    %v1111 = vmul.f32 %v1106, %v1110
    %1112 = vrot.lane.b32.xlu0 %v1068, 64
    %v1113 = vpop.permute.xlu0 %1112
    %v1116 = vsel %vm214, %v1111, 0
    %1118 = vmatpush.msra.mxu0 0.0
    %1119 = vmatpush.msra.mxu0 0.0
    %1120 = vmatpush.msra.mxu0 0.0
    %1121 = vmatpush.msra.mxu0 0.0
    %1122 = vmatpush.msra.mxu0 0.0
    %1123 = vmatpush.msra.mxu0 0.0
    %1124 = vmatpush.msra.mxu0 0.0
    %1125 = vmatpush.msra.mxu0 0.0
    %1126 = vmatpush.msra.mxu0 0.0
    %1127 = vmatpush.msra.mxu0 0.0
    %1128 = vmatpush.msra.mxu0 0.0
    %1129 = vmatpush.msra.mxu0 0.0
    %1130 = vmatpush.msra.mxu0 0.0
    %1131 = vmatpush.msra.mxu0 0.0
    %1132 = vmatpush.msra.mxu0 0.0
    %1133 = vmatpush.msra.mxu0 %v1113
    %1134 = vmatmul.f32.gmra.mxu0 %v1116
    %v1135 = vpop.f32.mrf.mxu0
    %v1136 = vadd.f32 0.0, %v1135
    %1137 = vdwg.mxu0
    %s1138 = scalar_lea.vmem %s4, 8
    %v1139 = vld [vmem:[%s1138] sm:$0xff]
    %1140 = vrot.lane.b32.xlu0 %v1068, 120
    %v1141 = vpop.permute.xlu0 %1140
    %1142 = vrot.lane.b32.xlu0 %v1068, 88
    %v1143 = vpop.permute.xlu0 %1142
    %v1144 = vsel %vm214, %v1141, 0
    %v1146 = vsel %vm214, %v1143, 0
    %1148 = vmatpush.xpose.msra.mxu0 0.0
    %1149 = vmatpush.xpose.msra.mxu0 0.0
    %1150 = vmatpush.xpose.msra.mxu0 0.0
    %1151 = vmatpush.xpose.msra.mxu0 0.0
    %1152 = vmatpush.xpose.msra.mxu0 0.0
    %1153 = vmatpush.xpose.msra.mxu0 0.0
    %1154 = vmatpush.xpose.msra.mxu0 0.0
    %1155 = vmatpush.xpose.msra.mxu0 0.0
    %1156 = vmatpush.xpose.msra.mxu0 0.0
    %1157 = vmatpush.xpose.msra.mxu0 0.0
    %1158 = vmatpush.xpose.msra.mxu0 0.0
    %1159 = vmatpush.xpose.msra.mxu0 0.0
    %1160 = vmatpush.xpose.msra.mxu0 0.0
    %1161 = vmatpush.xpose.msra.mxu0 0.0
    %1162 = vmatpush.xpose.msra.mxu0 0.0
    %1163 = vmatpush.xpose.msra.mxu0 %v1146
    %1164 = vmatmul.f32.gmra.mxu0 %v1144
    %v1165 = vpop.f32.mrf.mxu0
    %v1166 = vadd.f32 %v1139, %v1165
    %1167 = vdwg.mxu0
    %v1168 = vsel %vm214, %v1166, -inf
    %1169 = vmax.xlane.f32.xlu0 %v1168
    %v1170 = vpop.xlane.xlu0 %1169
    %v1171 = vsub.f32 %v1166, %v1170
    %v1172 = vmul.f32 %v1171, 1.442695
    %v1173 = vpow.pop %v1172
    %v1174 = vsel %vm214, %v1173, 0.0
    %1175 = vadd.xlane.f32.xlu0 %v1174
    %v1176 = vpop.xlane.xlu0 %1175
    %v1177 = vrcp.pop %v1176
    %v1178 = vmul.f32 %v1173, %v1177
    %1179 = vrot.lane.b32.xlu0 %v1068, 56
    %v1180 = vpop.permute.xlu0 %1179
    %v1183 = vsel %vm214, %v1178, 0
    %1185 = vmatpush.msra.mxu0 0.0
    %1186 = vmatpush.msra.mxu0 0.0
    %1187 = vmatpush.msra.mxu0 0.0
    %1188 = vmatpush.msra.mxu0 0.0
    %1189 = vmatpush.msra.mxu0 0.0
    %1190 = vmatpush.msra.mxu0 0.0
    %1191 = vmatpush.msra.mxu0 0.0
    %1192 = vmatpush.msra.mxu0 0.0
    %1193 = vmatpush.msra.mxu0 0.0
    %1194 = vmatpush.msra.mxu0 0.0
    %1195 = vmatpush.msra.mxu0 0.0
    %1196 = vmatpush.msra.mxu0 0.0
    %1197 = vmatpush.msra.mxu0 0.0
    %1198 = vmatpush.msra.mxu0 0.0
    %1199 = vmatpush.msra.mxu0 0.0
    %1200 = vmatpush.msra.mxu0 %v1180
    %1201 = vmatmul.f32.gmra.mxu0 %v1183
    %v1202 = vpop.f32.mrf.mxu0
    %v1203 = vadd.f32 0.0, %v1202
    %1204 = vdwg.mxu0
    %s1205 = scalar_lea.vmem %s4, 16
    %v1206 = vld [vmem:[%s1205] sm:$0xff]
    %1207 = vrot.lane.b32.xlu0 %v1068, 112
    %v1208 = vpop.permute.xlu0 %1207
    %1209 = vrot.lane.b32.xlu0 %v1068, 80
    %v1210 = vpop.permute.xlu0 %1209
    %v1211 = vsel %vm214, %v1208, 0
    %v1213 = vsel %vm214, %v1210, 0
    %1215 = vmatpush.xpose.msra.mxu0 0.0
    %1216 = vmatpush.xpose.msra.mxu0 0.0
    %1217 = vmatpush.xpose.msra.mxu0 0.0
    %1218 = vmatpush.xpose.msra.mxu0 0.0
    %1219 = vmatpush.xpose.msra.mxu0 0.0
    %1220 = vmatpush.xpose.msra.mxu0 0.0
    %1221 = vmatpush.xpose.msra.mxu0 0.0
    %1222 = vmatpush.xpose.msra.mxu0 0.0
    %1223 = vmatpush.xpose.msra.mxu0 0.0
    %1224 = vmatpush.xpose.msra.mxu0 0.0
    %1225 = vmatpush.xpose.msra.mxu0 0.0
    %1226 = vmatpush.xpose.msra.mxu0 0.0
    %1227 = vmatpush.xpose.msra.mxu0 0.0
    %1228 = vmatpush.xpose.msra.mxu0 0.0
    %1229 = vmatpush.xpose.msra.mxu0 0.0
    %1230 = vmatpush.xpose.msra.mxu0 %v1213
    %1231 = vmatmul.f32.gmra.mxu0 %v1211
    %v1232 = vpop.f32.mrf.mxu0
    %v1233 = vadd.f32 %v1206, %v1232
    %1234 = vdwg.mxu0
    %v1235 = vsel %vm214, %v1233, -inf
    %1236 = vmax.xlane.f32.xlu0 %v1235
    %v1237 = vpop.xlane.xlu0 %1236
    %v1238 = vsub.f32 %v1233, %v1237
    %v1239 = vmul.f32 %v1238, 1.442695
    %v1240 = vpow.pop %v1239
    %v1241 = vsel %vm214, %v1240, 0.0
    %1242 = vadd.xlane.f32.xlu0 %v1241
    %v1243 = vpop.xlane.xlu0 %1242
    %v1244 = vrcp.pop %v1243
    %v1245 = vmul.f32 %v1240, %v1244
    %1246 = vrot.lane.b32.xlu0 %v1068, 48
    %v1247 = vpop.permute.xlu0 %1246
    %v1250 = vsel %vm214, %v1245, 0
    %1252 = vmatpush.msra.mxu0 0.0
    %1253 = vmatpush.msra.mxu0 0.0
    %1254 = vmatpush.msra.mxu0 0.0
    %1255 = vmatpush.msra.mxu0 0.0
    %1256 = vmatpush.msra.mxu0 0.0
    %1257 = vmatpush.msra.mxu0 0.0
    %1258 = vmatpush.msra.mxu0 0.0
    %1259 = vmatpush.msra.mxu0 0.0
    %1260 = vmatpush.msra.mxu0 0.0
    %1261 = vmatpush.msra.mxu0 0.0
    %1262 = vmatpush.msra.mxu0 0.0
    %1263 = vmatpush.msra.mxu0 0.0
    %1264 = vmatpush.msra.mxu0 0.0
    %1265 = vmatpush.msra.mxu0 0.0
    %1266 = vmatpush.msra.mxu0 0.0
    %1267 = vmatpush.msra.mxu0 %v1247
    %1268 = vmatmul.f32.gmra.mxu0 %v1250
    %v1269 = vpop.f32.mrf.mxu0
    %v1270 = vadd.f32 0.0, %v1269
    %1271 = vdwg.mxu0
    %s1272 = scalar_lea.vmem %s4, 24
    %v1273 = vld [vmem:[%s1272] sm:$0xff]
    %1274 = vrot.lane.b32.xlu0 %v1068, 104
    %v1275 = vpop.permute.xlu0 %1274
    %1276 = vrot.lane.b32.xlu0 %v1068, 72
    %v1277 = vpop.permute.xlu0 %1276
    %v1278 = vsel %vm214, %v1275, 0
    %v1280 = vsel %vm214, %v1277, 0
    %1282 = vmatpush.xpose.msra.mxu0 0.0
    %1283 = vmatpush.xpose.msra.mxu0 0.0
    %1284 = vmatpush.xpose.msra.mxu0 0.0
    %1285 = vmatpush.xpose.msra.mxu0 0.0
    %1286 = vmatpush.xpose.msra.mxu0 0.0
    %1287 = vmatpush.xpose.msra.mxu0 0.0
    %1288 = vmatpush.xpose.msra.mxu0 0.0
    %1289 = vmatpush.xpose.msra.mxu0 0.0
    %1290 = vmatpush.xpose.msra.mxu0 0.0
    %1291 = vmatpush.xpose.msra.mxu0 0.0
    %1292 = vmatpush.xpose.msra.mxu0 0.0
    %1293 = vmatpush.xpose.msra.mxu0 0.0
    %1294 = vmatpush.xpose.msra.mxu0 0.0
    %1295 = vmatpush.xpose.msra.mxu0 0.0
    %1296 = vmatpush.xpose.msra.mxu0 0.0
    %1297 = vmatpush.xpose.msra.mxu0 %v1280
    %1298 = vmatmul.f32.gmra.mxu0 %v1278
    %v1299 = vpop.f32.mrf.mxu0
    %v1300 = vadd.f32 %v1273, %v1299
    %1301 = vdwg.mxu0
    %v1302 = vsel %vm214, %v1300, -inf
    %1303 = vmax.xlane.f32.xlu0 %v1302
    %v1304 = vpop.xlane.xlu0 %1303
    %v1305 = vsub.f32 %v1300, %v1304
    %v1306 = vmul.f32 %v1305, 1.442695
    %v1307 = vpow.pop %v1306
    %v1308 = vsel %vm214, %v1307, 0.0
    %1309 = vadd.xlane.f32.xlu0 %v1308
    %v1310 = vpop.xlane.xlu0 %1309
    %v1311 = vrcp.pop %v1310
    %v1312 = vmul.f32 %v1307, %v1311
    %1313 = vrot.lane.b32.xlu0 %v1068, 40
    %v1314 = vpop.permute.xlu0 %1313
    %v1317 = vsel %vm214, %v1312, 0
    %1319 = vmatpush.msra.mxu0 0.0
    %1320 = vmatpush.msra.mxu0 0.0
    %1321 = vmatpush.msra.mxu0 0.0
    %1322 = vmatpush.msra.mxu0 0.0
    %1323 = vmatpush.msra.mxu0 0.0
    %1324 = vmatpush.msra.mxu0 0.0
    %1325 = vmatpush.msra.mxu0 0.0
    %1326 = vmatpush.msra.mxu0 0.0
    %1327 = vmatpush.msra.mxu0 0.0
    %1328 = vmatpush.msra.mxu0 0.0
    %1329 = vmatpush.msra.mxu0 0.0
    %1330 = vmatpush.msra.mxu0 0.0
    %1331 = vmatpush.msra.mxu0 0.0
    %1332 = vmatpush.msra.mxu0 0.0
    %1333 = vmatpush.msra.mxu0 0.0
    %1334 = vmatpush.msra.mxu0 %v1314
    %1335 = vmatmul.f32.gmra.mxu0 %v1317
    %v1336 = vpop.f32.mrf.mxu0
    %v1337 = vadd.f32 0.0, %v1336
    %1338 = vdwg.mxu0
    %1340 = vrot.lane.b32.xlu0 %v1203, 8
    %v1341 = vpop.permute.xlu0 %1340
    %1344 = vrot.lane.b32.xlu0 %v1270, 16
    %v1345 = vpop.permute.xlu0 %1344
    %1348 = vrot.lane.b32.xlu0 %v1337, 24
    %v1349 = vpop.permute.xlu0 %1348
    %v1351 = vsel %vm214, %v1136, %v1341
    %v1352 = vsel %vm490, %v1351, %v1345
    %v1353 = vsel %vm492, %v1352, %v1349
    %1355 = vrot.lane.b32.xlu0 %v1071, 96
    %v1356 = vpop.permute.xlu0 %1355
    %v1357 = vsel %vm214, %v1071, 0
    %v1359 = vsel %vm214, %v1356, 0
    %1361 = vmatpush.xpose.msra.mxu0 0.0
    %1362 = vmatpush.xpose.msra.mxu0 0.0
    %1363 = vmatpush.xpose.msra.mxu0 0.0
    %1364 = vmatpush.xpose.msra.mxu0 0.0
    %1365 = vmatpush.xpose.msra.mxu0 0.0
    %1366 = vmatpush.xpose.msra.mxu0 0.0
    %1367 = vmatpush.xpose.msra.mxu0 0.0
    %1368 = vmatpush.xpose.msra.mxu0 0.0
    %1369 = vmatpush.xpose.msra.mxu0 0.0
    %1370 = vmatpush.xpose.msra.mxu0 0.0
    %1371 = vmatpush.xpose.msra.mxu0 0.0
    %1372 = vmatpush.xpose.msra.mxu0 0.0
    %1373 = vmatpush.xpose.msra.mxu0 0.0
    %1374 = vmatpush.xpose.msra.mxu0 0.0
    %1375 = vmatpush.xpose.msra.mxu0 0.0
    %1376 = vmatpush.xpose.msra.mxu0 %v1359
    %1377 = vmatmul.f32.gmra.mxu0 %v1357
    %v1378 = vpop.f32.mrf.mxu0
    %v1379 = vadd.f32 %v1073, %v1378
    %1380 = vdwg.mxu0
    %v1381 = vsel %vm214, %v1379, -inf
    %1382 = vmax.xlane.f32.xlu0 %v1381
    %v1383 = vpop.xlane.xlu0 %1382
    %v1384 = vsub.f32 %v1379, %v1383
    %v1385 = vmul.f32 %v1384, 1.442695
    %v1386 = vpow.pop %v1385
    %v1387 = vsel %vm214, %v1386, 0.0
    %1388 = vadd.xlane.f32.xlu0 %v1387
    %v1389 = vpop.xlane.xlu0 %1388
    %v1390 = vrcp.pop %v1389
    %v1391 = vmul.f32 %v1386, %v1390
    %1392 = vrot.lane.b32.xlu0 %v1071, 64
    %v1393 = vpop.permute.xlu0 %1392
    %v1396 = vsel %vm214, %v1391, 0
    %1398 = vmatpush.msra.mxu0 0.0
    %1399 = vmatpush.msra.mxu0 0.0
    %1400 = vmatpush.msra.mxu0 0.0
    %1401 = vmatpush.msra.mxu0 0.0
    %1402 = vmatpush.msra.mxu0 0.0
    %1403 = vmatpush.msra.mxu0 0.0
    %1404 = vmatpush.msra.mxu0 0.0
    %1405 = vmatpush.msra.mxu0 0.0
    %1406 = vmatpush.msra.mxu0 0.0
    %1407 = vmatpush.msra.mxu0 0.0
    %1408 = vmatpush.msra.mxu0 0.0
    %1409 = vmatpush.msra.mxu0 0.0
    %1410 = vmatpush.msra.mxu0 0.0
    %1411 = vmatpush.msra.mxu0 0.0
    %1412 = vmatpush.msra.mxu0 0.0
    %1413 = vmatpush.msra.mxu0 %v1393
    %1414 = vmatmul.f32.gmra.mxu0 %v1396
    %v1415 = vpop.f32.mrf.mxu0
    %v1416 = vadd.f32 0.0, %v1415
    %1417 = vdwg.mxu0
    %1418 = vrot.lane.b32.xlu0 %v1071, 120
    %v1419 = vpop.permute.xlu0 %1418
    %1420 = vrot.lane.b32.xlu0 %v1071, 88
    %v1421 = vpop.permute.xlu0 %1420
    %v1422 = vsel %vm214, %v1419, 0
    %v1424 = vsel %vm214, %v1421, 0
    %1426 = vmatpush.xpose.msra.mxu0 0.0
    %1427 = vmatpush.xpose.msra.mxu0 0.0
    %1428 = vmatpush.xpose.msra.mxu0 0.0
    %1429 = vmatpush.xpose.msra.mxu0 0.0
    %1430 = vmatpush.xpose.msra.mxu0 0.0
    %1431 = vmatpush.xpose.msra.mxu0 0.0
    %1432 = vmatpush.xpose.msra.mxu0 0.0
    %1433 = vmatpush.xpose.msra.mxu0 0.0
    %1434 = vmatpush.xpose.msra.mxu0 0.0
    %1435 = vmatpush.xpose.msra.mxu0 0.0
    %1436 = vmatpush.xpose.msra.mxu0 0.0
    %1437 = vmatpush.xpose.msra.mxu0 0.0
    %1438 = vmatpush.xpose.msra.mxu0 0.0
    %1439 = vmatpush.xpose.msra.mxu0 0.0
    %1440 = vmatpush.xpose.msra.mxu0 0.0
    %1441 = vmatpush.xpose.msra.mxu0 %v1424
    %1442 = vmatmul.f32.gmra.mxu0 %v1422
    %v1443 = vpop.f32.mrf.mxu0
    %v1444 = vadd.f32 %v1139, %v1443
    %1445 = vdwg.mxu0
    %v1446 = vsel %vm214, %v1444, -inf
    %1447 = vmax.xlane.f32.xlu0 %v1446
    %v1448 = vpop.xlane.xlu0 %1447
    %v1449 = vsub.f32 %v1444, %v1448
    %v1450 = vmul.f32 %v1449, 1.442695
    %v1451 = vpow.pop %v1450
    %v1452 = vsel %vm214, %v1451, 0.0
    %1453 = vadd.xlane.f32.xlu0 %v1452
    %v1454 = vpop.xlane.xlu0 %1453
    %v1455 = vrcp.pop %v1454
    %v1456 = vmul.f32 %v1451, %v1455
    %1457 = vrot.lane.b32.xlu0 %v1071, 56
    %v1458 = vpop.permute.xlu0 %1457
    %v1461 = vsel %vm214, %v1456, 0
    %1463 = vmatpush.msra.mxu0 0.0
    %1464 = vmatpush.msra.mxu0 0.0
    %1465 = vmatpush.msra.mxu0 0.0
    %1466 = vmatpush.msra.mxu0 0.0
    %1467 = vmatpush.msra.mxu0 0.0
    %1468 = vmatpush.msra.mxu0 0.0
    %1469 = vmatpush.msra.mxu0 0.0
    %1470 = vmatpush.msra.mxu0 0.0
    %1471 = vmatpush.msra.mxu0 0.0
    %1472 = vmatpush.msra.mxu0 0.0
    %1473 = vmatpush.msra.mxu0 0.0
    %1474 = vmatpush.msra.mxu0 0.0
    %1475 = vmatpush.msra.mxu0 0.0
    %1476 = vmatpush.msra.mxu0 0.0
    %1477 = vmatpush.msra.mxu0 0.0
    %1478 = vmatpush.msra.mxu0 %v1458
    %1479 = vmatmul.f32.gmra.mxu0 %v1461
    %v1480 = vpop.f32.mrf.mxu0
    %v1481 = vadd.f32 0.0, %v1480
    %1482 = vdwg.mxu0
    %1483 = vrot.lane.b32.xlu0 %v1071, 112
    %v1484 = vpop.permute.xlu0 %1483
    %1485 = vrot.lane.b32.xlu0 %v1071, 80
    %v1486 = vpop.permute.xlu0 %1485
    %v1487 = vsel %vm214, %v1484, 0
    %v1489 = vsel %vm214, %v1486, 0
    %1491 = vmatpush.xpose.msra.mxu0 0.0
    %1492 = vmatpush.xpose.msra.mxu0 0.0
    %1493 = vmatpush.xpose.msra.mxu0 0.0
    %1494 = vmatpush.xpose.msra.mxu0 0.0
    %1495 = vmatpush.xpose.msra.mxu0 0.0
    %1496 = vmatpush.xpose.msra.mxu0 0.0
    %1497 = vmatpush.xpose.msra.mxu0 0.0
    %1498 = vmatpush.xpose.msra.mxu0 0.0
    %1499 = vmatpush.xpose.msra.mxu0 0.0
    %1500 = vmatpush.xpose.msra.mxu0 0.0
    %1501 = vmatpush.xpose.msra.mxu0 0.0
    %1502 = vmatpush.xpose.msra.mxu0 0.0
    %1503 = vmatpush.xpose.msra.mxu0 0.0
    %1504 = vmatpush.xpose.msra.mxu0 0.0
    %1505 = vmatpush.xpose.msra.mxu0 0.0
    %1506 = vmatpush.xpose.msra.mxu0 %v1489
    %1507 = vmatmul.f32.gmra.mxu0 %v1487
    %v1508 = vpop.f32.mrf.mxu0
    %v1509 = vadd.f32 %v1206, %v1508
    %1510 = vdwg.mxu0
    %v1511 = vsel %vm214, %v1509, -inf
    %1512 = vmax.xlane.f32.xlu0 %v1511
    %v1513 = vpop.xlane.xlu0 %1512
    %v1514 = vsub.f32 %v1509, %v1513
    %v1515 = vmul.f32 %v1514, 1.442695
    %v1516 = vpow.pop %v1515
    %v1517 = vsel %vm214, %v1516, 0.0
    %1518 = vadd.xlane.f32.xlu0 %v1517
    %v1519 = vpop.xlane.xlu0 %1518
    %v1520 = vrcp.pop %v1519
    %v1521 = vmul.f32 %v1516, %v1520
    %1522 = vrot.lane.b32.xlu0 %v1071, 48
    %v1523 = vpop.permute.xlu0 %1522
    %v1526 = vsel %vm214, %v1521, 0
    %1528 = vmatpush.msra.mxu0 0.0
    %1529 = vmatpush.msra.mxu0 0.0
    %1530 = vmatpush.msra.mxu0 0.0
    %1531 = vmatpush.msra.mxu0 0.0
    %1532 = vmatpush.msra.mxu0 0.0
    %1533 = vmatpush.msra.mxu0 0.0
    %1534 = vmatpush.msra.mxu0 0.0
    %1535 = vmatpush.msra.mxu0 0.0
    %1536 = vmatpush.msra.mxu0 0.0
    %1537 = vmatpush.msra.mxu0 0.0
    %1538 = vmatpush.msra.mxu0 0.0
    %1539 = vmatpush.msra.mxu0 0.0
    %1540 = vmatpush.msra.mxu0 0.0
    %1541 = vmatpush.msra.mxu0 0.0
    %1542 = vmatpush.msra.mxu0 0.0
    %1543 = vmatpush.msra.mxu0 %v1523
    %1544 = vmatmul.f32.gmra.mxu0 %v1526
    %v1545 = vpop.f32.mrf.mxu0
    %v1546 = vadd.f32 0.0, %v1545
    %1547 = vdwg.mxu0
    %1548 = vrot.lane.b32.xlu0 %v1071, 104
    %v1549 = vpop.permute.xlu0 %1548
    %1550 = vrot.lane.b32.xlu0 %v1071, 72
    %v1551 = vpop.permute.xlu0 %1550
    %v1552 = vsel %vm214, %v1549, 0
    %v1554 = vsel %vm214, %v1551, 0
    %1556 = vmatpush.xpose.msra.mxu0 0.0
    %1557 = vmatpush.xpose.msra.mxu0 0.0
    %1558 = vmatpush.xpose.msra.mxu0 0.0
    %1559 = vmatpush.xpose.msra.mxu0 0.0
    %1560 = vmatpush.xpose.msra.mxu0 0.0
    %1561 = vmatpush.xpose.msra.mxu0 0.0
    %1562 = vmatpush.xpose.msra.mxu0 0.0
    %1563 = vmatpush.xpose.msra.mxu0 0.0
    %1564 = vmatpush.xpose.msra.mxu0 0.0
    %1565 = vmatpush.xpose.msra.mxu0 0.0
    %1566 = vmatpush.xpose.msra.mxu0 0.0
    %1567 = vmatpush.xpose.msra.mxu0 0.0
    %1568 = vmatpush.xpose.msra.mxu0 0.0
    %1569 = vmatpush.xpose.msra.mxu0 0.0
    %1570 = vmatpush.xpose.msra.mxu0 0.0
    %1571 = vmatpush.xpose.msra.mxu0 %v1554
    %1572 = vmatmul.f32.gmra.mxu0 %v1552
    %v1573 = vpop.f32.mrf.mxu0
    %v1574 = vadd.f32 %v1273, %v1573
    %1575 = vdwg.mxu0
    %v1576 = vsel %vm214, %v1574, -inf
    %1577 = vmax.xlane.f32.xlu0 %v1576
    %v1578 = vpop.xlane.xlu0 %1577
    %v1579 = vsub.f32 %v1574, %v1578
    %v1580 = vmul.f32 %v1579, 1.442695
    %v1581 = vpow.pop %v1580
    %v1582 = vsel %vm214, %v1581, 0.0
    %1583 = vadd.xlane.f32.xlu0 %v1582
    %v1584 = vpop.xlane.xlu0 %1583
    %v1585 = vrcp.pop %v1584
    %v1586 = vmul.f32 %v1581, %v1585
    %1587 = vrot.lane.b32.xlu0 %v1071, 40
    %v1588 = vpop.permute.xlu0 %1587
    %v1591 = vsel %vm214, %v1586, 0
    %1593 = vmatpush.msra.mxu0 0.0
    %1594 = vmatpush.msra.mxu0 0.0
    %1595 = vmatpush.msra.mxu0 0.0
    %1596 = vmatpush.msra.mxu0 0.0
    %1597 = vmatpush.msra.mxu0 0.0
    %1598 = vmatpush.msra.mxu0 0.0
    %1599 = vmatpush.msra.mxu0 0.0
    %1600 = vmatpush.msra.mxu0 0.0
    %1601 = vmatpush.msra.mxu0 0.0
    %1602 = vmatpush.msra.mxu0 0.0
    %1603 = vmatpush.msra.mxu0 0.0
    %1604 = vmatpush.msra.mxu0 0.0
    %1605 = vmatpush.msra.mxu0 0.0
    %1606 = vmatpush.msra.mxu0 0.0
    %1607 = vmatpush.msra.mxu0 0.0
    %1608 = vmatpush.msra.mxu0 %v1588
    %1609 = vmatmul.f32.gmra.mxu0 %v1591
    %v1610 = vpop.f32.mrf.mxu0
    %v1611 = vadd.f32 0.0, %v1610
    %1612 = vdwg.mxu0
    %1614 = vrot.lane.b32.xlu0 %v1481, 8
    %v1615 = vpop.permute.xlu0 %1614
    %1618 = vrot.lane.b32.xlu0 %v1546, 16
    %v1619 = vpop.permute.xlu0 %1618
    %1622 = vrot.lane.b32.xlu0 %v1611, 24
    %v1623 = vpop.permute.xlu0 %1622
    %v1625 = vsel %vm214, %v1416, %v1615
    %v1626 = vsel %vm490, %v1625, %v1619
    %v1627 = vsel %vm492, %v1626, %v1623
    %v1628 = vld [vmem:[%s14] sm:$0xff]
    %v1629 = vld [vmem:[%s14 + $0x8] sm:$0xff]
    %v1630 = vld [vmem:[%s14 + $0x10] sm:$0xff]
    %v1631 = vld [vmem:[%s14 + $0x18] sm:$0xff]
    %v1633 = vsel %vm131, %v1353, 0
    %v1636 = vsel %vm131, %v1627, 0
    %1638 = vmatpush.msra.mxu0 0.0
    %1639 = vmatpush.msra.mxu0 0.0
    %1640 = vmatpush.msra.mxu0 0.0
    %1641 = vmatpush.msra.mxu0 0.0
    %1642 = vmatpush.msra.mxu0 0.0
    %1643 = vmatpush.msra.mxu0 0.0
    %1644 = vmatpush.msra.mxu0 0.0
    %1645 = vmatpush.msra.mxu0 0.0
    %1646 = vmatpush.msra.mxu0 0.0
    %1647 = vmatpush.msra.mxu0 0.0
    %1648 = vmatpush.msra.mxu0 0.0
    %1649 = vmatpush.msra.mxu0 0.0
    %1650 = vmatpush.msra.mxu0 %v1631
    %1651 = vmatpush.msra.mxu0 %v1630
    %1652 = vmatpush.msra.mxu0 %v1629
    %1653 = vmatpush.msra.mxu0 %v1628
    %1654 = vmatmul.f32.gmra.mxu0 %v1633
    %v1655 = vpop.f32.mrf.mxu0
    %v1656 = vadd.f32 0.0, %v1655
    %1657 = vmatmul.f32.gmra.mxu0 %v1636
    %v1658 = vpop.f32.mrf.mxu0
    %v1659 = vadd.f32 0.0, %v1658
    %1660 = vdwg.mxu0
    %v1661 = vadd.f32 %v995, %v1656
    %v1662 = vadd.f32 %v998, %v1659
    %v1663 = vmul.f32 %v1661, %v1661
    %v1664 = vmul.f32 %v1662, %v1662
    %v1665 = vsel %vm131, %v1663, 0.0
    %1666 = vadd.xlane.f32.xlu0 %v1665
    %v1667 = vpop.xlane.xlu0 %1666
    %v1668 = vsel %vm131, %v1664, 0.0
    %1669 = vadd.xlane.f32.xlu0 %v1668
    %v1670 = vpop.xlane.xlu0 %1669
    %v1671 = vmul.f32 %v1667, %v144
    %v1672 = vmul.f32 %v1670, %v144
    %v1673 = vadd.f32 %v1671, 1e-06
    %v1674 = vadd.f32 %v1672, 1e-06
    %v1675 = vrsqrt.pop %v1673
    %v1676 = vmul.f32 %v1675, %v1673
    %v1677 = vmul.f32 %v1676, %v1675
    %v1678 = vmul.f32 0.5, %v1677
    %v1679 = vsub.f32 1.5, %v1678
    %v1680 = vmul.f32 %v1675, %v1679
    %vm1681 = vweird.f32 %v1673
    %vm1682 = vweird.f32 %v1675
    %vm1683 = vmor %vm1681, %vm1682
    %v1684 = vsel %vm1683, %v1675, %v1680
    %v1685 = vrsqrt.pop %v1674
    %v1686 = vmul.f32 %v1685, %v1674
    %v1687 = vmul.f32 %v1686, %v1685
    %v1688 = vmul.f32 0.5, %v1687
    %v1689 = vsub.f32 1.5, %v1688
    %v1690 = vmul.f32 %v1685, %v1689
    %vm1691 = vweird.f32 %v1674
    %vm1692 = vweird.f32 %v1685
    %vm1693 = vmor %vm1691, %vm1692
    %v1694 = vsel %vm1693, %v1685, %v1690
    %v1695 = vmul.f32 %v1661, %v1684
    %v1696 = vmul.f32 %v1662, %v1694
    %v1697 = vld [vmem:[%s15] sm:$0x1]
    %v1699 = vperm.slane %v1697, 0
    %v1701 = vmul.f32 %v1695, %v1699
    %v1702 = vmul.f32 %v1696, %v1699
    %v1703 = vld [vmem:[%s16] sm:$0xff]
    %v1704 = vld [vmem:[%s16 + $0x8] sm:$0xff]
    %v1705 = vld [vmem:[%s16 + $0x10] sm:$0xff]
    %v1706 = vld [vmem:[%s16 + $0x18] sm:$0xff]
    %v1708 = vsel %vm131, %v1701, 0
    %v1711 = vsel %vm131, %v1702, 0
    %1713 = vmatpush.msra.mxu0 0.0
    %1714 = vmatpush.msra.mxu0 0.0
    %1715 = vmatpush.msra.mxu0 0.0
    %1716 = vmatpush.msra.mxu0 0.0
    %1717 = vmatpush.msra.mxu0 0.0
    %1718 = vmatpush.msra.mxu0 0.0
    %1719 = vmatpush.msra.mxu0 0.0
    %1720 = vmatpush.msra.mxu0 0.0
    %1721 = vmatpush.msra.mxu0 0.0
    %1722 = vmatpush.msra.mxu0 0.0
    %1723 = vmatpush.msra.mxu0 0.0
    %1724 = vmatpush.msra.mxu0 0.0
    %1725 = vmatpush.msra.mxu0 %v1706
    %1726 = vmatpush.msra.mxu0 %v1705
    %1727 = vmatpush.msra.mxu0 %v1704
    %1728 = vmatpush.msra.mxu0 %v1703
    %1729 = vmatmul.f32.gmra.mxu0 %v1708
    %v1730 = vpop.f32.mrf.mxu0
    %v1731 = vadd.f32 0.0, %v1730
    %1732 = vmatmul.f32.gmra.mxu0 %v1711
    %v1733 = vpop.f32.mrf.mxu0
    %v1734 = vadd.f32 0.0, %v1733
    %1735 = vdwg.mxu0
    %v1736 = vld [vmem:[%s17] sm:$0xff]
    %v1737 = vld [vmem:[%s17 + $0x8] sm:$0xff]
    %v1738 = vld [vmem:[%s17 + $0x10] sm:$0xff]
    %v1739 = vld [vmem:[%s17 + $0x18] sm:$0xff]
    %v1741 = vsel %vm131, %v955, 0
    %v1744 = vsel %vm131, %v956, 0
    %1746 = vmatpush.msra.mxu0 0.0
    %1747 = vmatpush.msra.mxu0 0.0
    %1748 = vmatpush.msra.mxu0 0.0
    %1749 = vmatpush.msra.mxu0 0.0
    %1750 = vmatpush.msra.mxu0 0.0
    %1751 = vmatpush.msra.mxu0 0.0
    %1752 = vmatpush.msra.mxu0 0.0
    %1753 = vmatpush.msra.mxu0 0.0
    %1754 = vmatpush.msra.mxu0 0.0
    %1755 = vmatpush.msra.mxu0 0.0
    %1756 = vmatpush.msra.mxu0 0.0
    %1757 = vmatpush.msra.mxu0 0.0
    %1758 = vmatpush.msra.mxu0 %v1739
    %1759 = vmatpush.msra.mxu0 %v1738
    %1760 = vmatpush.msra.mxu0 %v1737
    %1761 = vmatpush.msra.mxu0 %v1736
    %1762 = vmatmul.f32.gmra.mxu0 %v1741
    %v1763 = vpop.f32.mrf.mxu0
    %v1764 = vadd.f32 0.0, %v1763
    %1765 = vmatmul.f32.gmra.mxu0 %v1744
    %v1766 = vpop.f32.mrf.mxu0
    %v1767 = vadd.f32 0.0, %v1766
    %1768 = vdwg.mxu0
    %v1770 = vsel %vm214, %v1731, 0
    %v1773 = vsel %vm214, %v1764, 0
    %1775 = vmatpush.xpose.msra.mxu0 0.0
    %1776 = vmatpush.xpose.msra.mxu0 0.0
    %1777 = vmatpush.xpose.msra.mxu0 0.0
    %1778 = vmatpush.xpose.msra.mxu0 0.0
    %1779 = vmatpush.xpose.msra.mxu0 0.0
    %1780 = vmatpush.xpose.msra.mxu0 0.0
    %1781 = vmatpush.xpose.msra.mxu0 0.0
    %1782 = vmatpush.xpose.msra.mxu0 0.0
    %1783 = vmatpush.xpose.msra.mxu0 0.0
    %1784 = vmatpush.xpose.msra.mxu0 0.0
    %1785 = vmatpush.xpose.msra.mxu0 0.0
    %1786 = vmatpush.xpose.msra.mxu0 0.0
    %1787 = vmatpush.xpose.msra.mxu0 0.0
    %1788 = vmatpush.xpose.msra.mxu0 0.0
    %1789 = vmatpush.xpose.msra.mxu0 0.0
    %1790 = vmatpush.xpose.msra.mxu0 %v1773
    %1791 = vmatmul.f32.gmra.mxu0 %v1770
    %v1792 = vpop.f32.mrf.mxu0
    %v1793 = vadd.f32 0.0, %v1792
    %1794 = vdwg.mxu0
    %v1795 = vsel %vm214, %v1793, -inf
    %1796 = vmax.xlane.f32.xlu0 %v1795
    %v1797 = vpop.xlane.xlu0 %1796
    %v1798 = vsub.f32 %v1793, %v1797
    %v1799 = vmul.f32 %v1798, 1.442695
    %v1800 = vpow.pop %v1799
    %v1801 = vsel %vm214, %v1800, 0.0
    %1802 = vadd.xlane.f32.xlu0 %v1801
    %v1803 = vpop.xlane.xlu0 %1802
    %v1804 = vrcp.pop %v1803
    %v1805 = vmul.f32 %v1800, %v1804
    %1806 = vrot.lane.b32.xlu0 %v1764, 96
    %v1807 = vpop.permute.xlu0 %1806
    %v1810 = vsel %vm214, %v1805, 0
    %1812 = vmatpush.msra.mxu0 0.0
    %1813 = vmatpush.msra.mxu0 0.0
    %1814 = vmatpush.msra.mxu0 0.0
    %1815 = vmatpush.msra.mxu0 0.0
    %1816 = vmatpush.msra.mxu0 0.0
    %1817 = vmatpush.msra.mxu0 0.0
    %1818 = vmatpush.msra.mxu0 0.0
    %1819 = vmatpush.msra.mxu0 0.0
    %1820 = vmatpush.msra.mxu0 0.0
    %1821 = vmatpush.msra.mxu0 0.0
    %1822 = vmatpush.msra.mxu0 0.0
    %1823 = vmatpush.msra.mxu0 0.0
    %1824 = vmatpush.msra.mxu0 0.0
    %1825 = vmatpush.msra.mxu0 0.0
    %1826 = vmatpush.msra.mxu0 0.0
    %1827 = vmatpush.msra.mxu0 %v1807
    %1828 = vmatmul.f32.gmra.mxu0 %v1810
    %v1829 = vpop.f32.mrf.mxu0
    %v1830 = vadd.f32 0.0, %v1829
    %1831 = vdwg.mxu0
    %1832 = vrot.lane.b32.xlu0 %v1731, 120
    %v1833 = vpop.permute.xlu0 %1832
    %1834 = vrot.lane.b32.xlu0 %v1764, 120
    %v1835 = vpop.permute.xlu0 %1834
    %v1836 = vsel %vm214, %v1833, 0
    %v1838 = vsel %vm214, %v1835, 0
    %1840 = vmatpush.xpose.msra.mxu0 0.0
    %1841 = vmatpush.xpose.msra.mxu0 0.0
    %1842 = vmatpush.xpose.msra.mxu0 0.0
    %1843 = vmatpush.xpose.msra.mxu0 0.0
    %1844 = vmatpush.xpose.msra.mxu0 0.0
    %1845 = vmatpush.xpose.msra.mxu0 0.0
    %1846 = vmatpush.xpose.msra.mxu0 0.0
    %1847 = vmatpush.xpose.msra.mxu0 0.0
    %1848 = vmatpush.xpose.msra.mxu0 0.0
    %1849 = vmatpush.xpose.msra.mxu0 0.0
    %1850 = vmatpush.xpose.msra.mxu0 0.0
    %1851 = vmatpush.xpose.msra.mxu0 0.0
    %1852 = vmatpush.xpose.msra.mxu0 0.0
    %1853 = vmatpush.xpose.msra.mxu0 0.0
    %1854 = vmatpush.xpose.msra.mxu0 0.0
    %1855 = vmatpush.xpose.msra.mxu0 %v1838
    %1856 = vmatmul.f32.gmra.mxu0 %v1836
    %v1857 = vpop.f32.mrf.mxu0
    %v1858 = vadd.f32 0.0, %v1857
    %1859 = vdwg.mxu0
    %v1860 = vsel %vm214, %v1858, -inf
    %1861 = vmax.xlane.f32.xlu0 %v1860
    %v1862 = vpop.xlane.xlu0 %1861
    %v1863 = vsub.f32 %v1858, %v1862
    %v1864 = vmul.f32 %v1863, 1.442695
    %v1865 = vpow.pop %v1864
    %v1866 = vsel %vm214, %v1865, 0.0
    %1867 = vadd.xlane.f32.xlu0 %v1866
    %v1868 = vpop.xlane.xlu0 %1867
    %v1869 = vrcp.pop %v1868
    %v1870 = vmul.f32 %v1865, %v1869
    %1871 = vrot.lane.b32.xlu0 %v1764, 88
    %v1872 = vpop.permute.xlu0 %1871
    %v1875 = vsel %vm214, %v1870, 0
    %1877 = vmatpush.msra.mxu0 0.0
    %1878 = vmatpush.msra.mxu0 0.0
    %1879 = vmatpush.msra.mxu0 0.0
    %1880 = vmatpush.msra.mxu0 0.0
    %1881 = vmatpush.msra.mxu0 0.0
    %1882 = vmatpush.msra.mxu0 0.0
    %1883 = vmatpush.msra.mxu0 0.0
    %1884 = vmatpush.msra.mxu0 0.0
    %1885 = vmatpush.msra.mxu0 0.0
    %1886 = vmatpush.msra.mxu0 0.0
    %1887 = vmatpush.msra.mxu0 0.0
    %1888 = vmatpush.msra.mxu0 0.0
    %1889 = vmatpush.msra.mxu0 0.0
    %1890 = vmatpush.msra.mxu0 0.0
    %1891 = vmatpush.msra.mxu0 0.0
    %1892 = vmatpush.msra.mxu0 %v1872
    %1893 = vmatmul.f32.gmra.mxu0 %v1875
    %v1894 = vpop.f32.mrf.mxu0
    %v1895 = vadd.f32 0.0, %v1894
    %1896 = vdwg.mxu0
    %1897 = vrot.lane.b32.xlu0 %v1731, 112
    %v1898 = vpop.permute.xlu0 %1897
    %1899 = vrot.lane.b32.xlu0 %v1764, 112
    %v1900 = vpop.permute.xlu0 %1899
    %v1901 = vsel %vm214, %v1898, 0
    %v1903 = vsel %vm214, %v1900, 0
    %1905 = vmatpush.xpose.msra.mxu0 0.0
    %1906 = vmatpush.xpose.msra.mxu0 0.0
    %1907 = vmatpush.xpose.msra.mxu0 0.0
    %1908 = vmatpush.xpose.msra.mxu0 0.0
    %1909 = vmatpush.xpose.msra.mxu0 0.0
    %1910 = vmatpush.xpose.msra.mxu0 0.0
    %1911 = vmatpush.xpose.msra.mxu0 0.0
    %1912 = vmatpush.xpose.msra.mxu0 0.0
    %1913 = vmatpush.xpose.msra.mxu0 0.0
    %1914 = vmatpush.xpose.msra.mxu0 0.0
    %1915 = vmatpush.xpose.msra.mxu0 0.0
    %1916 = vmatpush.xpose.msra.mxu0 0.0
    %1917 = vmatpush.xpose.msra.mxu0 0.0
    %1918 = vmatpush.xpose.msra.mxu0 0.0
    %1919 = vmatpush.xpose.msra.mxu0 0.0
    %1920 = vmatpush.xpose.msra.mxu0 %v1903
    %1921 = vmatmul.f32.gmra.mxu0 %v1901
    %v1922 = vpop.f32.mrf.mxu0
    %v1923 = vadd.f32 0.0, %v1922
    %1924 = vdwg.mxu0
    %v1925 = vsel %vm214, %v1923, -inf
    %1926 = vmax.xlane.f32.xlu0 %v1925
    %v1927 = vpop.xlane.xlu0 %1926
    %v1928 = vsub.f32 %v1923, %v1927
    %v1929 = vmul.f32 %v1928, 1.442695
    %v1930 = vpow.pop %v1929
    %v1931 = vsel %vm214, %v1930, 0.0
    %1932 = vadd.xlane.f32.xlu0 %v1931
    %v1933 = vpop.xlane.xlu0 %1932
    %v1934 = vrcp.pop %v1933
    %v1935 = vmul.f32 %v1930, %v1934
    %1936 = vrot.lane.b32.xlu0 %v1764, 80
    %v1937 = vpop.permute.xlu0 %1936
    %v1940 = vsel %vm214, %v1935, 0
    %1942 = vmatpush.msra.mxu0 0.0
    %1943 = vmatpush.msra.mxu0 0.0
    %1944 = vmatpush.msra.mxu0 0.0
    %1945 = vmatpush.msra.mxu0 0.0
    %1946 = vmatpush.msra.mxu0 0.0
    %1947 = vmatpush.msra.mxu0 0.0
    %1948 = vmatpush.msra.mxu0 0.0
    %1949 = vmatpush.msra.mxu0 0.0
    %1950 = vmatpush.msra.mxu0 0.0
    %1951 = vmatpush.msra.mxu0 0.0
    %1952 = vmatpush.msra.mxu0 0.0
    %1953 = vmatpush.msra.mxu0 0.0
    %1954 = vmatpush.msra.mxu0 0.0
    %1955 = vmatpush.msra.mxu0 0.0
    %1956 = vmatpush.msra.mxu0 0.0
    %1957 = vmatpush.msra.mxu0 %v1937
    %1958 = vmatmul.f32.gmra.mxu0 %v1940
    %v1959 = vpop.f32.mrf.mxu0
    %v1960 = vadd.f32 0.0, %v1959
    %1961 = vdwg.mxu0
    %1962 = vrot.lane.b32.xlu0 %v1731, 104
    %v1963 = vpop.permute.xlu0 %1962
    %1964 = vrot.lane.b32.xlu0 %v1764, 104
    %v1965 = vpop.permute.xlu0 %1964
    %v1966 = vsel %vm214, %v1963, 0
    %v1968 = vsel %vm214, %v1965, 0
    %1970 = vmatpush.xpose.msra.mxu0 0.0
    %1971 = vmatpush.xpose.msra.mxu0 0.0
    %1972 = vmatpush.xpose.msra.mxu0 0.0
    %1973 = vmatpush.xpose.msra.mxu0 0.0
    %1974 = vmatpush.xpose.msra.mxu0 0.0
    %1975 = vmatpush.xpose.msra.mxu0 0.0
    %1976 = vmatpush.xpose.msra.mxu0 0.0
    %1977 = vmatpush.xpose.msra.mxu0 0.0
    %1978 = vmatpush.xpose.msra.mxu0 0.0
    %1979 = vmatpush.xpose.msra.mxu0 0.0
    %1980 = vmatpush.xpose.msra.mxu0 0.0
    %1981 = vmatpush.xpose.msra.mxu0 0.0
    %1982 = vmatpush.xpose.msra.mxu0 0.0
    %1983 = vmatpush.xpose.msra.mxu0 0.0
    %1984 = vmatpush.xpose.msra.mxu0 0.0
    %1985 = vmatpush.xpose.msra.mxu0 %v1968
    %1986 = vmatmul.f32.gmra.mxu0 %v1966
    %v1987 = vpop.f32.mrf.mxu0
    %v1988 = vadd.f32 0.0, %v1987
    %1989 = vdwg.mxu0
    %v1990 = vsel %vm214, %v1988, -inf
    %1991 = vmax.xlane.f32.xlu0 %v1990
    %v1992 = vpop.xlane.xlu0 %1991
    %v1993 = vsub.f32 %v1988, %v1992
    %v1994 = vmul.f32 %v1993, 1.442695
    %v1995 = vpow.pop %v1994
    %v1996 = vsel %vm214, %v1995, 0.0
    %1997 = vadd.xlane.f32.xlu0 %v1996
    %v1998 = vpop.xlane.xlu0 %1997
    %v1999 = vrcp.pop %v1998
    %v2000 = vmul.f32 %v1995, %v1999
    %2001 = vrot.lane.b32.xlu0 %v1764, 72
    %v2002 = vpop.permute.xlu0 %2001
    %v2005 = vsel %vm214, %v2000, 0
    %2007 = vmatpush.msra.mxu0 0.0
    %2008 = vmatpush.msra.mxu0 0.0
    %2009 = vmatpush.msra.mxu0 0.0
    %2010 = vmatpush.msra.mxu0 0.0
    %2011 = vmatpush.msra.mxu0 0.0
    %2012 = vmatpush.msra.mxu0 0.0
    %2013 = vmatpush.msra.mxu0 0.0
    %2014 = vmatpush.msra.mxu0 0.0
    %2015 = vmatpush.msra.mxu0 0.0
    %2016 = vmatpush.msra.mxu0 0.0
    %2017 = vmatpush.msra.mxu0 0.0
    %2018 = vmatpush.msra.mxu0 0.0
    %2019 = vmatpush.msra.mxu0 0.0
    %2020 = vmatpush.msra.mxu0 0.0
    %2021 = vmatpush.msra.mxu0 0.0
    %2022 = vmatpush.msra.mxu0 %v2002
    %2023 = vmatmul.f32.gmra.mxu0 %v2005
    %v2024 = vpop.f32.mrf.mxu0
    %v2025 = vadd.f32 0.0, %v2024
    %2026 = vdwg.mxu0
    %2028 = vrot.lane.b32.xlu0 %v1895, 8
    %v2029 = vpop.permute.xlu0 %2028
    %2032 = vrot.lane.b32.xlu0 %v1960, 16
    %v2033 = vpop.permute.xlu0 %2032
    %2036 = vrot.lane.b32.xlu0 %v2025, 24
    %v2037 = vpop.permute.xlu0 %2036
    %v2039 = vsel %vm214, %v1830, %v2029
    %v2040 = vsel %vm490, %v2039, %v2033
    %v2041 = vsel %vm492, %v2040, %v2037
    %v2043 = vsel %vm214, %v1734, 0
    %v2046 = vsel %vm214, %v1767, 0
    %2048 = vmatpush.xpose.msra.mxu0 0.0
    %2049 = vmatpush.xpose.msra.mxu0 0.0
    %2050 = vmatpush.xpose.msra.mxu0 0.0
    %2051 = vmatpush.xpose.msra.mxu0 0.0
    %2052 = vmatpush.xpose.msra.mxu0 0.0
    %2053 = vmatpush.xpose.msra.mxu0 0.0
    %2054 = vmatpush.xpose.msra.mxu0 0.0
    %2055 = vmatpush.xpose.msra.mxu0 0.0
    %2056 = vmatpush.xpose.msra.mxu0 0.0
    %2057 = vmatpush.xpose.msra.mxu0 0.0
    %2058 = vmatpush.xpose.msra.mxu0 0.0
    %2059 = vmatpush.xpose.msra.mxu0 0.0
    %2060 = vmatpush.xpose.msra.mxu0 0.0
    %2061 = vmatpush.xpose.msra.mxu0 0.0
    %2062 = vmatpush.xpose.msra.mxu0 0.0
    %2063 = vmatpush.xpose.msra.mxu0 %v2046
    %2064 = vmatmul.f32.gmra.mxu0 %v2043
    %v2065 = vpop.f32.mrf.mxu0
    %v2066 = vadd.f32 0.0, %v2065
    %2067 = vdwg.mxu0
    %v2068 = vsel %vm214, %v2066, -inf
    %2069 = vmax.xlane.f32.xlu0 %v2068
    %v2070 = vpop.xlane.xlu0 %2069
    %v2071 = vsub.f32 %v2066, %v2070
    %v2072 = vmul.f32 %v2071, 1.442695
    %v2073 = vpow.pop %v2072
    %v2074 = vsel %vm214, %v2073, 0.0
    %2075 = vadd.xlane.f32.xlu0 %v2074
    %v2076 = vpop.xlane.xlu0 %2075
    %v2077 = vrcp.pop %v2076
    %v2078 = vmul.f32 %v2073, %v2077
    %2079 = vrot.lane.b32.xlu0 %v1767, 96
    %v2080 = vpop.permute.xlu0 %2079
    %v2083 = vsel %vm214, %v2078, 0
    %2085 = vmatpush.msra.mxu0 0.0
    %2086 = vmatpush.msra.mxu0 0.0
    %2087 = vmatpush.msra.mxu0 0.0
    %2088 = vmatpush.msra.mxu0 0.0
    %2089 = vmatpush.msra.mxu0 0.0
    %2090 = vmatpush.msra.mxu0 0.0
    %2091 = vmatpush.msra.mxu0 0.0
    %2092 = vmatpush.msra.mxu0 0.0
    %2093 = vmatpush.msra.mxu0 0.0
    %2094 = vmatpush.msra.mxu0 0.0
    %2095 = vmatpush.msra.mxu0 0.0
    %2096 = vmatpush.msra.mxu0 0.0
    %2097 = vmatpush.msra.mxu0 0.0
    %2098 = vmatpush.msra.mxu0 0.0
    %2099 = vmatpush.msra.mxu0 0.0
    %2100 = vmatpush.msra.mxu0 %v2080
    %2101 = vmatmul.f32.gmra.mxu0 %v2083
    %v2102 = vpop.f32.mrf.mxu0
    %v2103 = vadd.f32 0.0, %v2102
    %2104 = vdwg.mxu0
    %2105 = vrot.lane.b32.xlu0 %v1734, 120
    %v2106 = vpop.permute.xlu0 %2105
    %2107 = vrot.lane.b32.xlu0 %v1767, 120
    %v2108 = vpop.permute.xlu0 %2107
    %v2109 = vsel %vm214, %v2106, 0
    %v2111 = vsel %vm214, %v2108, 0
    %2113 = vmatpush.xpose.msra.mxu0 0.0
    %2114 = vmatpush.xpose.msra.mxu0 0.0
    %2115 = vmatpush.xpose.msra.mxu0 0.0
    %2116 = vmatpush.xpose.msra.mxu0 0.0
    %2117 = vmatpush.xpose.msra.mxu0 0.0
    %2118 = vmatpush.xpose.msra.mxu0 0.0
    %2119 = vmatpush.xpose.msra.mxu0 0.0
    %2120 = vmatpush.xpose.msra.mxu0 0.0
    %2121 = vmatpush.xpose.msra.mxu0 0.0
    %2122 = vmatpush.xpose.msra.mxu0 0.0
    %2123 = vmatpush.xpose.msra.mxu0 0.0
    %2124 = vmatpush.xpose.msra.mxu0 0.0
    %2125 = vmatpush.xpose.msra.mxu0 0.0
    %2126 = vmatpush.xpose.msra.mxu0 0.0
    %2127 = vmatpush.xpose.msra.mxu0 0.0
    %2128 = vmatpush.xpose.msra.mxu0 %v2111
    %2129 = vmatmul.f32.gmra.mxu0 %v2109
    %v2130 = vpop.f32.mrf.mxu0
    %v2131 = vadd.f32 0.0, %v2130
    %2132 = vdwg.mxu0
    %v2133 = vsel %vm214, %v2131, -inf
    %2134 = vmax.xlane.f32.xlu0 %v2133
    %v2135 = vpop.xlane.xlu0 %2134
    %v2136 = vsub.f32 %v2131, %v2135
    %v2137 = vmul.f32 %v2136, 1.442695
    %v2138 = vpow.pop %v2137
    %v2139 = vsel %vm214, %v2138, 0.0
    %2140 = vadd.xlane.f32.xlu0 %v2139
    %v2141 = vpop.xlane.xlu0 %2140
    %v2142 = vrcp.pop %v2141
    %v2143 = vmul.f32 %v2138, %v2142
    %2144 = vrot.lane.b32.xlu0 %v1767, 88
    %v2145 = vpop.permute.xlu0 %2144
    %v2148 = vsel %vm214, %v2143, 0
    %2150 = vmatpush.msra.mxu0 0.0
    %2151 = vmatpush.msra.mxu0 0.0
    %2152 = vmatpush.msra.mxu0 0.0
    %2153 = vmatpush.msra.mxu0 0.0
    %2154 = vmatpush.msra.mxu0 0.0
    %2155 = vmatpush.msra.mxu0 0.0
    %2156 = vmatpush.msra.mxu0 0.0
    %2157 = vmatpush.msra.mxu0 0.0
    %2158 = vmatpush.msra.mxu0 0.0
    %2159 = vmatpush.msra.mxu0 0.0
    %2160 = vmatpush.msra.mxu0 0.0
    %2161 = vmatpush.msra.mxu0 0.0
    %2162 = vmatpush.msra.mxu0 0.0
    %2163 = vmatpush.msra.mxu0 0.0
    %2164 = vmatpush.msra.mxu0 0.0
    %2165 = vmatpush.msra.mxu0 %v2145
    %2166 = vmatmul.f32.gmra.mxu0 %v2148
    %v2167 = vpop.f32.mrf.mxu0
    %v2168 = vadd.f32 0.0, %v2167
    %2169 = vdwg.mxu0
    %2170 = vrot.lane.b32.xlu0 %v1734, 112
    %v2171 = vpop.permute.xlu0 %2170
    %2172 = vrot.lane.b32.xlu0 %v1767, 112
    %v2173 = vpop.permute.xlu0 %2172
    %v2174 = vsel %vm214, %v2171, 0
    %v2176 = vsel %vm214, %v2173, 0
    %2178 = vmatpush.xpose.msra.mxu0 0.0
    %2179 = vmatpush.xpose.msra.mxu0 0.0
    %2180 = vmatpush.xpose.msra.mxu0 0.0
    %2181 = vmatpush.xpose.msra.mxu0 0.0
    %2182 = vmatpush.xpose.msra.mxu0 0.0
    %2183 = vmatpush.xpose.msra.mxu0 0.0
    %2184 = vmatpush.xpose.msra.mxu0 0.0
    %2185 = vmatpush.xpose.msra.mxu0 0.0
    %2186 = vmatpush.xpose.msra.mxu0 0.0
    %2187 = vmatpush.xpose.msra.mxu0 0.0
    %2188 = vmatpush.xpose.msra.mxu0 0.0
    %2189 = vmatpush.xpose.msra.mxu0 0.0
    %2190 = vmatpush.xpose.msra.mxu0 0.0
    %2191 = vmatpush.xpose.msra.mxu0 0.0
    %2192 = vmatpush.xpose.msra.mxu0 0.0
    %2193 = vmatpush.xpose.msra.mxu0 %v2176
    %2194 = vmatmul.f32.gmra.mxu0 %v2174
    %v2195 = vpop.f32.mrf.mxu0
    %v2196 = vadd.f32 0.0, %v2195
    %2197 = vdwg.mxu0
    %v2198 = vsel %vm214, %v2196, -inf
    %2199 = vmax.xlane.f32.xlu0 %v2198
    %v2200 = vpop.xlane.xlu0 %2199
    %v2201 = vsub.f32 %v2196, %v2200
    %v2202 = vmul.f32 %v2201, 1.442695
    %v2203 = vpow.pop %v2202
    %v2204 = vsel %vm214, %v2203, 0.0
    %2205 = vadd.xlane.f32.xlu0 %v2204
    %v2206 = vpop.xlane.xlu0 %2205
    %v2207 = vrcp.pop %v2206
    %v2208 = vmul.f32 %v2203, %v2207
    %2209 = vrot.lane.b32.xlu0 %v1767, 80
    %v2210 = vpop.permute.xlu0 %2209
    %v2213 = vsel %vm214, %v2208, 0
    %2215 = vmatpush.msra.mxu0 0.0
    %2216 = vmatpush.msra.mxu0 0.0
    %2217 = vmatpush.msra.mxu0 0.0
    %2218 = vmatpush.msra.mxu0 0.0
    %2219 = vmatpush.msra.mxu0 0.0
    %2220 = vmatpush.msra.mxu0 0.0
    %2221 = vmatpush.msra.mxu0 0.0
    %2222 = vmatpush.msra.mxu0 0.0
    %2223 = vmatpush.msra.mxu0 0.0
    %2224 = vmatpush.msra.mxu0 0.0
    %2225 = vmatpush.msra.mxu0 0.0
    %2226 = vmatpush.msra.mxu0 0.0
    %2227 = vmatpush.msra.mxu0 0.0
    %2228 = vmatpush.msra.mxu0 0.0
    %2229 = vmatpush.msra.mxu0 0.0
    %2230 = vmatpush.msra.mxu0 %v2210
    %2231 = vmatmul.f32.gmra.mxu0 %v2213
    %v2232 = vpop.f32.mrf.mxu0
    %v2233 = vadd.f32 0.0, %v2232
    %2234 = vdwg.mxu0
    %2235 = vrot.lane.b32.xlu0 %v1734, 104
    %v2236 = vpop.permute.xlu0 %2235
    %2237 = vrot.lane.b32.xlu0 %v1767, 104
    %v2238 = vpop.permute.xlu0 %2237
    %v2239 = vsel %vm214, %v2236, 0
    %v2241 = vsel %vm214, %v2238, 0
    %2243 = vmatpush.xpose.msra.mxu0 0.0
    %2244 = vmatpush.xpose.msra.mxu0 0.0
    %2245 = vmatpush.xpose.msra.mxu0 0.0
    %2246 = vmatpush.xpose.msra.mxu0 0.0
    %2247 = vmatpush.xpose.msra.mxu0 0.0
    %2248 = vmatpush.xpose.msra.mxu0 0.0
    %2249 = vmatpush.xpose.msra.mxu0 0.0
    %2250 = vmatpush.xpose.msra.mxu0 0.0
    %2251 = vmatpush.xpose.msra.mxu0 0.0
    %2252 = vmatpush.xpose.msra.mxu0 0.0
    %2253 = vmatpush.xpose.msra.mxu0 0.0
    %2254 = vmatpush.xpose.msra.mxu0 0.0
    %2255 = vmatpush.xpose.msra.mxu0 0.0
    %2256 = vmatpush.xpose.msra.mxu0 0.0
    %2257 = vmatpush.xpose.msra.mxu0 0.0
    %2258 = vmatpush.xpose.msra.mxu0 %v2241
    %2259 = vmatmul.f32.gmra.mxu0 %v2239
    %v2260 = vpop.f32.mrf.mxu0
    %v2261 = vadd.f32 0.0, %v2260
    %2262 = vdwg.mxu0
    %v2263 = vsel %vm214, %v2261, -inf
    %2264 = vmax.xlane.f32.xlu0 %v2263
    %v2265 = vpop.xlane.xlu0 %2264
    %v2266 = vsub.f32 %v2261, %v2265
    %v2267 = vmul.f32 %v2266, 1.442695
    %v2268 = vpow.pop %v2267
    %v2269 = vsel %vm214, %v2268, 0.0
    %2270 = vadd.xlane.f32.xlu0 %v2269
    %v2271 = vpop.xlane.xlu0 %2270
    %v2272 = vrcp.pop %v2271
    %v2273 = vmul.f32 %v2268, %v2272
    %2274 = vrot.lane.b32.xlu0 %v1767, 72
    %v2275 = vpop.permute.xlu0 %2274
    %v2278 = vsel %vm214, %v2273, 0
    %2280 = vmatpush.msra.mxu0 0.0
    %2281 = vmatpush.msra.mxu0 0.0
    %2282 = vmatpush.msra.mxu0 0.0
    %2283 = vmatpush.msra.mxu0 0.0
    %2284 = vmatpush.msra.mxu0 0.0
    %2285 = vmatpush.msra.mxu0 0.0
    %2286 = vmatpush.msra.mxu0 0.0
    %2287 = vmatpush.msra.mxu0 0.0
    %2288 = vmatpush.msra.mxu0 0.0
    %2289 = vmatpush.msra.mxu0 0.0
    %2290 = vmatpush.msra.mxu0 0.0
    %2291 = vmatpush.msra.mxu0 0.0
    %2292 = vmatpush.msra.mxu0 0.0
    %2293 = vmatpush.msra.mxu0 0.0
    %2294 = vmatpush.msra.mxu0 0.0
    %2295 = vmatpush.msra.mxu0 %v2275
    %2296 = vmatmul.f32.gmra.mxu0 %v2278
    %v2297 = vpop.f32.mrf.mxu0
    %v2298 = vadd.f32 0.0, %v2297
    %2299 = vdwg.mxu0
    %2301 = vrot.lane.b32.xlu0 %v2168, 8
    %v2302 = vpop.permute.xlu0 %2301
    %2305 = vrot.lane.b32.xlu0 %v2233, 16
    %v2306 = vpop.permute.xlu0 %2305
    %2309 = vrot.lane.b32.xlu0 %v2298, 24
    %v2310 = vpop.permute.xlu0 %2309
    %v2312 = vsel %vm214, %v2103, %v2302
    %v2313 = vsel %vm490, %v2312, %v2306
    %v2314 = vsel %vm492, %v2313, %v2310
    %v2315 = vld [vmem:[%s18] sm:$0xff]
    %v2316 = vld [vmem:[%s18 + $0x8] sm:$0xff]
    %v2317 = vld [vmem:[%s18 + $0x10] sm:$0xff]
    %v2318 = vld [vmem:[%s18 + $0x18] sm:$0xff]
    %v2320 = vsel %vm131, %v2041, 0
    %v2323 = vsel %vm131, %v2314, 0
    %2325 = vmatpush.msra.mxu0 0.0
    %2326 = vmatpush.msra.mxu0 0.0
    %2327 = vmatpush.msra.mxu0 0.0
    %2328 = vmatpush.msra.mxu0 0.0
    %2329 = vmatpush.msra.mxu0 0.0
    %2330 = vmatpush.msra.mxu0 0.0
    %2331 = vmatpush.msra.mxu0 0.0
    %2332 = vmatpush.msra.mxu0 0.0
    %2333 = vmatpush.msra.mxu0 0.0
    %2334 = vmatpush.msra.mxu0 0.0
    %2335 = vmatpush.msra.mxu0 0.0
    %2336 = vmatpush.msra.mxu0 0.0
    %2337 = vmatpush.msra.mxu0 %v2318
    %2338 = vmatpush.msra.mxu0 %v2317
    %2339 = vmatpush.msra.mxu0 %v2316
    %2340 = vmatpush.msra.mxu0 %v2315
    %2341 = vmatmul.f32.gmra.mxu0 %v2320
    %v2342 = vpop.f32.mrf.mxu0
    %v2343 = vadd.f32 0.0, %v2342
    %2344 = vmatmul.f32.gmra.mxu0 %v2323
    %v2345 = vpop.f32.mrf.mxu0
    %v2346 = vadd.f32 0.0, %v2345
    %2347 = vdwg.mxu0
    %v2348 = vadd.f32 %v1661, %v2343
    %v2349 = vadd.f32 %v1662, %v2346
    %v2350 = vmul.f32 %v2348, %v2348
    %v2351 = vmul.f32 %v2349, %v2349
    %v2352 = vsel %vm131, %v2350, 0.0
    %2353 = vadd.xlane.f32.xlu0 %v2352
    %v2354 = vpop.xlane.xlu0 %2353
    %v2355 = vsel %vm131, %v2351, 0.0
    %2356 = vadd.xlane.f32.xlu0 %v2355
    %v2357 = vpop.xlane.xlu0 %2356
    %v2358 = vmul.f32 %v2354, %v144
    %v2359 = vmul.f32 %v2357, %v144
    %v2360 = vadd.f32 %v2358, 1e-06
    %v2361 = vadd.f32 %v2359, 1e-06
    %v2362 = vrsqrt.pop %v2360
    %v2363 = vmul.f32 %v2362, %v2360
    %v2364 = vmul.f32 %v2363, %v2362
    %v2365 = vmul.f32 0.5, %v2364
    %v2366 = vsub.f32 1.5, %v2365
    %v2367 = vmul.f32 %v2362, %v2366
    %vm2368 = vweird.f32 %v2360
    %vm2369 = vweird.f32 %v2362
    %vm2370 = vmor %vm2368, %vm2369
    %v2371 = vsel %vm2370, %v2362, %v2367
    %v2372 = vrsqrt.pop %v2361
    %v2373 = vmul.f32 %v2372, %v2361
    %v2374 = vmul.f32 %v2373, %v2372
    %v2375 = vmul.f32 0.5, %v2374
    %v2376 = vsub.f32 1.5, %v2375
    %v2377 = vmul.f32 %v2372, %v2376
    %vm2378 = vweird.f32 %v2361
    %vm2379 = vweird.f32 %v2372
    %vm2380 = vmor %vm2378, %vm2379
    %v2381 = vsel %vm2380, %v2372, %v2377
    %v2382 = vmul.f32 %v2348, %v2371
    %v2383 = vmul.f32 %v2349, %v2381
    %v2384 = vld [vmem:[%s19] sm:$0x1]
    %v2386 = vperm.slane %v2384, 0
    %v2388 = vmul.f32 %v2382, %v2386
    %v2389 = vmul.f32 %v2383, %v2386
    %v2390 = vld [vmem:[%s20] sm:$0xff]
    %v2391 = vld [vmem:[%s20 + $0x8] sm:$0xff]
    %v2392 = vld [vmem:[%s20 + $0x10] sm:$0xff]
    %v2393 = vld [vmem:[%s20 + $0x18] sm:$0xff]
    %v2395 = vsel %vm131, %v2388, 0
    %v2398 = vsel %vm131, %v2389, 0
    %2400 = vmatpush.msra.mxu0 0.0
    %2401 = vmatpush.msra.mxu0 0.0
    %2402 = vmatpush.msra.mxu0 0.0
    %2403 = vmatpush.msra.mxu0 0.0
    %2404 = vmatpush.msra.mxu0 0.0
    %2405 = vmatpush.msra.mxu0 0.0
    %2406 = vmatpush.msra.mxu0 0.0
    %2407 = vmatpush.msra.mxu0 0.0
    %2408 = vmatpush.msra.mxu0 0.0
    %2409 = vmatpush.msra.mxu0 0.0
    %2410 = vmatpush.msra.mxu0 0.0
    %2411 = vmatpush.msra.mxu0 0.0
    %2412 = vmatpush.msra.mxu0 %v2393
    %2413 = vmatpush.msra.mxu0 %v2392
    %2414 = vmatpush.msra.mxu0 %v2391
    %2415 = vmatpush.msra.mxu0 %v2390
    %2416 = vmatmul.f32.gmra.mxu0 %v2395
    %v2417 = vpop.f32.mrf.mxu0
    %v2418 = vadd.f32 0.0, %v2417
    %2419 = vmatmul.f32.gmra.mxu0 %v2398
    %v2420 = vpop.f32.mrf.mxu0
    %v2421 = vadd.f32 0.0, %v2420
    %2422 = vdwg.mxu0
    %v2423 = vmax.f32 %v2418, 0.0
    %v2424 = vmax.f32 %v2421, 0.0
    %v2425 = vld [vmem:[%s21] sm:$0xff]
    %v2426 = vld [vmem:[%s21 + $0x8] sm:$0xff]
    %v2427 = vld [vmem:[%s21 + $0x10] sm:$0xff]
    %v2428 = vld [vmem:[%s21 + $0x18] sm:$0xff]
    %v2429 = vld [vmem:[%s21 + $0x20] sm:$0xff]
    %v2430 = vld [vmem:[%s21 + $0x28] sm:$0xff]
    %v2431 = vld [vmem:[%s21 + $0x30] sm:$0xff]
    %v2432 = vld [vmem:[%s21 + $0x38] sm:$0xff]
    %v2434 = vsel %vm99, %v2423, 0
    %v2437 = vsel %vm99, %v2424, 0
    %2439 = vmatpush.msra.mxu0 0.0
    %2440 = vmatpush.msra.mxu0 0.0
    %2441 = vmatpush.msra.mxu0 0.0
    %2442 = vmatpush.msra.mxu0 0.0
    %2443 = vmatpush.msra.mxu0 0.0
    %2444 = vmatpush.msra.mxu0 0.0
    %2445 = vmatpush.msra.mxu0 0.0
    %2446 = vmatpush.msra.mxu0 0.0
    %2447 = vmatpush.msra.mxu0 %v2432
    %2448 = vmatpush.msra.mxu0 %v2431
    %2449 = vmatpush.msra.mxu0 %v2430
    %2450 = vmatpush.msra.mxu0 %v2429
    %2451 = vmatpush.msra.mxu0 %v2428
    %2452 = vmatpush.msra.mxu0 %v2427
    %2453 = vmatpush.msra.mxu0 %v2426
    %2454 = vmatpush.msra.mxu0 %v2425
    %2455 = vmatmul.f32.gmra.mxu0 %v2434
    %v2456 = vpop.f32.mrf.mxu0
    %v2457 = vadd.f32 0.0, %v2456
    %2458 = vmatmul.f32.gmra.mxu0 %v2437
    %v2459 = vpop.f32.mrf.mxu0
    %v2460 = vadd.f32 0.0, %v2459
    %2461 = vdwg.mxu0
    %v2462 = vadd.f32 %v2348, %v2457
    %v2463 = vadd.f32 %v2349, %v2460
    %v2464 = vmul.f32 %v2462, %v2462
    %v2465 = vmul.f32 %v2463, %v2463
    %v2466 = vsel %vm131, %v2464, 0.0
    %2467 = vadd.xlane.f32.xlu0 %v2466
    %v2468 = vpop.xlane.xlu0 %2467
    %v2469 = vsel %vm131, %v2465, 0.0
    %2470 = vadd.xlane.f32.xlu0 %v2469
    %v2471 = vpop.xlane.xlu0 %2470
    %v2472 = vmul.f32 %v2468, %v144
    %v2473 = vmul.f32 %v2471, %v144
    %v2474 = vadd.f32 %v2472, 1e-06
    %v2475 = vadd.f32 %v2473, 1e-06
    %v2476 = vrsqrt.pop %v2474
    %v2477 = vmul.f32 %v2476, %v2474
    %v2478 = vmul.f32 %v2477, %v2476
    %v2479 = vmul.f32 0.5, %v2478
    %v2480 = vsub.f32 1.5, %v2479
    %v2481 = vmul.f32 %v2476, %v2480
    %vm2482 = vweird.f32 %v2474
    %vm2483 = vweird.f32 %v2476
    %vm2484 = vmor %vm2482, %vm2483
    %v2485 = vsel %vm2484, %v2476, %v2481
    %v2486 = vrsqrt.pop %v2475
    %v2487 = vmul.f32 %v2486, %v2475
    %v2488 = vmul.f32 %v2487, %v2486
    %v2489 = vmul.f32 0.5, %v2488
    %v2490 = vsub.f32 1.5, %v2489
    %v2491 = vmul.f32 %v2486, %v2490
    %vm2492 = vweird.f32 %v2475
    %vm2493 = vweird.f32 %v2486
    %vm2494 = vmor %vm2492, %vm2493
    %v2495 = vsel %vm2494, %v2486, %v2491
    %v2496 = vmul.f32 %v2462, %v2485
    %v2497 = vmul.f32 %v2463, %v2495
    %v2498 = vld [vmem:[%s22] sm:$0x1]
    %v2500 = vperm.slane %v2498, 0
    %v2502 = vmul.f32 %v2496, %v2500
    %v2503 = vmul.f32 %v2497, %v2500
    %v2504 = vmul.f32 %v2502, 0.17677669
    %v2505 = vmul.f32 %v2503, 0.17677669
    %v2507 = vsel %vm131, %v2504, 0
    %v2510 = vsel %vm131, %v2505, 0
    %v2513 = vsel %vm131, %v75, 0
    %v2516 = vsel %vm131, %v76, 0
    %v2519 = vsel %vm131, %v77, 0
    %v2522 = vsel %vm131, %v78, 0
    %v2525 = vsel %vm131, %v79, 0
    %v2528 = vsel %vm131, %v80, 0
    %v2531 = vsel %vm131, %v81, 0
    %v2534 = vsel %vm131, %v82, 0
    %2536 = vmatpush.xpose.msra.mxu0 0.0
    %2537 = vmatpush.xpose.msra.mxu0 0.0
    %2538 = vmatpush.xpose.msra.mxu0 0.0
    %2539 = vmatpush.xpose.msra.mxu0 0.0
    %2540 = vmatpush.xpose.msra.mxu0 0.0
    %2541 = vmatpush.xpose.msra.mxu0 0.0
    %2542 = vmatpush.xpose.msra.mxu0 0.0
    %2543 = vmatpush.xpose.msra.mxu0 0.0
    %2544 = vmatpush.xpose.msra.mxu0 %v2534
    %2545 = vmatpush.xpose.msra.mxu0 %v2531
    %2546 = vmatpush.xpose.msra.mxu0 %v2528
    %2547 = vmatpush.xpose.msra.mxu0 %v2525
    %2548 = vmatpush.xpose.msra.mxu0 %v2522
    %2549 = vmatpush.xpose.msra.mxu0 %v2519
    %2550 = vmatpush.xpose.msra.mxu0 %v2516
    %2551 = vmatpush.xpose.msra.mxu0 %v2513
    %2552 = vmatmul.f32.gmra.mxu0 %v2507
    %v2553 = vpop.f32.mrf.mxu0
    %v2554 = vadd.f32 0.0, %v2553
    %2555 = vmatmul.f32.gmra.mxu0 %v2510
    %v2556 = vpop.f32.mrf.mxu0
    %v2557 = vadd.f32 0.0, %v2556
    %2558 = vdwg.mxu0
    %2559 = vst.msk [vmem:[#allocation2] sm:$0xff] %vm99, %v2554
    %2560 = vst.msk [vmem:[#allocation2 + $0x8] sm:$0xff] %vm99, %v2557
    // Predicated region
    $region94: #{qa_classifier_forward.1} parent=1 // pred_check
      _
    $region95: #{qa_classifier_forward.1} parent=1 // pred_check_branch
      %2562 = sbr.rel (0) target = $region97
    $region96: #{qa_classifier_forward.1} parent=1 // pred_region
      %2564 = vsyncadd [#allocation3], 0
      %s2565 = sshll.u32 [#allocation2], 4
      %s2566 = int_to_ptr.vmem [resolvable:$true] %s2565
      %s2567 = sshll.u32 %s23, 4
      %s2568 = int_to_ptr.hbm [resolvable:$true] %s2567
      %2573 = dma.vmem_to_hbm [thread:$0]  %s2566, 256, %s2568, [#allocation3], 128, 128, 8
    $region97: #{qa_classifier_forward.1} parent=1 // pred_fallthru
      _
    // Predicated region
    $region98: #{qa_classifier_forward.1} parent=1 // pred_check
      _
    $region99: #{qa_classifier_forward.1} parent=1 // pred_check_branch
      %2575 = sbr.rel (0) target = $region101
    $region100: #{qa_classifier_forward.1} parent=1 // pred_region
      %2577 = dma.done [#allocation3], 256
    $region101: #{qa_classifier_forward.1} parent=1 // pred_fallthru
      _
    %2578 = vsyncpa [#allocation3], 1

</llo_original>
